<compile_context>
chip_gen: v5e
topology: v5e:2x2
jax: 0.10.0
libtpu: 0.0.40
codegen_flags: <defaults>
</compile_context>

<pallas_src>
import functools

import numpy as np

import jax
import jax.numpy as jnp
from jax.experimental import pallas as pl
from jax.experimental.pallas import tpu as pltpu


def _round_up(x, m):
    return ((x + m - 1) // m) * m


def _vmem_limit_bytes(frac=0.55, ceiling=96 * 1024 * 1024):
    """Scoped-VMEM limit scaled to the chip: ~70 MiB on v5e/v6e (128 MiB phys),
    ~35 MiB on v7x (64 MiB phys). Falls back to 40 MiB if the query fails."""
    try:
        phys = int(pltpu.get_tpu_info().vmem_capacity_bytes)
        return int(min(ceiling, phys * frac))
    except Exception:
        return 40 * 1024 * 1024


# ----------------------------------------------------------------------------
# Kernel 1: fused conv3x3 (banded matmul) + bias + ReLU + GAP + latent head
# ----------------------------------------------------------------------------
def _conv_gap_head_kernel(x_ref, wband_ref, bcrow_ref, whead_ref, bhead_ref,
                          o_ref, *, out_h):
    """One grid step = one tile of `nf` frames; matmuls batched over the tile.

    x_ref    : (nf, H+2, (W+2)*C) bf16  zero-padded channels-last frame rows
    wband_ref: (3, (W+2)*C, W*F)  bf16  banded 3x3 conv weights (one per dy)
    bcrow_ref: (1, W*F)           f32   conv bias tiled over x
    whead_ref: (W*F, LAT_PAD)     bf16  GAP(1/(H*W)) folded into the head
    bhead_ref: (1, LAT_PAD)       f32
    o_ref    : (nf, LAT_PAD)      f32
    """
    nf, _, wpc = x_ref.shape
    lat = o_ref.shape[1]

    acc = None
    for dy in range(3):                                   # 3 banded matmuls
        xs = x_ref[:, dy:dy + out_h, :].reshape(nf * out_h, wpc)   # bf16
        part = jnp.dot(xs, wband_ref[dy], preferred_element_type=jnp.float32)
        acc = part if acc is None else acc + part                  # (nf*H, W*F)
    feat = jnp.maximum(acc + bcrow_ref[...], 0.0)                  # (nf*H, W*F)
    head = jnp.dot(feat.astype(jnp.bfloat16), whead_ref[...],
                   preferred_element_type=jnp.float32)             # (nf*H, LAT)
    pooled = jnp.sum(head.reshape(nf, out_h, lat), axis=1)         # (nf, LAT)
    o_ref[...] = pooled + bhead_ref[...]


def pallas_conv_gap_head(frames, cp, out_h, frames_per_block=64):
    n, hp2, wpc = frames.shape
    wf = cp["wband"].shape[2]
    lat = cp["whead"].shape[1]

    nf = min(frames_per_block, n)
    # keep >= 2 grid steps when possible so both v7x TensorCores get work
    if n > 8 and pl.cdiv(n, nf) < 2:
        nf = max(8, _round_up(n, 16) // 2)
    grid = (pl.cdiv(n, nf),)

    return pl.pallas_call(
        functools.partial(_conv_gap_head_kernel, out_h=out_h),
        out_shape=jax.ShapeDtypeStruct((n, lat), jnp.float32),
        grid=grid,
        in_specs=[
            pl.BlockSpec((nf, hp2, wpc), lambda i: (i, 0, 0)),
            pl.BlockSpec((3, wpc, wf), lambda i: (0, 0, 0)),
            pl.BlockSpec((1, wf), lambda i: (0, 0)),
            pl.BlockSpec((wf, lat), lambda i: (0, 0)),
            pl.BlockSpec((1, lat), lambda i: (0, 0)),
        ],
        out_specs=pl.BlockSpec((nf, lat), lambda i: (i, 0)),
        compiler_params=pltpu.CompilerParams(
            dimension_semantics=("parallel",),
            vmem_limit_bytes=_vmem_limit_bytes()),
    )(frames, cp["wband"], cp["bc_row"], cp["whead"], cp["bh"])


# ----------------------------------------------------------------------------
# Kernel 2: (M, N, K)-tiled linear with f32 accumulator (bf16 weights/LHS)
# ----------------------------------------------------------------------------
def _linear_kernel(x_ref, w_ref, b_ref, o_ref, acc_ref, *, activation):
    @pl.when(pl.program_id(2) == 0)
    def _():
        acc_ref[...] = jnp.zeros_like(acc_ref)

    acc_ref[...] += jnp.dot(x_ref[...].astype(jnp.bfloat16), w_ref[...],
                            preferred_element_type=jnp.float32)

    @pl.when(pl.program_id(2) == pl.num_programs(2) - 1)
    def _():
        y = acc_ref[...] + b_ref[...]
        if activation == "relu":
            y = jnp.maximum(y, 0.0)
        elif activation == "softmax":
            y = jax.nn.softmax(y, axis=-1)
        o_ref[...] = y.astype(o_ref.dtype)


def pallas_linear(x, w, b, activation=None, block_m=256, block_n=512,
                  block_k=512):
    m, k = x.shape
    n = w.shape[1]
    tm = m if m <= block_m else block_m
    # softmax needs the full row in one block; n_class is small so that's fine
    tn = n if (n <= block_n or activation == "softmax") else block_n
    # only tile K when it divides exactly (partial K blocks would pollute acc)
    tk = k if (k <= block_k or k % block_k != 0) else block_k
    grid = (pl.cdiv(m, tm), pl.cdiv(n, tn), pl.cdiv(k, tk))
    return pl.pallas_call(
        functools.partial(_linear_kernel, activation=activation),
        out_shape=jax.ShapeDtypeStruct((m, n), jnp.float32),
        grid=grid,
        in_specs=[
            pl.BlockSpec((tm, tk), lambda i, j, kk: (i, kk)),
            pl.BlockSpec((tk, tn), lambda i, j, kk: (kk, j)),
            pl.BlockSpec((1, tn), lambda i, j, kk: (0, j)),
        ],
        out_specs=pl.BlockSpec((tm, tn), lambda i, j, kk: (i, j)),
        scratch_shapes=[pltpu.VMEM((tm, tn), jnp.float32)],
        compiler_params=pltpu.CompilerParams(
            dimension_semantics=("parallel", "parallel", "arbitrary"),
            vmem_limit_bytes=_vmem_limit_bytes()),
    )(x, w, b)


# ----------------------------------------------------------------------------
# Kernel 3: LSTM layer — grid over direction, whole time loop inside
# ----------------------------------------------------------------------------
def _lstm_seq_kernel(xg_ref, whh_ref, out_ref):
    """Grid: (num_dir,). Each grid step runs one direction's full recurrence
    (parallel semantics -> both directions run concurrently on v7x's 2 TCs).

    xg_ref : (T, B, 4*Hp) f32  this direction's precomputed x @ W_ih + b
    whh_ref: (1, Hp, 4*Hp) bf16 recurrent weights for this direction
    out_ref: (T, B, Hp)    f32  hidden states stored at their original time idx
    (Hp = hidden padded to 128; padded lanes stay exactly 0.)
    """
    seq_t, batch, _ = xg_ref.shape
    hp = out_ref.shape[2]
    d = pl.program_id(0)                 # 0 = forward, 1 = backward
    whh = whh_ref[0]                     # (Hp, 4Hp) — hoisted out of the loop

    def step(t, carry):
        h, c = carry
        pos = jnp.where(d == 0, t, seq_t - 1 - t)     # backward reads reversed
        gates = xg_ref[pos] + jnp.dot(h.astype(jnp.bfloat16), whh,
                                      preferred_element_type=jnp.float32)
        i_g = jax.nn.sigmoid(gates[:, 0 * hp:1 * hp])
        f_g = jax.nn.sigmoid(gates[:, 1 * hp:2 * hp])
        g_g = jnp.tanh(gates[:, 2 * hp:3 * hp])
        o_g = jax.nn.sigmoid(gates[:, 3 * hp:4 * hp])
        c_n = f_g * c + i_g * g_g
        h_n = o_g * jnp.tanh(c_n)
        out_ref[pos] = h_n                            # store at original index
        return h_n, c_n

    h0 = jnp.zeros((batch, hp), jnp.float32)
    c0 = jnp.zeros((batch, hp), jnp.float32)
    jax.lax.fori_loop(0, seq_t, step, (h0, c0), unroll=min(8, seq_t))


def pallas_lstm_seq(xg, whh):
    """xg: (T, B, D*4Hp) f32, whh: (D, Hp, 4Hp) bf16 -> (T, B, D*Hp) f32."""
    t, b, _ = xg.shape
    num_dir, hp, gp = whh.shape
    return pl.pallas_call(
        _lstm_seq_kernel,
        out_shape=jax.ShapeDtypeStruct((t, b, num_dir * hp), jnp.float32),
        grid=(num_dir,),
        in_specs=[
            pl.BlockSpec((t, b, gp), lambda d: (0, 0, d)),
            pl.BlockSpec((1, hp, gp), lambda d: (d, 0, 0)),
        ],
        out_specs=pl.BlockSpec((t, b, hp), lambda d: (0, 0, d)),
        compiler_params=pltpu.CompilerParams(
            dimension_semantics=("parallel",),
            vmem_limit_bytes=_vmem_limit_bytes()),
    )(xg, whh)


# ----------------------------------------------------------------------------
# Forward pass glue (time-major; small free reshapes only)
# ----------------------------------------------------------------------------
def run_lstm(x_tbd, lstm_params):
    """x_tbd: (T, B, F) time-major. Returns (T, B, D*Hp) time-major."""
    seq_t, bsz, _ = x_tbd.shape
    layer_in = x_tbd
    for p in lstm_params:
        x2 = layer_in.reshape(seq_t * bsz, -1)
        # both directions' input-gate projections in one wide matmul
        xg = pallas_linear(x2, p["w_ih"], p["b"])            # (T*B, D*4Hp)
        xg = xg.reshape(seq_t, bsz, -1)
        layer_in = pallas_lstm_seq(xg, p["w_hh"])            # (T, B, D*Hp)
    return layer_in


def conv_lstm_forward(x, params):
    bsz, seq_t, chan, h_img, w_img = x.shape
    n = bsz * seq_t
    # NCHW frames -> bf16 channels-last, zero-padded, row-flattened
    frames = x.astype(jnp.bfloat16).reshape(n, chan, h_img, w_img)
    frames = frames.transpose(0, 2, 3, 1)
    frames = jnp.pad(frames, ((0, 0), (1, 1), (1, 1), (0, 0)))
    frames = frames.reshape(n, h_img + 2, (w_img + 2) * chan)

    feat = pallas_conv_gap_head(frames, params["conv"], h_img)   # (N, LATp)
    # one small (B,T)->(T,B) permute of the latent features; everything
    # downstream stays time-major so no further HBM transposes are needed
    lstm_in = feat.reshape(bsz, seq_t, -1).transpose(1, 0, 2)    # (T, B, LATp)
    lstm_out = run_lstm(lstm_in, params["lstm"])                 # (T, B, D*Hp)
    last = lstm_out[-1]                                          # output[:, -1, :]
    return pallas_linear(last, params["out"]["w"], params["out"]["b"],
                         activation="softmax")


# ----------------------------------------------------------------------------
# Deterministic synthetic parameters, packed/padded for the kernels
# ----------------------------------------------------------------------------
def init_params(key, cfg):
    chan, feat = cfg["in_channels"], cfg["conv_feat"]
    h_img, w_img = cfg["frame_hw"]
    latent, hidden = cfg["latent_dim"], cfg["hidden_size"]
    layers, bidir, n_class = cfg["lstm_layers"], cfg["bidirectional"], cfg["n_class"]
    num_dir = 2 if bidir else 1
    lat_pad = _round_up(latent, 128)
    h_pad = _round_up(hidden, 128)
    g_pad = 4 * h_pad

    keys = iter(jax.random.split(key, 64))

    def uni(shape, scale):
        return np.asarray(
            jax.random.uniform(next(keys), shape, jnp.float32, -scale, scale))

    # ---- conv stand-in: 3x3 conv + bias + ReLU + GAP + linear(latent) ----
    w3 = uni((3, 3, chan, feat), 0.2)          # (dy, dx, C, F)
    bc = uni((feat,), 0.2)
    wh = uni((feat, latent), 0.2)
    bh = uni((latent,), 0.2)

    wp = w_img + 2
    # banded weights: Wband[dy, p*C+c, x*F+f] = w3[dy, p-x, c, f]
    wband = np.zeros((3, wp * chan, w_img * feat), np.float32)
    for dy in range(3):
        for dx in range(3):
            for xo in range(w_img):
                p = xo + dx
                wband[dy, p * chan:(p + 1) * chan,
                      xo * feat:(xo + 1) * feat] = w3[dy, dx]
    bc_row = np.tile(bc, w_img)[None, :]                              # (1, W*F)
    whead = np.tile(wh, (w_img, 1)) / float(h_img * w_img)            # GAP folded
    whead_pad = np.zeros((w_img * feat, lat_pad), np.float32)
    whead_pad[:, :latent] = whead
    bh_pad = np.zeros((1, lat_pad), np.float32)
    bh_pad[0, :latent] = bh
    conv_params = dict(
        wband=jnp.asarray(wband, jnp.bfloat16),
        bc_row=jnp.asarray(bc_row, jnp.float32),
        whead=jnp.asarray(whead_pad, jnp.bfloat16),
        bh=jnp.asarray(bh_pad, jnp.float32),
    )

    # ---- LSTM (PyTorch gate order i,f,g,o; b = b_ih + b_hh; zero-padded) ----
    def pad_gate_cols(w):
        parts = np.split(w, 4, axis=-1)
        out = np.zeros(w.shape[:-1] + (g_pad,), np.float32)
        for gi, pt in enumerate(parts):
            out[..., gi * h_pad:gi * h_pad + hidden] = pt
        return out

    k_l = 1.0 / np.sqrt(hidden)
    lstm_params = []
    for layer in range(layers):
        if layer == 0:
            in_dim = latent
            in_pad = lat_pad
            valid_rows = np.arange(latent)
        else:
            in_dim = num_dir * hidden
            in_pad = num_dir * h_pad
            valid_rows = np.concatenate(
                [d * h_pad + np.arange(hidden) for d in range(num_dir)])
        w_ih_cat = np.zeros((in_pad, num_dir * g_pad), np.float32)
        b_cat = np.zeros((1, num_dir * g_pad), np.float32)
        whh = np.zeros((num_dir, h_pad, g_pad), np.float32)
        for d in range(num_dir):
            w_ih = uni((in_dim, 4 * hidden), k_l)
            w_hh = uni((hidden, 4 * hidden), k_l)
            b_ih = uni((4 * hidden,), k_l)
            b_hh = uni((4 * hidden,), k_l)
            w_ih_cat[valid_rows, d * g_pad:(d + 1) * g_pad] = pad_gate_cols(w_ih)
            whh[d, :hidden, :] = pad_gate_cols(w_hh)
            b_cat[0, d * g_pad:(d + 1) * g_pad] = pad_gate_cols(b_ih + b_hh)
        lstm_params.append(dict(
            w_ih=jnp.asarray(w_ih_cat, jnp.bfloat16),
            b=jnp.asarray(b_cat, jnp.float32),
            w_hh=jnp.asarray(whh, jnp.bfloat16),
        ))

    # ---- output head: Linear(D*hidden -> n_class) + Softmax ----
    w_o = uni((num_dir * hidden, n_class), 0.2)
    b_o = uni((n_class,), 0.2)
    w_out = np.zeros((num_dir * h_pad, n_class), np.float32)
    for d in range(num_dir):
        w_out[d * h_pad:d * h_pad + hidden, :] = w_o[d * hidden:(d + 1) * hidden, :]
    out_params = dict(w=jnp.asarray(w_out, jnp.bfloat16),
                      b=jnp.asarray(b_o[None, :], jnp.float32))

    return dict(conv=conv_params, lstm=lstm_params, out=out_params,
                dims=dict(num_dir=num_dir, h_pad=h_pad, lat_pad=lat_pad))


# ----------------------------------------------------------------------------
if __name__ == "__main__":
    cfg = dict(latent_dim=32, hidden_size=32, lstm_layers=2, bidirectional=True,
               n_class=8, in_channels=3, conv_feat=16, frame_hw=(16, 16))

    key = jax.random.PRNGKey(0)
    k_param, k_x = jax.random.split(key)
    params = init_params(k_param, cfg)

    # x: (batch=2, timesteps=8, channels=3, h=16, w=16)
    x = jax.random.normal(k_x, (2, 8, 3, 16, 16), jnp.float32)

    fwd = jax.jit(lambda xx: conv_lstm_forward(xx, params))
    out = jax.block_until_ready(fwd(x))

    assert out.shape == (2, cfg["n_class"])
    assert bool(jnp.all(jnp.isfinite(out)))
    assert jnp.allclose(jnp.sum(out, axis=-1), 1.0, atol=1e-5)  # softmax rows
    print("KERNEL_OK")
</pallas_src>

<mosaic_0001>
module attributes {stable_mosaic.version = 11 : i64} {
  func.func @_conv_gap_head_kernel(%arg0: i32, %arg1: memref<8x18x54xbf16, #tpu.memory_space<vmem>>, %arg2: memref<3x54x256xbf16, #tpu.memory_space<vmem>>, %arg3: memref<1x256xf32, #tpu.memory_space<vmem>>, %arg4: memref<256x128xbf16, #tpu.memory_space<vmem>>, %arg5: memref<1x128xf32, #tpu.memory_space<vmem>>, %arg6: memref<8x128xf32, #tpu.memory_space<vmem>>) attributes {dimension_semantics = [#tpu.dimension_semantics<parallel>], iteration_bounds = array<i64: 2>, scalar_prefetch = 0 : i64, scratch_operands = 0 : i64, tpu.core_type = #tpu.core_type<tc>, window_params = [{transform_indices = @transform_0, window_bounds = array<i64: 8, 18, 54>}, {pipeline_mode = #tpu.pipeline_mode<synchronous>, transform_indices = @transform_1, window_bounds = array<i64: 3, 54, 256>}, {pipeline_mode = #tpu.pipeline_mode<synchronous>, transform_indices = @transform_2, window_bounds = array<i64: 1, 256>}, {pipeline_mode = #tpu.pipeline_mode<synchronous>, transform_indices = @transform_3, window_bounds = array<i64: 256, 128>}, {pipeline_mode = #tpu.pipeline_mode<synchronous>, transform_indices = @transform_4, window_bounds = array<i64: 1, 128>}, {transform_indices = @transform_5, window_bounds = array<i64: 8, 128>}]} {
    %c0 = arith.constant 0 : index
    %c0_0 = arith.constant 0 : index
    %c0_1 = arith.constant 0 : index
    %0 = vector.load %arg1[%c0, %c0_0, %c0_1] : memref<8x18x54xbf16, #tpu.memory_space<vmem>>, vector<8x16x54xbf16>
    %1 = vector.shape_cast %0 : vector<8x16x54xbf16> to vector<128x54xbf16>
    %c0_2 = arith.constant 0 : index
    %c0_3 = arith.constant 0 : index
    %c0_4 = arith.constant 0 : index
    %2 = vector.load %arg2[%c0_2, %c0_3, %c0_4] : memref<3x54x256xbf16, #tpu.memory_space<vmem>>, vector<1x54x256xbf16>
    %3 = vector.shape_cast %2 : vector<1x54x256xbf16> to vector<54x256xbf16>
    %cst = arith.constant dense<0.000000e+00> : vector<128x256xf32>
    %4 = tpu.matmul %1, %3, %cst {dimension_numbers = #tpu.dot_dimension_numbers<[1], [0], [0], [1], [0, 0, 1, 1], [], []>} : vector<128x54xbf16>, vector<54x256xbf16>, vector<128x256xf32> -> vector<128x256xf32>
    %c0_5 = arith.constant 0 : index
    %c1 = arith.constant 1 : index
    %c0_6 = arith.constant 0 : index
    %5 = vector.load %arg1[%c0_5, %c1, %c0_6] : memref<8x18x54xbf16, #tpu.memory_space<vmem>>, vector<8x16x54xbf16>
    %6 = vector.shape_cast %5 : vector<8x16x54xbf16> to vector<128x54xbf16>
    %c1_7 = arith.constant 1 : index
    %c0_8 = arith.constant 0 : index
    %c0_9 = arith.constant 0 : index
    %7 = vector.load %arg2[%c1_7, %c0_8, %c0_9] : memref<3x54x256xbf16, #tpu.memory_space<vmem>>, vector<1x54x256xbf16>
    %8 = vector.shape_cast %7 : vector<1x54x256xbf16> to vector<54x256xbf16>
    %cst_10 = arith.constant dense<0.000000e+00> : vector<128x256xf32>
    %9 = tpu.matmul %6, %8, %cst_10 {dimension_numbers = #tpu.dot_dimension_numbers<[1], [0], [0], [1], [0, 0, 1, 1], [], []>} : vector<128x54xbf16>, vector<54x256xbf16>, vector<128x256xf32> -> vector<128x256xf32>
    %10 = arith.addf %4, %9 : vector<128x256xf32>
    %c0_11 = arith.constant 0 : index
    %c2 = arith.constant 2 : index
    %c0_12 = arith.constant 0 : index
    %11 = vector.load %arg1[%c0_11, %c2, %c0_12] : memref<8x18x54xbf16, #tpu.memory_space<vmem>>, vector<8x16x54xbf16>
    %12 = vector.shape_cast %11 : vector<8x16x54xbf16> to vector<128x54xbf16>
    %c2_13 = arith.constant 2 : index
    %c0_14 = arith.constant 0 : index
    %c0_15 = arith.constant 0 : index
    %13 = vector.load %arg2[%c2_13, %c0_14, %c0_15] : memref<3x54x256xbf16, #tpu.memory_space<vmem>>, vector<1x54x256xbf16>
    %14 = vector.shape_cast %13 : vector<1x54x256xbf16> to vector<54x256xbf16>
    %cst_16 = arith.constant dense<0.000000e+00> : vector<128x256xf32>
    %15 = tpu.matmul %12, %14, %cst_16 {dimension_numbers = #tpu.dot_dimension_numbers<[1], [0], [0], [1], [0, 0, 1, 1], [], []>} : vector<128x54xbf16>, vector<54x256xbf16>, vector<128x256xf32> -> vector<128x256xf32>
    %16 = arith.addf %10, %15 : vector<128x256xf32>
    %c0_17 = arith.constant 0 : index
    %c0_18 = arith.constant 0 : index
    %17 = vector.load %arg3[%c0_17, %c0_18] : memref<1x256xf32, #tpu.memory_space<vmem>>, vector<1x256xf32>
    %18 = vector.broadcast %17 : vector<1x256xf32> to vector<128x256xf32>
    %19 = arith.addf %16, %18 : vector<128x256xf32>
    %cst_19 = arith.constant 0.000000e+00 : f32
    %20 = vector.broadcast %cst_19 : f32 to vector<128x256xf32>
    %21 = arith.maximumf %19, %20 : vector<128x256xf32>
    %22 = arith.truncf %21 : vector<128x256xf32> to vector<128x256xbf16>
    %c0_20 = arith.constant 0 : index
    %c0_21 = arith.constant 0 : index
    %23 = vector.load %arg4[%c0_20, %c0_21] : memref<256x128xbf16, #tpu.memory_space<vmem>>, vector<256x128xbf16>
    %cst_22 = arith.constant dense<0.000000e+00> : vector<128x128xf32>
    %24 = tpu.matmul %22, %23, %cst_22 {dimension_numbers = #tpu.dot_dimension_numbers<[1], [0], [0], [1], [0, 0, 1, 1], [], []>} : vector<128x256xbf16>, vector<256x128xbf16>, vector<128x128xf32> -> vector<128x128xf32>
    %25 = vector.shape_cast %24 : vector<128x128xf32> to vector<8x16x128xf32>
    %cst_23 = arith.constant dense<0.000000e+00> : vector<8x128xf32>
    %26 = vector.multi_reduction <add>, %25, %cst_23 [1] : vector<8x16x128xf32> to vector<8x128xf32>
    %c0_24 = arith.constant 0 : index
    %c0_25 = arith.constant 0 : index
    %27 = vector.load %arg5[%c0_24, %c0_25] : memref<1x128xf32, #tpu.memory_space<vmem>>, vector<1x128xf32>
    %28 = vector.broadcast %27 : vector<1x128xf32> to vector<8x128xf32>
    %29 = arith.addf %26, %28 : vector<8x128xf32>
    %c0_26 = arith.constant 0 : index
    %c0_27 = arith.constant 0 : index
    %30 = vector.load %arg6[%c0_26, %c0_27] : memref<8x128xf32, #tpu.memory_space<vmem>>, vector<8x128xf32>
    tpu.vector_store %arg6[%c0_26, %c0_27], %29 {strides = array<i32>} : memref<8x128xf32, #tpu.memory_space<vmem>>, vector<8x128xf32>,
    return
  }
  func.func @transform_0(%arg0: i32) -> (i32, i32, i32) {
    %c0_i32 = arith.constant 0 : i32
    %c0_i32_0 = arith.constant 0 : i32
    %c0_i32_1 = arith.constant 0 : i32
    return %arg0, %c0_i32, %c0_i32_0 : i32, i32, i32
  }
  func.func @transform_1(%arg0: i32) -> (i32, i32, i32) {
    %c0_i32 = arith.constant 0 : i32
    %c0_i32_0 = arith.constant 0 : i32
    %c0_i32_1 = arith.constant 0 : i32
    %c0_i32_2 = arith.constant 0 : i32
    return %c0_i32, %c0_i32_0, %c0_i32_1 : i32, i32, i32
  }
  func.func @transform_2(%arg0: i32) -> (i32, i32) {
    %c0_i32 = arith.constant 0 : i32
    %c0_i32_0 = arith.constant 0 : i32
    %c0_i32_1 = arith.constant 0 : i32
    return %c0_i32, %c0_i32_0 : i32, i32
  }
  func.func @transform_3(%arg0: i32) -> (i32, i32) {
    %c0_i32 = arith.constant 0 : i32
    %c0_i32_0 = arith.constant 0 : i32
    %c0_i32_1 = arith.constant 0 : i32
    return %c0_i32, %c0_i32_0 : i32, i32
  }
  func.func @transform_4(%arg0: i32) -> (i32, i32) {
    %c0_i32 = arith.constant 0 : i32
    %c0_i32_0 = arith.constant 0 : i32
    %c0_i32_1 = arith.constant 0 : i32
    return %c0_i32, %c0_i32_0 : i32, i32
  }
  func.func @transform_5(%arg0: i32) -> (i32, i32) {
    %c0_i32 = arith.constant 0 : i32
    %c0_i32_0 = arith.constant 0 : i32
    return %arg0, %c0_i32 : i32, i32
  }
}

module attributes {stable_mosaic.version = 11 : i64} {
  func.func @_linear_kernel(%arg0: i32, %arg1: i32, %arg2: i32, %arg3: memref<16x128xf32, #tpu.memory_space<vmem>>, %arg4: memref<128x512xbf16, #tpu.memory_space<vmem>>, %arg5: memref<1x512xf32, #tpu.memory_space<vmem>>, %arg6: memref<16x512xf32, #tpu.memory_space<vmem>>, %arg7: memref<16x512xf32, #tpu.memory_space<vmem>>) attributes {dimension_semantics = [#tpu.dimension_semantics<parallel>, #tpu.dimension_semantics<parallel>, #tpu.dimension_semantics<arbitrary>], iteration_bounds = array<i64: 1, 2, 1>, scalar_prefetch = 0 : i64, scratch_operands = 1 : i64, tpu.core_type = #tpu.core_type<tc>, window_params = [{transform_indices = @transform_0, window_bounds = array<i64: 16, 128>}, {transform_indices = @transform_1, window_bounds = array<i64: 128, 512>}, {transform_indices = @transform_2, window_bounds = array<i64: 1, 512>}, {transform_indices = @transform_3, window_bounds = array<i64: 16, 512>}]} {
    %c0_i32 = arith.constant 0 : i32
    %0 = arith.cmpi eq, %arg2, %c0_i32 : i32
    %1 = arith.extui %0 : i1 to i32
    %c0_i32_0 = arith.constant 0 : i32
    %2 = arith.cmpi ne, %1, %c0_i32_0 : i32
    scf.if %2 {
      %cst_10 = arith.constant 0.000000e+00 : f32
      %13 = vector.broadcast %cst_10 : f32 to vector<16x512xf32>
      %c0_11 = arith.constant 0 : index
      %c0_12 = arith.constant 0 : index
      %14 = vector.load %arg7[%c0_11, %c0_12] : memref<16x512xf32, #tpu.memory_space<vmem>>, vector<16x512xf32>
      tpu.vector_store %arg7[%c0_11, %c0_12], %13 {strides = array<i32>} : memref<16x512xf32, #tpu.memory_space<vmem>>, vector<16x512xf32>,
    } else {
    }
    %c0 = arith.constant 0 : index
    %c0_1 = arith.constant 0 : index
    %3 = vector.load %arg7[%c0, %c0_1] : memref<16x512xf32, #tpu.memory_space<vmem>>, vector<16x512xf32>
    %c0_2 = arith.constant 0 : index
    %c0_3 = arith.constant 0 : index
    %4 = vector.load %arg3[%c0_2, %c0_3] : memref<16x128xf32, #tpu.memory_space<vmem>>, vector<16x128xf32>
    %5 = arith.truncf %4 : vector<16x128xf32> to vector<16x128xbf16>
    %c0_4 = arith.constant 0 : index
    %c0_5 = arith.constant 0 : index
    %6 = vector.load %arg4[%c0_4, %c0_5] : memref<128x512xbf16, #tpu.memory_space<vmem>>, vector<128x512xbf16>
    %cst = arith.constant dense<0.000000e+00> : vector<16x512xf32>
    %7 = tpu.matmul %5, %6, %cst {dimension_numbers = #tpu.dot_dimension_numbers<[1], [0], [0], [1], [0, 0, 1, 1], [], []>} : vector<16x128xbf16>, vector<128x512xbf16>, vector<16x512xf32> -> vector<16x512xf32>
    %8 = arith.addf %3, %7 : vector<16x512xf32>
    %c0_6 = arith.constant 0 : index
    %c0_7 = arith.constant 0 : index
    %9 = vector.load %arg7[%c0_6, %c0_7] : memref<16x512xf32, #tpu.memory_space<vmem>>, vector<16x512xf32>
    tpu.vector_store %arg7[%c0_6, %c0_7], %8 {strides = array<i32>} : memref<16x512xf32, #tpu.memory_space<vmem>>, vector<16x512xf32>,
    %c0_i32_8 = arith.constant 0 : i32
    %10 = arith.cmpi eq, %arg2, %c0_i32_8 : i32
    %11 = arith.extui %10 : i1 to i32
    %c0_i32_9 = arith.constant 0 : i32
    %12 = arith.cmpi ne, %11, %c0_i32_9 : i32
    scf.if %12 {
      %c0_10 = arith.constant 0 : index
      %c0_11 = arith.constant 0 : index
      %13 = vector.load %arg7[%c0_10, %c0_11] : memref<16x512xf32, #tpu.memory_space<vmem>>, vector<16x512xf32>
      %c0_12 = arith.constant 0 : index
      %c0_13 = arith.constant 0 : index
      %14 = vector.load %arg5[%c0_12, %c0_13] : memref<1x512xf32, #tpu.memory_space<vmem>>, vector<1x512xf32>
      %15 = vector.broadcast %14 : vector<1x512xf32> to vector<16x512xf32>
      %16 = arith.addf %13, %15 : vector<16x512xf32>
      %c0_14 = arith.constant 0 : index
      %c0_15 = arith.constant 0 : index
      %17 = vector.load %arg6[%c0_14, %c0_15] : memref<16x512xf32, #tpu.memory_space<vmem>>, vector<16x512xf32>
      tpu.vector_store %arg6[%c0_14, %c0_15], %16 {strides = array<i32>} : memref<16x512xf32, #tpu.memory_space<vmem>>, vector<16x512xf32>,
    } else {
    }
    return
  }
  func.func @transform_0(%arg0: i32, %arg1: i32, %arg2: i32) -> (i32, i32) {
    %c0_i32 = arith.constant 0 : i32
    return %arg0, %arg2 : i32, i32
  }
  func.func @transform_1(%arg0: i32, %arg1: i32, %arg2: i32) -> (i32, i32) {
    %c0_i32 = arith.constant 0 : i32
    return %arg2, %arg1 : i32, i32
  }
  func.func @transform_2(%arg0: i32, %arg1: i32, %arg2: i32) -> (i32, i32) {
    %c0_i32 = arith.constant 0 : i32
    %c0_i32_0 = arith.constant 0 : i32
    return %c0_i32, %arg1 : i32, i32
  }
  func.func @transform_3(%arg0: i32, %arg1: i32, %arg2: i32) -> (i32, i32) {
    %c0_i32 = arith.constant 0 : i32
    return %arg0, %arg1 : i32, i32
  }
}

module attributes {stable_mosaic.version = 11 : i64} {
  func.func @_lstm_seq_kernel(%arg0: i32, %arg1: memref<8x2x512xf32, #tpu.memory_space<vmem>>, %arg2: memref<1x128x512xbf16, #tpu.memory_space<vmem>>, %arg3: memref<8x2x128xf32, #tpu.memory_space<vmem>>) attributes {dimension_semantics = [#tpu.dimension_semantics<parallel>], iteration_bounds = array<i64: 2>, scalar_prefetch = 0 : i64, scratch_operands = 0 : i64, tpu.core_type = #tpu.core_type<tc>, window_params = [{transform_indices = @transform_0, window_bounds = array<i64: 8, 2, 512>}, {transform_indices = @transform_1, window_bounds = array<i64: 1, 128, 512>}, {transform_indices = @transform_2, window_bounds = array<i64: 8, 2, 128>}]} {
    %c0 = arith.constant 0 : index
    %c0_0 = arith.constant 0 : index
    %c0_1 = arith.constant 0 : index
    %0 = vector.load %arg2[%c0, %c0_0, %c0_1] : memref<1x128x512xbf16, #tpu.memory_space<vmem>>, vector<1x128x512xbf16>
    %1 = vector.shape_cast %0 : vector<1x128x512xbf16> to vector<128x512xbf16>
    %cst = arith.constant 0.000000e+00 : f32
    %2 = vector.broadcast %cst : f32 to vector<2x128xf32>
    %cst_2 = arith.constant 0.000000e+00 : f32
    %3 = vector.broadcast %cst_2 : f32 to vector<2x128xf32>
    %c0_i32 = arith.constant 0 : i32
    %c0_i32_3 = arith.constant 0 : i32
    %4 = arith.cmpi eq, %arg0, %c0_i32_3 : i32
    %c7_i32 = arith.constant 7 : i32
    %5 = arith.subi %c7_i32, %c0_i32 : i32
    %6 = arith.select %4, %c0_i32, %5 : i32
    %7 = arith.index_cast %6 : i32 to index
    %c0_4 = arith.constant 0 : index
    %c0_5 = arith.constant 0 : index
    %8 = vector.load %arg1[%7, %c0_4, %c0_5] : memref<8x2x512xf32, #tpu.memory_space<vmem>>, vector<1x2x512xf32>
    %9 = vector.shape_cast %8 : vector<1x2x512xf32> to vector<2x512xf32>
    %10 = arith.truncf %2 : vector<2x128xf32> to vector<2x128xbf16>
    %cst_6 = arith.constant dense<0.000000e+00> : vector<2x512xf32>
    %11 = tpu.matmul %10, %1, %cst_6 {dimension_numbers = #tpu.dot_dimension_numbers<[1], [0], [0], [1], [0, 0, 1, 1], [], []>} : vector<2x128xbf16>, vector<128x512xbf16>, vector<2x512xf32> -> vector<2x512xf32>
    %12 = arith.addf %9, %11 : vector<2x512xf32>
    %13 = vector.extract_strided_slice %12 {offsets = [0, 0], sizes = [2, 128], strides = [1, 1]} : vector<2x512xf32> to vector<2x128xf32>
    %14 = arith.negf %13 : vector<2x128xf32>
    %15 = math.exp %14 : vector<2x128xf32>
    %cst_7 = arith.constant 1.000000e+00 : f32
    %16 = vector.broadcast %cst_7 : f32 to vector<2x128xf32>
    %17 = arith.addf %16, %15 : vector<2x128xf32>
    %18 = arith.divf %16, %17 : vector<2x128xf32>
    %19 = vector.extract_strided_slice %12 {offsets = [0, 128], sizes = [2, 128], strides = [1, 1]} : vector<2x512xf32> to vector<2x128xf32>
    %20 = arith.negf %19 : vector<2x128xf32>
    %21 = math.exp %20 : vector<2x128xf32>
    %cst_8 = arith.constant 1.000000e+00 : f32
    %22 = vector.broadcast %cst_8 : f32 to vector<2x128xf32>
    %23 = arith.addf %22, %21 : vector<2x128xf32>
    %24 = arith.divf %22, %23 : vector<2x128xf32>
    %25 = vector.extract_strided_slice %12 {offsets = [0, 256], sizes = [2, 128], strides = [1, 1]} : vector<2x512xf32> to vector<2x128xf32>
    %26 = math.tanh %25 : vector<2x128xf32>
    %27 = vector.extract_strided_slice %12 {offsets = [0, 384], sizes = [2, 128], strides = [1, 1]} : vector<2x512xf32> to vector<2x128xf32>
    %28 = arith.negf %27 : vector<2x128xf32>
    %29 = math.exp %28 : vector<2x128xf32>
    %cst_9 = arith.constant 1.000000e+00 : f32
    %30 = vector.broadcast %cst_9 : f32 to vector<2x128xf32>
    %31 = arith.addf %30, %29 : vector<2x128xf32>
    %32 = arith.divf %30, %31 : vector<2x128xf32>
    %33 = arith.mulf %24, %3 : vector<2x128xf32>
    %34 = arith.mulf %18, %26 : vector<2x128xf32>
    %35 = arith.addf %33, %34 : vector<2x128xf32>
    %36 = math.tanh %35 : vector<2x128xf32>
    %37 = arith.mulf %32, %36 : vector<2x128xf32>
    %38 = arith.index_cast %6 : i32 to index
    %c0_10 = arith.constant 0 : index
    %c0_11 = arith.constant 0 : index
    %39 = vector.load %arg3[%38, %c0_10, %c0_11] : memref<8x2x128xf32, #tpu.memory_space<vmem>>, vector<1x2x128xf32>
    %40 = vector.shape_cast %39 : vector<1x2x128xf32> to vector<2x128xf32>
    %41 = vector.shape_cast %37 : vector<2x128xf32> to vector<1x2x128xf32>
    tpu.vector_store %arg3[%38, %c0_10, %c0_11], %41 {strides = array<i32>} : memref<8x2x128xf32, #tpu.memory_space<vmem>>, vector<1x2x128xf32>,
    %c1_i32 = arith.constant 1 : i32
    %c0_i32_12 = arith.constant 0 : i32
    %42 = arith.cmpi eq, %arg0, %c0_i32_12 : i32
    %c7_i32_13 = arith.constant 7 : i32
    %43 = arith.subi %c7_i32_13, %c1_i32 : i32
    %44 = arith.select %42, %c1_i32, %43 : i32
    %45 = arith.index_cast %44 : i32 to index
    %c0_14 = arith.constant 0 : index
    %c0_15 = arith.constant 0 : index
    %46 = vector.load %arg1[%45, %c0_14, %c0_15] : memref<8x2x512xf32, #tpu.memory_space<vmem>>, vector<1x2x512xf32>
    %47 = vector.shape_cast %46 : vector<1x2x512xf32> to vector<2x512xf32>
    %48 = arith.truncf %37 : vector<2x128xf32> to vector<2x128xbf16>
    %cst_16 = arith.constant dense<0.000000e+00> : vector<2x512xf32>
    %49 = tpu.matmul %48, %1, %cst_16 {dimension_numbers = #tpu.dot_dimension_numbers<[1], [0], [0], [1], [0, 0, 1, 1], [], []>} : vector<2x128xbf16>, vector<128x512xbf16>, vector<2x512xf32> -> vector<2x512xf32>
    %50 = arith.addf %47, %49 : vector<2x512xf32>
    %51 = vector.extract_strided_slice %50 {offsets = [0, 0], sizes = [2, 128], strides = [1, 1]} : vector<2x512xf32> to vector<2x128xf32>
    %52 = arith.negf %51 : vector<2x128xf32>
    %53 = math.exp %52 : vector<2x128xf32>
    %cst_17 = arith.constant 1.000000e+00 : f32
    %54 = vector.broadcast %cst_17 : f32 to vector<2x128xf32>
    %55 = arith.addf %54, %53 : vector<2x128xf32>
    %56 = arith.divf %54, %55 : vector<2x128xf32>
    %57 = vector.extract_strided_slice %50 {offsets = [0, 128], sizes = [2, 128], strides = [1, 1]} : vector<2x512xf32> to vector<2x128xf32>
    %58 = arith.negf %57 : vector<2x128xf32>
    %59 = math.exp %58 : vector<2x128xf32>
    %cst_18 = arith.constant 1.000000e+00 : f32
    %60 = vector.broadcast %cst_18 : f32 to vector<2x128xf32>
    %61 = arith.addf %60, %59 : vector<2x128xf32>
    %62 = arith.divf %60, %61 : vector<2x128xf32>
    %63 = vector.extract_strided_slice %50 {offsets = [0, 256], sizes = [2, 128], strides = [1, 1]} : vector<2x512xf32> to vector<2x128xf32>
    %64 = math.tanh %63 : vector<2x128xf32>
    %65 = vector.extract_strided_slice %50 {offsets = [0, 384], sizes = [2, 128], strides = [1, 1]} : vector<2x512xf32> to vector<2x128xf32>
    %66 = arith.negf %65 : vector<2x128xf32>
    %67 = math.exp %66 : vector<2x128xf32>
    %cst_19 = arith.constant 1.000000e+00 : f32
    %68 = vector.broadcast %cst_19 : f32 to vector<2x128xf32>
    %69 = arith.addf %68, %67 : vector<2x128xf32>
    %70 = arith.divf %68, %69 : vector<2x128xf32>
    %71 = arith.mulf %62, %35 : vector<2x128xf32>
    %72 = arith.mulf %56, %64 : vector<2x128xf32>
    %73 = arith.addf %71, %72 : vector<2x128xf32>
    %74 = math.tanh %73 : vector<2x128xf32>
    %75 = arith.mulf %70, %74 : vector<2x128xf32>
    %76 = arith.index_cast %44 : i32 to index
    %c0_20 = arith.constant 0 : index
    %c0_21 = arith.constant 0 : index
    %77 = vector.load %arg3[%76, %c0_20, %c0_21] : memref<8x2x128xf32, #tpu.memory_space<vmem>>, vector<1x2x128xf32>
    %78 = vector.shape_cast %77 : vector<1x2x128xf32> to vector<2x128xf32>
    %79 = vector.shape_cast %75 : vector<2x128xf32> to vector<1x2x128xf32>
    tpu.vector_store %arg3[%76, %c0_20, %c0_21], %79 {strides = array<i32>} : memref<8x2x128xf32, #tpu.memory_space<vmem>>, vector<1x2x128xf32>,
    %c2_i32 = arith.constant 2 : i32
    %c0_i32_22 = arith.constant 0 : i32
    %80 = arith.cmpi eq, %arg0, %c0_i32_22 : i32
    %c7_i32_23 = arith.constant 7 : i32
    %81 = arith.subi %c7_i32_23, %c2_i32 : i32
    %82 = arith.select %80, %c2_i32, %81 : i32
    %83 = arith.index_cast %82 : i32 to index
    %c0_24 = arith.constant 0 : index
    %c0_25 = arith.constant 0 : index
    %84 = vector.load %arg1[%83, %c0_24, %c0_25] : memref<8x2x512xf32, #tpu.memory_space<vmem>>, vector<1x2x512xf32>
    %85 = vector.shape_cast %84 : vector<1x2x512xf32> to vector<2x512xf32>
    %86 = arith.truncf %75 : vector<2x128xf32> to vector<2x128xbf16>
    %cst_26 = arith.constant dense<0.000000e+00> : vector<2x512xf32>
    %87 = tpu.matmul %86, %1, %cst_26 {dimension_numbers = #tpu.dot_dimension_numbers<[1], [0], [0], [1], [0, 0, 1, 1], [], []>} : vector<2x128xbf16>, vector<128x512xbf16>, vector<2x512xf32> -> vector<2x512xf32>
    %88 = arith.addf %85, %87 : vector<2x512xf32>
    %89 = vector.extract_strided_slice %88 {offsets = [0, 0], sizes = [2, 128], strides = [1, 1]} : vector<2x512xf32> to vector<2x128xf32>
    %90 = arith.negf %89 : vector<2x128xf32>
    %91 = math.exp %90 : vector<2x128xf32>
    %cst_27 = arith.constant 1.000000e+00 : f32
    %92 = vector.broadcast %cst_27 : f32 to vector<2x128xf32>
    %93 = arith.addf %92, %91 : vector<2x128xf32>
    %94 = arith.divf %92, %93 : vector<2x128xf32>
    %95 = vector.extract_strided_slice %88 {offsets = [0, 128], sizes = [2, 128], strides = [1, 1]} : vector<2x512xf32> to vector<2x128xf32>
    %96 = arith.negf %95 : vector<2x128xf32>
    %97 = math.exp %96 : vector<2x128xf32>
    %cst_28 = arith.constant 1.000000e+00 : f32
    %98 = vector.broadcast %cst_28 : f32 to vector<2x128xf32>
    %99 = arith.addf %98, %97 : vector<2x128xf32>
    %100 = arith.divf %98, %99 : vector<2x128xf32>
    %101 = vector.extract_strided_slice %88 {offsets = [0, 256], sizes = [2, 128], strides = [1, 1]} : vector<2x512xf32> to vector<2x128xf32>
    %102 = math.tanh %101 : vector<2x128xf32>
    %103 = vector.extract_strided_slice %88 {offsets = [0, 384], sizes = [2, 128], strides = [1, 1]} : vector<2x512xf32> to vector<2x128xf32>
    %104 = arith.negf %103 : vector<2x128xf32>
    %105 = math.exp %104 : vector<2x128xf32>
    %cst_29 = arith.constant 1.000000e+00 : f32
    %106 = vector.broadcast %cst_29 : f32 to vector<2x128xf32>
    %107 = arith.addf %106, %105 : vector<2x128xf32>
    %108 = arith.divf %106, %107 : vector<2x128xf32>
    %109 = arith.mulf %100, %73 : vector<2x128xf32>
    %110 = arith.mulf %94, %102 : vector<2x128xf32>
    %111 = arith.addf %109, %110 : vector<2x128xf32>
    %112 = math.tanh %111 : vector<2x128xf32>
    %113 = arith.mulf %108, %112 : vector<2x128xf32>
    %114 = arith.index_cast %82 : i32 to index
    %c0_30 = arith.constant 0 : index
    %c0_31 = arith.constant 0 : index
    %115 = vector.load %arg3[%114, %c0_30, %c0_31] : memref<8x2x128xf32, #tpu.memory_space<vmem>>, vector<1x2x128xf32>
    %116 = vector.shape_cast %115 : vector<1x2x128xf32> to vector<2x128xf32>
    %117 = vector.shape_cast %113 : vector<2x128xf32> to vector<1x2x128xf32>
    tpu.vector_store %arg3[%114, %c0_30, %c0_31], %117 {strides = array<i32>} : memref<8x2x128xf32, #tpu.memory_space<vmem>>, vector<1x2x128xf32>,
    %c3_i32 = arith.constant 3 : i32
    %c0_i32_32 = arith.constant 0 : i32
    %118 = arith.cmpi eq, %arg0, %c0_i32_32 : i32
    %c7_i32_33 = arith.constant 7 : i32
    %119 = arith.subi %c7_i32_33, %c3_i32 : i32
    %120 = arith.select %118, %c3_i32, %119 : i32
    %121 = arith.index_cast %120 : i32 to index
    %c0_34 = arith.constant 0 : index
    %c0_35 = arith.constant 0 : index
    %122 = vector.load %arg1[%121, %c0_34, %c0_35] : memref<8x2x512xf32, #tpu.memory_space<vmem>>, vector<1x2x512xf32>
    %123 = vector.shape_cast %122 : vector<1x2x512xf32> to vector<2x512xf32>
    %124 = arith.truncf %113 : vector<2x128xf32> to vector<2x128xbf16>
    %cst_36 = arith.constant dense<0.000000e+00> : vector<2x512xf32>
    %125 = tpu.matmul %124, %1, %cst_36 {dimension_numbers = #tpu.dot_dimension_numbers<[1], [0], [0], [1], [0, 0, 1, 1], [], []>} : vector<2x128xbf16>, vector<128x512xbf16>, vector<2x512xf32> -> vector<2x512xf32>
    %126 = arith.addf %123, %125 : vector<2x512xf32>
    %127 = vector.extract_strided_slice %126 {offsets = [0, 0], sizes = [2, 128], strides = [1, 1]} : vector<2x512xf32> to vector<2x128xf32>
    %128 = arith.negf %127 : vector<2x128xf32>
    %129 = math.exp %128 : vector<2x128xf32>
    %cst_37 = arith.constant 1.000000e+00 : f32
    %130 = vector.broadcast %cst_37 : f32 to vector<2x128xf32>
    %131 = arith.addf %130, %129 : vector<2x128xf32>
    %132 = arith.divf %130, %131 : vector<2x128xf32>
    %133 = vector.extract_strided_slice %126 {offsets = [0, 128], sizes = [2, 128], strides = [1, 1]} : vector<2x512xf32> to vector<2x128xf32>
    %134 = arith.negf %133 : vector<2x128xf32>
    %135 = math.exp %134 : vector<2x128xf32>
    %cst_38 = arith.constant 1.000000e+00 : f32
    %136 = vector.broadcast %cst_38 : f32 to vector<2x128xf32>
    %137 = arith.addf %136, %135 : vector<2x128xf32>
    %138 = arith.divf %136, %137 : vector<2x128xf32>
    %139 = vector.extract_strided_slice %126 {offsets = [0, 256], sizes = [2, 128], strides = [1, 1]} : vector<2x512xf32> to vector<2x128xf32>
    %140 = math.tanh %139 : vector<2x128xf32>
    %141 = vector.extract_strided_slice %126 {offsets = [0, 384], sizes = [2, 128], strides = [1, 1]} : vector<2x512xf32> to vector<2x128xf32>
    %142 = arith.negf %141 : vector<2x128xf32>
    %143 = math.exp %142 : vector<2x128xf32>
    %cst_39 = arith.constant 1.000000e+00 : f32
    %144 = vector.broadcast %cst_39 : f32 to vector<2x128xf32>
    %145 = arith.addf %144, %143 : vector<2x128xf32>
    %146 = arith.divf %144, %145 : vector<2x128xf32>
    %147 = arith.mulf %138, %111 : vector<2x128xf32>
    %148 = arith.mulf %132, %140 : vector<2x128xf32>
    %149 = arith.addf %147, %148 : vector<2x128xf32>
    %150 = math.tanh %149 : vector<2x128xf32>
    %151 = arith.mulf %146, %150 : vector<2x128xf32>
    %152 = arith.index_cast %120 : i32 to index
    %c0_40 = arith.constant 0 : index
    %c0_41 = arith.constant 0 : index
    %153 = vector.load %arg3[%152, %c0_40, %c0_41] : memref<8x2x128xf32, #tpu.memory_space<vmem>>, vector<1x2x128xf32>
    %154 = vector.shape_cast %153 : vector<1x2x128xf32> to vector<2x128xf32>
    %155 = vector.shape_cast %151 : vector<2x128xf32> to vector<1x2x128xf32>
    tpu.vector_store %arg3[%152, %c0_40, %c0_41], %155 {strides = array<i32>} : memref<8x2x128xf32, #tpu.memory_space<vmem>>, vector<1x2x128xf32>,
    %c4_i32 = arith.constant 4 : i32
    %c0_i32_42 = arith.constant 0 : i32
    %156 = arith.cmpi eq, %arg0, %c0_i32_42 : i32
    %c7_i32_43 = arith.constant 7 : i32
    %157 = arith.subi %c7_i32_43, %c4_i32 : i32
    %158 = arith.select %156, %c4_i32, %157 : i32
    %159 = arith.index_cast %158 : i32 to index
    %c0_44 = arith.constant 0 : index
    %c0_45 = arith.constant 0 : index
    %160 = vector.load %arg1[%159, %c0_44, %c0_45] : memref<8x2x512xf32, #tpu.memory_space<vmem>>, vector<1x2x512xf32>
    %161 = vector.shape_cast %160 : vector<1x2x512xf32> to vector<2x512xf32>
    %162 = arith.truncf %151 : vector<2x128xf32> to vector<2x128xbf16>
    %cst_46 = arith.constant dense<0.000000e+00> : vector<2x512xf32>
    %163 = tpu.matmul %162, %1, %cst_46 {dimension_numbers = #tpu.dot_dimension_numbers<[1], [0], [0], [1], [0, 0, 1, 1], [], []>} : vector<2x128xbf16>, vector<128x512xbf16>, vector<2x512xf32> -> vector<2x512xf32>
    %164 = arith.addf %161, %163 : vector<2x512xf32>
    %165 = vector.extract_strided_slice %164 {offsets = [0, 0], sizes = [2, 128], strides = [1, 1]} : vector<2x512xf32> to vector<2x128xf32>
    %166 = arith.negf %165 : vector<2x128xf32>
    %167 = math.exp %166 : vector<2x128xf32>
    %cst_47 = arith.constant 1.000000e+00 : f32
    %168 = vector.broadcast %cst_47 : f32 to vector<2x128xf32>
    %169 = arith.addf %168, %167 : vector<2x128xf32>
    %170 = arith.divf %168, %169 : vector<2x128xf32>
    %171 = vector.extract_strided_slice %164 {offsets = [0, 128], sizes = [2, 128], strides = [1, 1]} : vector<2x512xf32> to vector<2x128xf32>
    %172 = arith.negf %171 : vector<2x128xf32>
    %173 = math.exp %172 : vector<2x128xf32>
    %cst_48 = arith.constant 1.000000e+00 : f32
    %174 = vector.broadcast %cst_48 : f32 to vector<2x128xf32>
    %175 = arith.addf %174, %173 : vector<2x128xf32>
    %176 = arith.divf %174, %175 : vector<2x128xf32>
    %177 = vector.extract_strided_slice %164 {offsets = [0, 256], sizes = [2, 128], strides = [1, 1]} : vector<2x512xf32> to vector<2x128xf32>
    %178 = math.tanh %177 : vector<2x128xf32>
    %179 = vector.extract_strided_slice %164 {offsets = [0, 384], sizes = [2, 128], strides = [1, 1]} : vector<2x512xf32> to vector<2x128xf32>
    %180 = arith.negf %179 : vector<2x128xf32>
    %181 = math.exp %180 : vector<2x128xf32>
    %cst_49 = arith.constant 1.000000e+00 : f32
    %182 = vector.broadcast %cst_49 : f32 to vector<2x128xf32>
    %183 = arith.addf %182, %181 : vector<2x128xf32>
    %184 = arith.divf %182, %183 : vector<2x128xf32>
    %185 = arith.mulf %176, %149 : vector<2x128xf32>
    %186 = arith.mulf %170, %178 : vector<2x128xf32>
    %187 = arith.addf %185, %186 : vector<2x128xf32>
    %188 = math.tanh %187 : vector<2x128xf32>
    %189 = arith.mulf %184, %188 : vector<2x128xf32>
    %190 = arith.index_cast %158 : i32 to index
    %c0_50 = arith.constant 0 : index
    %c0_51 = arith.constant 0 : index
    %191 = vector.load %arg3[%190, %c0_50, %c0_51] : memref<8x2x128xf32, #tpu.memory_space<vmem>>, vector<1x2x128xf32>
    %192 = vector.shape_cast %191 : vector<1x2x128xf32> to vector<2x128xf32>
    %193 = vector.shape_cast %189 : vector<2x128xf32> to vector<1x2x128xf32>
    tpu.vector_store %arg3[%190, %c0_50, %c0_51], %193 {strides = array<i32>} : memref<8x2x128xf32, #tpu.memory_space<vmem>>, vector<1x2x128xf32>,
    %c5_i32 = arith.constant 5 : i32
    %c0_i32_52 = arith.constant 0 : i32
    %194 = arith.cmpi eq, %arg0, %c0_i32_52 : i32
    %c7_i32_53 = arith.constant 7 : i32
    %195 = arith.subi %c7_i32_53, %c5_i32 : i32
    %196 = arith.select %194, %c5_i32, %195 : i32
    %197 = arith.index_cast %196 : i32 to index
    %c0_54 = arith.constant 0 : index
    %c0_55 = arith.constant 0 : index
    %198 = vector.load %arg1[%197, %c0_54, %c0_55] : memref<8x2x512xf32, #tpu.memory_space<vmem>>, vector<1x2x512xf32>
    %199 = vector.shape_cast %198 : vector<1x2x512xf32> to vector<2x512xf32>
    %200 = arith.truncf %189 : vector<2x128xf32> to vector<2x128xbf16>
    %cst_56 = arith.constant dense<0.000000e+00> : vector<2x512xf32>
    %201 = tpu.matmul %200, %1, %cst_56 {dimension_numbers = #tpu.dot_dimension_numbers<[1], [0], [0], [1], [0, 0, 1, 1], [], []>} : vector<2x128xbf16>, vector<128x512xbf16>, vector<2x512xf32> -> vector<2x512xf32>
    %202 = arith.addf %199, %201 : vector<2x512xf32>
    %203 = vector.extract_strided_slice %202 {offsets = [0, 0], sizes = [2, 128], strides = [1, 1]} : vector<2x512xf32> to vector<2x128xf32>
    %204 = arith.negf %203 : vector<2x128xf32>
    %205 = math.exp %204 : vector<2x128xf32>
    %cst_57 = arith.constant 1.000000e+00 : f32
    %206 = vector.broadcast %cst_57 : f32 to vector<2x128xf32>
    %207 = arith.addf %206, %205 : vector<2x128xf32>
    %208 = arith.divf %206, %207 : vector<2x128xf32>
    %209 = vector.extract_strided_slice %202 {offsets = [0, 128], sizes = [2, 128], strides = [1, 1]} : vector<2x512xf32> to vector<2x128xf32>
    %210 = arith.negf %209 : vector<2x128xf32>
    %211 = math.exp %210 : vector<2x128xf32>
    %cst_58 = arith.constant 1.000000e+00 : f32
    %212 = vector.broadcast %cst_58 : f32 to vector<2x128xf32>
    %213 = arith.addf %212, %211 : vector<2x128xf32>
    %214 = arith.divf %212, %213 : vector<2x128xf32>
    %215 = vector.extract_strided_slice %202 {offsets = [0, 256], sizes = [2, 128], strides = [1, 1]} : vector<2x512xf32> to vector<2x128xf32>
    %216 = math.tanh %215 : vector<2x128xf32>
    %217 = vector.extract_strided_slice %202 {offsets = [0, 384], sizes = [2, 128], strides = [1, 1]} : vector<2x512xf32> to vector<2x128xf32>
    %218 = arith.negf %217 : vector<2x128xf32>
    %219 = math.exp %218 : vector<2x128xf32>
    %cst_59 = arith.constant 1.000000e+00 : f32
    %220 = vector.broadcast %cst_59 : f32 to vector<2x128xf32>
    %221 = arith.addf %220, %219 : vector<2x128xf32>
    %222 = arith.divf %220, %221 : vector<2x128xf32>
    %223 = arith.mulf %214, %187 : vector<2x128xf32>
    %224 = arith.mulf %208, %216 : vector<2x128xf32>
    %225 = arith.addf %223, %224 : vector<2x128xf32>
    %226 = math.tanh %225 : vector<2x128xf32>
    %227 = arith.mulf %222, %226 : vector<2x128xf32>
    %228 = arith.index_cast %196 : i32 to index
    %c0_60 = arith.constant 0 : index
    %c0_61 = arith.constant 0 : index
    %229 = vector.load %arg3[%228, %c0_60, %c0_61] : memref<8x2x128xf32, #tpu.memory_space<vmem>>, vector<1x2x128xf32>
    %230 = vector.shape_cast %229 : vector<1x2x128xf32> to vector<2x128xf32>
    %231 = vector.shape_cast %227 : vector<2x128xf32> to vector<1x2x128xf32>
    tpu.vector_store %arg3[%228, %c0_60, %c0_61], %231 {strides = array<i32>} : memref<8x2x128xf32, #tpu.memory_space<vmem>>, vector<1x2x128xf32>,
    %c6_i32 = arith.constant 6 : i32
    %c0_i32_62 = arith.constant 0 : i32
    %232 = arith.cmpi eq, %arg0, %c0_i32_62 : i32
    %c7_i32_63 = arith.constant 7 : i32
    %233 = arith.subi %c7_i32_63, %c6_i32 : i32
    %234 = arith.select %232, %c6_i32, %233 : i32
    %235 = arith.index_cast %234 : i32 to index
    %c0_64 = arith.constant 0 : index
    %c0_65 = arith.constant 0 : index
    %236 = vector.load %arg1[%235, %c0_64, %c0_65] : memref<8x2x512xf32, #tpu.memory_space<vmem>>, vector<1x2x512xf32>
    %237 = vector.shape_cast %236 : vector<1x2x512xf32> to vector<2x512xf32>
    %238 = arith.truncf %227 : vector<2x128xf32> to vector<2x128xbf16>
    %cst_66 = arith.constant dense<0.000000e+00> : vector<2x512xf32>
    %239 = tpu.matmul %238, %1, %cst_66 {dimension_numbers = #tpu.dot_dimension_numbers<[1], [0], [0], [1], [0, 0, 1, 1], [], []>} : vector<2x128xbf16>, vector<128x512xbf16>, vector<2x512xf32> -> vector<2x512xf32>
    %240 = arith.addf %237, %239 : vector<2x512xf32>
    %241 = vector.extract_strided_slice %240 {offsets = [0, 0], sizes = [2, 128], strides = [1, 1]} : vector<2x512xf32> to vector<2x128xf32>
    %242 = arith.negf %241 : vector<2x128xf32>
    %243 = math.exp %242 : vector<2x128xf32>
    %cst_67 = arith.constant 1.000000e+00 : f32
    %244 = vector.broadcast %cst_67 : f32 to vector<2x128xf32>
    %245 = arith.addf %244, %243 : vector<2x128xf32>
    %246 = arith.divf %244, %245 : vector<2x128xf32>
    %247 = vector.extract_strided_slice %240 {offsets = [0, 128], sizes = [2, 128], strides = [1, 1]} : vector<2x512xf32> to vector<2x128xf32>
    %248 = arith.negf %247 : vector<2x128xf32>
    %249 = math.exp %248 : vector<2x128xf32>
    %cst_68 = arith.constant 1.000000e+00 : f32
    %250 = vector.broadcast %cst_68 : f32 to vector<2x128xf32>
    %251 = arith.addf %250, %249 : vector<2x128xf32>
    %252 = arith.divf %250, %251 : vector<2x128xf32>
    %253 = vector.extract_strided_slice %240 {offsets = [0, 256], sizes = [2, 128], strides = [1, 1]} : vector<2x512xf32> to vector<2x128xf32>
    %254 = math.tanh %253 : vector<2x128xf32>
    %255 = vector.extract_strided_slice %240 {offsets = [0, 384], sizes = [2, 128], strides = [1, 1]} : vector<2x512xf32> to vector<2x128xf32>
    %256 = arith.negf %255 : vector<2x128xf32>
    %257 = math.exp %256 : vector<2x128xf32>
    %cst_69 = arith.constant 1.000000e+00 : f32
    %258 = vector.broadcast %cst_69 : f32 to vector<2x128xf32>
    %259 = arith.addf %258, %257 : vector<2x128xf32>
    %260 = arith.divf %258, %259 : vector<2x128xf32>
    %261 = arith.mulf %252, %225 : vector<2x128xf32>
    %262 = arith.mulf %246, %254 : vector<2x128xf32>
    %263 = arith.addf %261, %262 : vector<2x128xf32>
    %264 = math.tanh %263 : vector<2x128xf32>
    %265 = arith.mulf %260, %264 : vector<2x128xf32>
    %266 = arith.index_cast %234 : i32 to index
    %c0_70 = arith.constant 0 : index
    %c0_71 = arith.constant 0 : index
    %267 = vector.load %arg3[%266, %c0_70, %c0_71] : memref<8x2x128xf32, #tpu.memory_space<vmem>>, vector<1x2x128xf32>
    %268 = vector.shape_cast %267 : vector<1x2x128xf32> to vector<2x128xf32>
    %269 = vector.shape_cast %265 : vector<2x128xf32> to vector<1x2x128xf32>
    tpu.vector_store %arg3[%266, %c0_70, %c0_71], %269 {strides = array<i32>} : memref<8x2x128xf32, #tpu.memory_space<vmem>>, vector<1x2x128xf32>,
    %c7_i32_72 = arith.constant 7 : i32
    %c0_i32_73 = arith.constant 0 : i32
    %270 = arith.cmpi eq, %arg0, %c0_i32_73 : i32
    %c7_i32_74 = arith.constant 7 : i32
    %271 = arith.subi %c7_i32_74, %c7_i32_72 : i32
    %272 = arith.select %270, %c7_i32_72, %271 : i32
    %273 = arith.index_cast %272 : i32 to index
    %c0_75 = arith.constant 0 : index
    %c0_76 = arith.constant 0 : index
    %274 = vector.load %arg1[%273, %c0_75, %c0_76] : memref<8x2x512xf32, #tpu.memory_space<vmem>>, vector<1x2x512xf32>
    %275 = vector.shape_cast %274 : vector<1x2x512xf32> to vector<2x512xf32>
    %276 = arith.truncf %265 : vector<2x128xf32> to vector<2x128xbf16>
    %cst_77 = arith.constant dense<0.000000e+00> : vector<2x512xf32>
    %277 = tpu.matmul %276, %1, %cst_77 {dimension_numbers = #tpu.dot_dimension_numbers<[1], [0], [0], [1], [0, 0, 1, 1], [], []>} : vector<2x128xbf16>, vector<128x512xbf16>, vector<2x512xf32> -> vector<2x512xf32>
    %278 = arith.addf %275, %277 : vector<2x512xf32>
    %279 = vector.extract_strided_slice %278 {offsets = [0, 0], sizes = [2, 128], strides = [1, 1]} : vector<2x512xf32> to vector<2x128xf32>
    %280 = arith.negf %279 : vector<2x128xf32>
    %281 = math.exp %280 : vector<2x128xf32>
    %cst_78 = arith.constant 1.000000e+00 : f32
    %282 = vector.broadcast %cst_78 : f32 to vector<2x128xf32>
    %283 = arith.addf %282, %281 : vector<2x128xf32>
    %284 = arith.divf %282, %283 : vector<2x128xf32>
    %285 = vector.extract_strided_slice %278 {offsets = [0, 128], sizes = [2, 128], strides = [1, 1]} : vector<2x512xf32> to vector<2x128xf32>
    %286 = arith.negf %285 : vector<2x128xf32>
    %287 = math.exp %286 : vector<2x128xf32>
    %cst_79 = arith.constant 1.000000e+00 : f32
    %288 = vector.broadcast %cst_79 : f32 to vector<2x128xf32>
    %289 = arith.addf %288, %287 : vector<2x128xf32>
    %290 = arith.divf %288, %289 : vector<2x128xf32>
    %291 = vector.extract_strided_slice %278 {offsets = [0, 256], sizes = [2, 128], strides = [1, 1]} : vector<2x512xf32> to vector<2x128xf32>
    %292 = math.tanh %291 : vector<2x128xf32>
    %293 = vector.extract_strided_slice %278 {offsets = [0, 384], sizes = [2, 128], strides = [1, 1]} : vector<2x512xf32> to vector<2x128xf32>
    %294 = arith.negf %293 : vector<2x128xf32>
    %295 = math.exp %294 : vector<2x128xf32>
    %cst_80 = arith.constant 1.000000e+00 : f32
    %296 = vector.broadcast %cst_80 : f32 to vector<2x128xf32>
    %297 = arith.addf %296, %295 : vector<2x128xf32>
    %298 = arith.divf %296, %297 : vector<2x128xf32>
    %299 = arith.mulf %290, %263 : vector<2x128xf32>
    %300 = arith.mulf %284, %292 : vector<2x128xf32>
    %301 = arith.addf %299, %300 : vector<2x128xf32>
    %302 = math.tanh %301 : vector<2x128xf32>
    %303 = arith.mulf %298, %302 : vector<2x128xf32>
    %304 = arith.index_cast %272 : i32 to index
    %c0_81 = arith.constant 0 : index
    %c0_82 = arith.constant 0 : index
    %305 = vector.load %arg3[%304, %c0_81, %c0_82] : memref<8x2x128xf32, #tpu.memory_space<vmem>>, vector<1x2x128xf32>
    %306 = vector.shape_cast %305 : vector<1x2x128xf32> to vector<2x128xf32>
    %307 = vector.shape_cast %303 : vector<2x128xf32> to vector<1x2x128xf32>
    tpu.vector_store %arg3[%304, %c0_81, %c0_82], %307 {strides = array<i32>} : memref<8x2x128xf32, #tpu.memory_space<vmem>>, vector<1x2x128xf32>,
    %c8_i32 = arith.constant 8 : i32
    return
  }
  func.func @transform_0(%arg0: i32) -> (i32, i32, i32) {
    %c0_i32 = arith.constant 0 : i32
    %c0_i32_0 = arith.constant 0 : i32
    %c0_i32_1 = arith.constant 0 : i32
    return %c0_i32, %c0_i32_0, %arg0 : i32, i32, i32
  }
  func.func @transform_1(%arg0: i32) -> (i32, i32, i32) {
    %c0_i32 = arith.constant 0 : i32
    %c0_i32_0 = arith.constant 0 : i32
    %c0_i32_1 = arith.constant 0 : i32
    return %arg0, %c0_i32, %c0_i32_0 : i32, i32, i32
  }
  func.func @transform_2(%arg0: i32) -> (i32, i32, i32) {
    %c0_i32 = arith.constant 0 : i32
    %c0_i32_0 = arith.constant 0 : i32
    %c0_i32_1 = arith.constant 0 : i32
    return %c0_i32, %c0_i32_0, %arg0 : i32, i32, i32
  }
}

module attributes {stable_mosaic.version = 11 : i64} {
  func.func @_linear_kernel(%arg0: i32, %arg1: i32, %arg2: i32, %arg3: memref<16x256xf32, #tpu.memory_space<vmem>>, %arg4: memref<256x512xbf16, #tpu.memory_space<vmem>>, %arg5: memref<1x512xf32, #tpu.memory_space<vmem>>, %arg6: memref<16x512xf32, #tpu.memory_space<vmem>>, %arg7: memref<16x512xf32, #tpu.memory_space<vmem>>) attributes {dimension_semantics = [#tpu.dimension_semantics<parallel>, #tpu.dimension_semantics<parallel>, #tpu.dimension_semantics<arbitrary>], iteration_bounds = array<i64: 1, 2, 1>, scalar_prefetch = 0 : i64, scratch_operands = 1 : i64, tpu.core_type = #tpu.core_type<tc>, window_params = [{transform_indices = @transform_0, window_bounds = array<i64: 16, 256>}, {transform_indices = @transform_1, window_bounds = array<i64: 256, 512>}, {transform_indices = @transform_2, window_bounds = array<i64: 1, 512>}, {transform_indices = @transform_3, window_bounds = array<i64: 16, 512>}]} {
    %c0_i32 = arith.constant 0 : i32
    %0 = arith.cmpi eq, %arg2, %c0_i32 : i32
    %1 = arith.extui %0 : i1 to i32
    %c0_i32_0 = arith.constant 0 : i32
    %2 = arith.cmpi ne, %1, %c0_i32_0 : i32
    scf.if %2 {
      %cst_10 = arith.constant 0.000000e+00 : f32
      %13 = vector.broadcast %cst_10 : f32 to vector<16x512xf32>
      %c0_11 = arith.constant 0 : index
      %c0_12 = arith.constant 0 : index
      %14 = vector.load %arg7[%c0_11, %c0_12] : memref<16x512xf32, #tpu.memory_space<vmem>>, vector<16x512xf32>
      tpu.vector_store %arg7[%c0_11, %c0_12], %13 {strides = array<i32>} : memref<16x512xf32, #tpu.memory_space<vmem>>, vector<16x512xf32>,
    } else {
    }
    %c0 = arith.constant 0 : index
    %c0_1 = arith.constant 0 : index
    %3 = vector.load %arg7[%c0, %c0_1] : memref<16x512xf32, #tpu.memory_space<vmem>>, vector<16x512xf32>
    %c0_2 = arith.constant 0 : index
    %c0_3 = arith.constant 0 : index
    %4 = vector.load %arg3[%c0_2, %c0_3] : memref<16x256xf32, #tpu.memory_space<vmem>>, vector<16x256xf32>
    %5 = arith.truncf %4 : vector<16x256xf32> to vector<16x256xbf16>
    %c0_4 = arith.constant 0 : index
    %c0_5 = arith.constant 0 : index
    %6 = vector.load %arg4[%c0_4, %c0_5] : memref<256x512xbf16, #tpu.memory_space<vmem>>, vector<256x512xbf16>
    %cst = arith.constant dense<0.000000e+00> : vector<16x512xf32>
    %7 = tpu.matmul %5, %6, %cst {dimension_numbers = #tpu.dot_dimension_numbers<[1], [0], [0], [1], [0, 0, 1, 1], [], []>} : vector<16x256xbf16>, vector<256x512xbf16>, vector<16x512xf32> -> vector<16x512xf32>
    %8 = arith.addf %3, %7 : vector<16x512xf32>
    %c0_6 = arith.constant 0 : index
    %c0_7 = arith.constant 0 : index
    %9 = vector.load %arg7[%c0_6, %c0_7] : memref<16x512xf32, #tpu.memory_space<vmem>>, vector<16x512xf32>
    tpu.vector_store %arg7[%c0_6, %c0_7], %8 {strides = array<i32>} : memref<16x512xf32, #tpu.memory_space<vmem>>, vector<16x512xf32>,
    %c0_i32_8 = arith.constant 0 : i32
    %10 = arith.cmpi eq, %arg2, %c0_i32_8 : i32
    %11 = arith.extui %10 : i1 to i32
    %c0_i32_9 = arith.constant 0 : i32
    %12 = arith.cmpi ne, %11, %c0_i32_9 : i32
    scf.if %12 {
      %c0_10 = arith.constant 0 : index
      %c0_11 = arith.constant 0 : index
      %13 = vector.load %arg7[%c0_10, %c0_11] : memref<16x512xf32, #tpu.memory_space<vmem>>, vector<16x512xf32>
      %c0_12 = arith.constant 0 : index
      %c0_13 = arith.constant 0 : index
      %14 = vector.load %arg5[%c0_12, %c0_13] : memref<1x512xf32, #tpu.memory_space<vmem>>, vector<1x512xf32>
      %15 = vector.broadcast %14 : vector<1x512xf32> to vector<16x512xf32>
      %16 = arith.addf %13, %15 : vector<16x512xf32>
      %c0_14 = arith.constant 0 : index
      %c0_15 = arith.constant 0 : index
      %17 = vector.load %arg6[%c0_14, %c0_15] : memref<16x512xf32, #tpu.memory_space<vmem>>, vector<16x512xf32>
      tpu.vector_store %arg6[%c0_14, %c0_15], %16 {strides = array<i32>} : memref<16x512xf32, #tpu.memory_space<vmem>>, vector<16x512xf32>,
    } else {
    }
    return
  }
  func.func @transform_0(%arg0: i32, %arg1: i32, %arg2: i32) -> (i32, i32) {
    %c0_i32 = arith.constant 0 : i32
    return %arg0, %arg2 : i32, i32
  }
  func.func @transform_1(%arg0: i32, %arg1: i32, %arg2: i32) -> (i32, i32) {
    %c0_i32 = arith.constant 0 : i32
    return %arg2, %arg1 : i32, i32
  }
  func.func @transform_2(%arg0: i32, %arg1: i32, %arg2: i32) -> (i32, i32) {
    %c0_i32 = arith.constant 0 : i32
    %c0_i32_0 = arith.constant 0 : i32
    return %c0_i32, %arg1 : i32, i32
  }
  func.func @transform_3(%arg0: i32, %arg1: i32, %arg2: i32) -> (i32, i32) {
    %c0_i32 = arith.constant 0 : i32
    return %arg0, %arg1 : i32, i32
  }
}

module attributes {stable_mosaic.version = 11 : i64} {
  func.func @_linear_kernel(%arg0: i32, %arg1: i32, %arg2: i32, %arg3: memref<2x256xf32, #tpu.memory_space<vmem>>, %arg4: memref<256x8xbf16, #tpu.memory_space<vmem>>, %arg5: memref<1x8xf32, #tpu.memory_space<vmem>>, %arg6: memref<2x8xf32, #tpu.memory_space<vmem>>, %arg7: memref<2x8xf32, #tpu.memory_space<vmem>>) attributes {dimension_semantics = [#tpu.dimension_semantics<parallel>, #tpu.dimension_semantics<parallel>, #tpu.dimension_semantics<arbitrary>], iteration_bounds = array<i64: 1, 1, 1>, scalar_prefetch = 0 : i64, scratch_operands = 1 : i64, tpu.core_type = #tpu.core_type<tc>, window_params = [{transform_indices = @transform_0, window_bounds = array<i64: 2, 256>}, {transform_indices = @transform_1, window_bounds = array<i64: 256, 8>}, {transform_indices = @transform_2, window_bounds = array<i64: 1, 8>}, {transform_indices = @transform_3, window_bounds = array<i64: 2, 8>}]} {
    %c0_i32 = arith.constant 0 : i32
    %0 = arith.cmpi eq, %arg2, %c0_i32 : i32
    %1 = arith.extui %0 : i1 to i32
    %c0_i32_0 = arith.constant 0 : i32
    %2 = arith.cmpi ne, %1, %c0_i32_0 : i32
    scf.if %2 {
      %cst_10 = arith.constant 0.000000e+00 : f32
      %13 = vector.broadcast %cst_10 : f32 to vector<2x8xf32>
      %c0_11 = arith.constant 0 : index
      %c0_12 = arith.constant 0 : index
      %14 = vector.load %arg7[%c0_11, %c0_12] : memref<2x8xf32, #tpu.memory_space<vmem>>, vector<2x8xf32>
      tpu.vector_store %arg7[%c0_11, %c0_12], %13 {strides = array<i32>} : memref<2x8xf32, #tpu.memory_space<vmem>>, vector<2x8xf32>,
    } else {
    }
    %c0 = arith.constant 0 : index
    %c0_1 = arith.constant 0 : index
    %3 = vector.load %arg7[%c0, %c0_1] : memref<2x8xf32, #tpu.memory_space<vmem>>, vector<2x8xf32>
    %c0_2 = arith.constant 0 : index
    %c0_3 = arith.constant 0 : index
    %4 = vector.load %arg3[%c0_2, %c0_3] : memref<2x256xf32, #tpu.memory_space<vmem>>, vector<2x256xf32>
    %5 = arith.truncf %4 : vector<2x256xf32> to vector<2x256xbf16>
    %c0_4 = arith.constant 0 : index
    %c0_5 = arith.constant 0 : index
    %6 = vector.load %arg4[%c0_4, %c0_5] : memref<256x8xbf16, #tpu.memory_space<vmem>>, vector<256x8xbf16>
    %cst = arith.constant dense<0.000000e+00> : vector<2x8xf32>
    %7 = tpu.matmul %5, %6, %cst {dimension_numbers = #tpu.dot_dimension_numbers<[1], [0], [0], [1], [0, 0, 1, 1], [], []>} : vector<2x256xbf16>, vector<256x8xbf16>, vector<2x8xf32> -> vector<2x8xf32>
    %8 = arith.addf %3, %7 : vector<2x8xf32>
    %c0_6 = arith.constant 0 : index
    %c0_7 = arith.constant 0 : index
    %9 = vector.load %arg7[%c0_6, %c0_7] : memref<2x8xf32, #tpu.memory_space<vmem>>, vector<2x8xf32>
    tpu.vector_store %arg7[%c0_6, %c0_7], %8 {strides = array<i32>} : memref<2x8xf32, #tpu.memory_space<vmem>>, vector<2x8xf32>,
    %c0_i32_8 = arith.constant 0 : i32
    %10 = arith.cmpi eq, %arg2, %c0_i32_8 : i32
    %11 = arith.extui %10 : i1 to i32
    %c0_i32_9 = arith.constant 0 : i32
    %12 = arith.cmpi ne, %11, %c0_i32_9 : i32
    scf.if %12 {
      %c0_10 = arith.constant 0 : index
      %c0_11 = arith.constant 0 : index
      %13 = vector.load %arg7[%c0_10, %c0_11] : memref<2x8xf32, #tpu.memory_space<vmem>>, vector<2x8xf32>
      %c0_12 = arith.constant 0 : index
      %c0_13 = arith.constant 0 : index
      %14 = vector.load %arg5[%c0_12, %c0_13] : memref<1x8xf32, #tpu.memory_space<vmem>>, vector<1x8xf32>
      %15 = vector.broadcast %14 : vector<1x8xf32> to vector<2x8xf32>
      %16 = arith.addf %13, %15 : vector<2x8xf32>
      %cst_14 = arith.constant dense<0xFF800000> : vector<2xf32>
      %17 = vector.multi_reduction <maximumf>, %16, %cst_14 [1] : vector<2x8xf32> to vector<2xf32>
      %cst_15 = arith.constant 0xFF800000 : f32
      %18 = vector.broadcast %cst_15 : f32 to vector<2xf32>
      %19 = arith.maximumf %18, %17 : vector<2xf32>
      %20 = vector.shape_cast %19 : vector<2xf32> to vector<2x1xf32>
      %21 = vector.broadcast %20 : vector<2x1xf32> to vector<2x8xf32>
      %22 = arith.subf %16, %21 : vector<2x8xf32>
      %23 = math.exp %22 : vector<2x8xf32>
      %cst_16 = arith.constant dense<0.000000e+00> : vector<2xf32>
      %24 = vector.multi_reduction <add>, %23, %cst_16 [1] : vector<2x8xf32> to vector<2xf32>
      %25 = vector.shape_cast %24 : vector<2xf32> to vector<2x1xf32>
      %26 = vector.broadcast %25 : vector<2x1xf32> to vector<2x8xf32>
      %27 = arith.divf %23, %26 : vector<2x8xf32>
      %c0_17 = arith.constant 0 : index
      %c0_18 = arith.constant 0 : index
      %28 = vector.load %arg6[%c0_17, %c0_18] : memref<2x8xf32, #tpu.memory_space<vmem>>, vector<2x8xf32>
      tpu.vector_store %arg6[%c0_17, %c0_18], %27 {strides = array<i32>} : memref<2x8xf32, #tpu.memory_space<vmem>>, vector<2x8xf32>,
    } else {
    }
    return
  }
  func.func @transform_0(%arg0: i32, %arg1: i32, %arg2: i32) -> (i32, i32) {
    %c0_i32 = arith.constant 0 : i32
    return %arg0, %arg2 : i32, i32
  }
  func.func @transform_1(%arg0: i32, %arg1: i32, %arg2: i32) -> (i32, i32) {
    %c0_i32 = arith.constant 0 : i32
    return %arg2, %arg1 : i32, i32
  }
  func.func @transform_2(%arg0: i32, %arg1: i32, %arg2: i32) -> (i32, i32) {
    %c0_i32 = arith.constant 0 : i32
    %c0_i32_0 = arith.constant 0 : i32
    return %c0_i32, %arg1 : i32, i32
  }
  func.func @transform_3(%arg0: i32, %arg1: i32, %arg2: i32) -> (i32, i32) {
    %c0_i32 = arith.constant 0 : i32
    return %arg0, %arg1 : i32, i32
  }
}

</mosaic_0001>

<llo_original>
// kernel: _lambda_.7
$region0: #{_lambda_.7}
  #allocation0 [shape = 'u32[]', space=smem, size = 0x4, offset = 0x4, fixed_abs, tag = 'smem constant byte address 0x4 - core index']
  #allocation1 [shape = 'u32[72,128]{1,0:T(1,128)}', space=vmem, size = 0x9000, scoped, tag = 'internal scratch']
  #allocation2 [shape = 'f32[16,512]{1,0:T(8,128)}', space=vmem, size = 0x8000, scoped, tag = 'scratch operand']
  %s0 = inlined_call_operand.vmem [shape: f32[16,128], index: 0, kind: input, shape index: {}]
  %s1 = inlined_call_operand.vmem [shape: bf16[128,1024], index: 1, kind: input, shape index: {}]
  %s2 = inlined_call_operand.vmem [shape: f32[1,1024], index: 2, kind: input, shape index: {}]
  %s3 = inlined_call_operand.vmem [shape: f32[16,1024], index: 3, kind: output, shape index: {}]
  %s4 = sld [smem:[#allocation0]]
  $region95: #{_lambda_.7} parent=0
    _
  %s6 = ssub.s32 1, %s4
  %s7 = scalar_select 0, %s6, %s4
  $region1: #{_lambda_.7} parent=0
    #allocation3 [shape = 'u8[262144]{0}', space=vmem, size = 0x40000, scoped, tag = 'input window, operand 1']
    #allocation4 [shape = 'u8[65536]{0}', space=vmem, size = 0x10000, scoped, tag = 'output window, operand 0']
    loop: start=0, step=1, limit=4
    $region2: #{_lambda_.7} parent=1 // loop_pre_header
      _
    $region3: #{_lambda_.7} parent=1 // loop_header
      %s9 = sphi 0, %s13
      %p10 = scmp.ge.s32.totalorder %s9, 4
      %s16 = sphi 0, %s35
      %s17 = sphi 0, %s31
      %s18 = sphi 0, %s27
      %s19 = sphi 0, %s16
      %s20 = sphi 0, %s17
      %s21 = sphi 0, %s18
      %s22 = sphi 0, %s19
      %s23 = sphi 0, %s20
      %s24 = sphi 0, %s21
      %s40 = sphi 0, %s42
      %s43 = sphi 0, %s40
      %s44 = sphi 0, %s43
      %s60 = sphi 0, %s44
      %s68 = sphi 0, %s70
      %s71 = sphi 0, %s68
      %s72 = sphi 0, %s71
      %s88 = sphi 0, %s72
      %s94 = sphi 0, %s96
      %s97 = sphi 0, %s94
      %s98 = sphi 0, %s97
      %s114 = sphi 0, %s98
      %s122 = sphi 0, %s124
      %s125 = sphi 0, %s122
      %s126 = sphi 0, %s125
      %s142 = sphi 0, %s126
    $region4: #{_lambda_.7} parent=1 // loop_header_branch
      %12 = sbr.rel (%p10) target = $region8
    $region5: #{_lambda_.7} parent=1 // loop_body
      %s14 = ssub.s32 %s9, 1
      %s15 = ssub.s32 %s9, 2
      %s25 = sadd.s32 1, %s18
      %p26 = scmp.ge.s32.totalorder %s25, 1
      %s27 = scalar_select %p26, 0, %s25
      %s28 = sadd.s32 1, %s17
      %s29 = scalar_select %p26, %s28, %s17
      %p30 = scmp.ge.s32.totalorder %s29, 2
      %s31 = scalar_select %p30, 0, %s29
      %s32 = sadd.s32 1, %s16
      %s33 = scalar_select %p30, %s32, %s16
      %p34 = scmp.ge.s32.totalorder %s33, 1
      %s35 = scalar_select %p34, 0, %s33
      %s36 = ssub.s32 %s16, %s35
      %s37 = ssub.s32 %s18, %s27
      %s38 = sor.u32 %s36, %s37
      %p39 = scmp.eq.s32.totalorder %s38, 0
      %s41 = sadd.s32 %s40, 1
      %s42 = scalar_select %p39, %s40, %s41
      %p45 = pneg %p39
      %p46 = scmp.eq.s32.totalorder %s9, 1
      %p47 = por %p45, %p46
      %p48 = scmp.ne.s32.totalorder %s40, %s43
      %p49 = scmp.eq.s32.totalorder %s9, 0
      %p50 = por %p48, %p49
      %p51 = scmp.ne.s32.totalorder %s40, %s43
      %p52 = scmp.eq.s32.totalorder %s14, 1
      %p53 = por %p51, %p52
      %p54 = scmp.ne.s32.totalorder %s43, %s44
      %p55 = scmp.eq.s32.totalorder %s14, 0
      %p56 = por %p54, %p55
      %p57 = scmp.ne.s32.totalorder %s43, %s44
      %p58 = scmp.eq.s32.totalorder %s15, 1
      %p59 = por %p57, %p58
      %p61 = scmp.ne.s32.totalorder %s44, %s60
      %p62 = scmp.eq.s32.totalorder %s15, 0
      %p63 = por %p61, %p62
      %s64 = ssub.s32 %s18, %s27
      %s65 = ssub.s32 %s17, %s31
      %s66 = sor.u32 %s64, %s65
      %p67 = scmp.eq.s32.totalorder %s66, 0
      %s69 = sadd.s32 %s68, 1
      %s70 = scalar_select %p67, %s68, %s69
      %p73 = pneg %p67
      %p74 = scmp.eq.s32.totalorder %s9, 1
      %p75 = por %p73, %p74
      %p76 = scmp.ne.s32.totalorder %s68, %s71
      %p77 = scmp.eq.s32.totalorder %s9, 0
      %p78 = por %p76, %p77
      %p79 = scmp.ne.s32.totalorder %s68, %s71
      %p80 = scmp.eq.s32.totalorder %s14, 1
      %p81 = por %p79, %p80
      %p82 = scmp.ne.s32.totalorder %s71, %s72
      %p83 = scmp.eq.s32.totalorder %s14, 0
      %p84 = por %p82, %p83
      %p85 = scmp.ne.s32.totalorder %s71, %s72
      %p86 = scmp.eq.s32.totalorder %s15, 1
      %p87 = por %p85, %p86
      %p89 = scmp.ne.s32.totalorder %s72, %s88
      %p90 = scmp.eq.s32.totalorder %s15, 0
      %p91 = por %p89, %p90
      %s92 = ssub.s32 %s17, %s31
      %p93 = scmp.eq.s32.totalorder %s92, 0
      %s95 = sadd.s32 %s94, 1
      %s96 = scalar_select %p93, %s94, %s95
      %p99 = pneg %p93
      %p100 = scmp.eq.s32.totalorder %s9, 1
      %p101 = por %p99, %p100
      %p102 = scmp.ne.s32.totalorder %s94, %s97
      %p103 = scmp.eq.s32.totalorder %s9, 0
      %p104 = por %p102, %p103
      %p105 = scmp.ne.s32.totalorder %s94, %s97
      %p106 = scmp.eq.s32.totalorder %s14, 1
      %p107 = por %p105, %p106
      %p108 = scmp.ne.s32.totalorder %s97, %s98
      %p109 = scmp.eq.s32.totalorder %s14, 0
      %p110 = por %p108, %p109
      %p111 = scmp.ne.s32.totalorder %s97, %s98
      %p112 = scmp.eq.s32.totalorder %s15, 1
      %p113 = por %p111, %p112
      %p115 = scmp.ne.s32.totalorder %s98, %s114
      %p116 = scmp.eq.s32.totalorder %s15, 0
      %p117 = por %p115, %p116
      %s118 = ssub.s32 %s16, %s35
      %s119 = ssub.s32 %s17, %s31
      %s120 = sor.u32 %s118, %s119
      %p121 = scmp.eq.s32.totalorder %s120, 0
      %s123 = sadd.s32 %s122, 1
      %s124 = scalar_select %p121, %s122, %s123
      %p127 = pneg %p121
      %p128 = scmp.eq.s32.totalorder %s9, 1
      %p129 = por %p127, %p128
      %p130 = scmp.ne.s32.totalorder %s122, %s125
      %p131 = scmp.eq.s32.totalorder %s9, 0
      %p132 = por %p130, %p131
      %p133 = scmp.ne.s32.totalorder %s122, %s125
      %p134 = scmp.eq.s32.totalorder %s14, 1
      %p135 = por %p133, %p134
      %p136 = scmp.ne.s32.totalorder %s125, %s126
      %p137 = scmp.eq.s32.totalorder %s14, 0
      %p138 = por %p136, %p137
      %p139 = scmp.ne.s32.totalorder %s125, %s126
      %p140 = scmp.eq.s32.totalorder %s15, 1
      %p141 = por %p139, %p140
      %p143 = scmp.ne.s32.totalorder %s126, %s142
      %p144 = scmp.eq.s32.totalorder %s15, 0
      %p145 = por %p143, %p144
      %p146 = scmp.le.s32.totalorder 1, %s9
      %p147 = scmp.lt.s32.totalorder %s9, 3
      %p148 = pnand %p146, %p147
      %p149 = pneg %p148
      // Predicated region
      $region9: #{_lambda_.7} parent=5 // pred_check
        _
      $region10: #{_lambda_.7} parent=5 // pred_check_branch
        %151 = sbr.rel (%p148) target = $region12
      $region11: #{_lambda_.7} parent=5 // pred_region
        %s152 = ssub.s32 %s9, 1
        // Predicated region
        $region13: #{_lambda_.7} parent=11 // pred_check
          %p153 = pneg %p56
        $region14: #{_lambda_.7} parent=11 // pred_check_branch
          %155 = sbr.rel (%p153) target = $region16
        $region15: #{_lambda_.7} parent=11 // pred_region
          %s156 = smul.u32 2, %s19
          %p157 = scmp.lt.s32.totalorder %s156, 1
          %s158 = scalar_select %p157, %s156, 1
          %p159 = scmp.lt.s32.totalorder %s21, 0
          %s160 = scalar_select %p159, %s21, 0
          %s161 = sadd.s32 %s160, %s158
          %s162 = smul.addr %s161, 8
          %s163 = scalar_lea.vmem %s0, %s162
          %s164 = smul.u32 2, %s19
        $region16: #{_lambda_.7} parent=11 // pred_fallthru
          _
      $region12: #{_lambda_.7} parent=5 // pred_fallthru
        _
      %p165 = scmp.lt.s32.totalorder %s9, 2
      // Predicated region
      $region17: #{_lambda_.7} parent=5 // pred_check
        %p166 = pneg %p165
      $region18: #{_lambda_.7} parent=5 // pred_check_branch
        %168 = sbr.rel (%p166) target = $region20
      $region19: #{_lambda_.7} parent=5 // pred_region
        // Predicated region
        $region21: #{_lambda_.7} parent=19 // pred_check
          %p169 = pneg %p78
        $region22: #{_lambda_.7} parent=19 // pred_check_branch
          %171 = sbr.rel (%p169) target = $region24
        $region23: #{_lambda_.7} parent=19 // pred_region
          %s172 = sand.u32 %s68, 1
          %s173 = sand.u32 %s68, 1
          %s174 = smul.addr %s173, 256
          %s175 = scalar_lea.vmem [#allocation3], %s174
          %s176 = smul.u32 16, %s18
          %s177 = smul.u32 4, %s17
          %s178 = smul.addr %s176, 8
          %s179 = sadd.s32 %s177, %s178
          %s180 = smul.addr %s179, 4
          %s181 = scalar_lea.vmem %s1, %s180
          // Predicated region
          $region25: #{_lambda_.7} parent=23 // pred_check
            _
          $region26: #{_lambda_.7} parent=23 // pred_check_branch
            %183 = sbr.rel (0) target = $region28
          $region27: #{_lambda_.7} parent=23 // pred_region
            // Predicated region
            $region29: #{_lambda_.7} parent=27 // pred_check
              _
            $region30: #{_lambda_.7} parent=27 // pred_check_branch
              %185 = sbr.rel (0) target = $region32
            $region31: #{_lambda_.7} parent=27 // pred_region
              loop: start=0, step=1, limit=1
              $region33: #{_lambda_.7} parent=31 // loop_pre_header
                _
              $region34: #{_lambda_.7} parent=31 // loop_header
                %s187 = sphi 0, %s191
                %p188 = scmp.ge.s32.totalorder %s187, 1
                %s192 = sphi %s181, %s181
                %s193 = sphi %s175, %s175
              $region35: #{_lambda_.7} parent=31 // loop_header_branch
                %190 = sbr.rel (%p188) target = $region39
              $region36: #{_lambda_.7} parent=31 // loop_body
                %v194 = vld [vmem:[%s192] sm:$0xff]
                %195 = vst [vmem:[%s193] sm:$0xff] %v194
                %v196 = vld [vmem:[%s192 + $0x8] sm:$0xff]
                %197 = vst [vmem:[%s193 + $0x8] sm:$0xff] %v196
                %v198 = vld [vmem:[%s192 + $0x20] sm:$0xff]
                %199 = vst [vmem:[%s193 + $0x10] sm:$0xff] %v198
                %v200 = vld [vmem:[%s192 + $0x28] sm:$0xff]
                %201 = vst [vmem:[%s193 + $0x18] sm:$0xff] %v200
                %v202 = vld [vmem:[%s192 + $0x40] sm:$0xff]
                %203 = vst [vmem:[%s193 + $0x20] sm:$0xff] %v202
                %v204 = vld [vmem:[%s192 + $0x48] sm:$0xff]
                %205 = vst [vmem:[%s193 + $0x28] sm:$0xff] %v204
                %v206 = vld [vmem:[%s192 + $0x60] sm:$0xff]
                %207 = vst [vmem:[%s193 + $0x30] sm:$0xff] %v206
                %v208 = vld [vmem:[%s192 + $0x68] sm:$0xff]
                %209 = vst [vmem:[%s193 + $0x38] sm:$0xff] %v208
                %v210 = vld [vmem:[%s192 + $0x80] sm:$0xff]
                %211 = vst [vmem:[%s193 + $0x40] sm:$0xff] %v210
                %v212 = vld [vmem:[%s192 + $0x88] sm:$0xff]
                %213 = vst [vmem:[%s193 + $0x48] sm:$0xff] %v212
                %v214 = vld [vmem:[%s192 + $0xa0] sm:$0xff]
                %215 = vst [vmem:[%s193 + $0x50] sm:$0xff] %v214
                %v216 = vld [vmem:[%s192 + $0xa8] sm:$0xff]
                %217 = vst [vmem:[%s193 + $0x58] sm:$0xff] %v216
                %v218 = vld [vmem:[%s192 + $0xc0] sm:$0xff]
                %219 = vst [vmem:[%s193 + $0x60] sm:$0xff] %v218
                %v220 = vld [vmem:[%s192 + $0xc8] sm:$0xff]
                %221 = vst [vmem:[%s193 + $0x68] sm:$0xff] %v220
                %v222 = vld [vmem:[%s192 + $0xe0] sm:$0xff]
                %223 = vst [vmem:[%s193 + $0x70] sm:$0xff] %v222
                %v224 = vld [vmem:[%s192 + $0xe8] sm:$0xff]
                %225 = vst [vmem:[%s193 + $0x78] sm:$0xff] %v224
                %v226 = vld [vmem:[%s192 + $0x100] sm:$0xff]
                %227 = vst [vmem:[%s193 + $0x80] sm:$0xff] %v226
                %v228 = vld [vmem:[%s192 + $0x108] sm:$0xff]
                %229 = vst [vmem:[%s193 + $0x88] sm:$0xff] %v228
                %v230 = vld [vmem:[%s192 + $0x120] sm:$0xff]
                %231 = vst [vmem:[%s193 + $0x90] sm:$0xff] %v230
                %v232 = vld [vmem:[%s192 + $0x128] sm:$0xff]
                %233 = vst [vmem:[%s193 + $0x98] sm:$0xff] %v232
                %v234 = vld [vmem:[%s192 + $0x140] sm:$0xff]
                %235 = vst [vmem:[%s193 + $0xa0] sm:$0xff] %v234
                %v236 = vld [vmem:[%s192 + $0x148] sm:$0xff]
                %237 = vst [vmem:[%s193 + $0xa8] sm:$0xff] %v236
                %v238 = vld [vmem:[%s192 + $0x160] sm:$0xff]
                %239 = vst [vmem:[%s193 + $0xb0] sm:$0xff] %v238
                %v240 = vld [vmem:[%s192 + $0x168] sm:$0xff]
                %241 = vst [vmem:[%s193 + $0xb8] sm:$0xff] %v240
                %v242 = vld [vmem:[%s192 + $0x180] sm:$0xff]
                %243 = vst [vmem:[%s193 + $0xc0] sm:$0xff] %v242
                %v244 = vld [vmem:[%s192 + $0x188] sm:$0xff]
                %245 = vst [vmem:[%s193 + $0xc8] sm:$0xff] %v244
                %v246 = vld [vmem:[%s192 + $0x1a0] sm:$0xff]
                %247 = vst [vmem:[%s193 + $0xd0] sm:$0xff] %v246
                %v248 = vld [vmem:[%s192 + $0x1a8] sm:$0xff]
                %249 = vst [vmem:[%s193 + $0xd8] sm:$0xff] %v248
                %v250 = vld [vmem:[%s192 + $0x1c0] sm:$0xff]
                %251 = vst [vmem:[%s193 + $0xe0] sm:$0xff] %v250
                %v252 = vld [vmem:[%s192 + $0x1c8] sm:$0xff]
                %253 = vst [vmem:[%s193 + $0xe8] sm:$0xff] %v252
                %v254 = vld [vmem:[%s192 + $0x1e0] sm:$0xff]
                %255 = vst [vmem:[%s193 + $0xf0] sm:$0xff] %v254
                %v256 = vld [vmem:[%s192 + $0x1e8] sm:$0xff]
                %257 = vst [vmem:[%s193 + $0xf8] sm:$0xff] %v256
              $region37: #{_lambda_.7} parent=31 // loop_footer
                %s191 = sadd.s32 1, %s187
              $region38: #{_lambda_.7} parent=31 // loop_footer_branch
                %186 = sbr.rel target = $region34
              $region39: #{_lambda_.7} parent=31 // loop_exit
                _
            $region32: #{_lambda_.7} parent=27 // pred_fallthru
              _
            // Predicated region
            $region40: #{_lambda_.7} parent=27 // pred_check
              _
            $region41: #{_lambda_.7} parent=27 // pred_check_branch
              %259 = sbr.rel target = $region43
            $region42: #{_lambda_.7} parent=27 // pred_region
              _
            $region43: #{_lambda_.7} parent=27 // pred_fallthru
              _
          $region28: #{_lambda_.7} parent=23 // pred_fallthru
            _
          %260 = vnop
        $region24: #{_lambda_.7} parent=19 // pred_fallthru
          _
        // Predicated region
        $region44: #{_lambda_.7} parent=19 // pred_check
          %p261 = pneg %p104
        $region45: #{_lambda_.7} parent=19 // pred_check_branch
          %263 = sbr.rel (%p261) target = $region47
        $region46: #{_lambda_.7} parent=19 // pred_region
          %s264 = smul.u32 4, %s17
          %p265 = scmp.lt.s32.totalorder %s264, 7
          %s266 = scalar_select %p265, %s264, 7
          %s267 = scalar_lea.vmem %s2, %s266
          %s268 = smul.u32 4, %s17
        $region47: #{_lambda_.7} parent=19 // pred_fallthru
          _
      $region20: #{_lambda_.7} parent=5 // pred_fallthru
        _
      %p269 = scmp.le.s32.totalorder 1, %s9
      %p270 = scmp.lt.s32.totalorder %s9, 3
      %p271 = pnand %p269, %p270
      %p272 = pneg %p271
      // Predicated region
      $region48: #{_lambda_.7} parent=5 // pred_check
        _
      $region49: #{_lambda_.7} parent=5 // pred_check_branch
        %274 = sbr.rel (%p271) target = $region51
      $region50: #{_lambda_.7} parent=5 // pred_region
        %s275 = ssub.s32 %s9, 1
        %s276 = sand.u32 %s71, 1
        %s277 = sand.u32 %s71, 1
        %s278 = smul.addr %s277, 256
        %s279 = scalar_lea.vmem [#allocation3], %s278
        // Predicated region
        $region52: #{_lambda_.7} parent=50 // pred_check
          %p280 = pneg %p84
        $region53: #{_lambda_.7} parent=50 // pred_check_branch
          %282 = sbr.rel (%p280) target = $region55
        $region54: #{_lambda_.7} parent=50 // pred_region
          _
        $region55: #{_lambda_.7} parent=50 // pred_fallthru
          _
        %s283 = smul.u32 2, %s19
        %p284 = scmp.lt.s32.totalorder %s283, 1
        %s285 = scalar_select %p284, %s283, 1
        %p286 = scmp.lt.s32.totalorder %s21, 0
        %s287 = scalar_select %p286, %s21, 0
        %s288 = sadd.s32 %s287, %s285
        %s289 = smul.addr %s288, 8
        %s290 = scalar_lea.vmem %s0, %s289
        %p291 = pneg %p56
        %p292 = pneg %p53
        %s293 = sand.u32 %s71, 1
        %s294 = sand.u32 %s71, 1
        %s295 = smul.addr %s294, 256
        %s296 = scalar_lea.vmem [#allocation3], %s295
        %p297 = pneg %p84
        %p298 = pneg %p81
        %s299 = smul.u32 4, %s20
        %p300 = scmp.lt.s32.totalorder %s299, 7
        %s301 = scalar_select %p300, %s299, 7
        %s302 = scalar_lea.vmem %s2, %s301
        %p303 = pneg %p110
        %p304 = pneg %p107
        %p305 = pneg %p138
        %p306 = pneg %p135
        %s307 = sand.u32 %s125, 1
        %s308 = sand.u32 %s125, 1
        %s309 = smul.addr %s308, 64
        %s310 = scalar_lea.vmem [#allocation4], %s309
        %s311 = smul.u32 2, %s19
        %p312 = scmp.lt.s32.totalorder %s311, 1
        %s313 = scalar_select %p312, %s311, 1
        %p314 = scmp.lt.s32.totalorder %s21, 0
        %s315 = scalar_select %p314, %s21, 0
        %s316 = sadd.s32 %s315, %s313
        %s317 = smul.addr %s316, 8
        %s318 = scalar_lea.vmem %s0, %s317
        %s319 = smul.u32 2, %s19
        %s320 = smul.u32 16, %s21
        %s321 = smul.u32 4, %s20
        %s322 = smul.u32 4, %s20
        %p323 = scmp.lt.s32.totalorder %s322, 7
        %s324 = scalar_select %p323, %s322, 7
        %s325 = scalar_lea.vmem %s2, %s324
        %s326 = smul.u32 4, %s20
        %s327 = smul.u32 2, %s19
        %s328 = smul.u32 4, %s20
        %p329 = scmp.eq.s32.totalorder %s21, 0
        // Predicated region
        $region56: #{_lambda_.7} parent=50 // pred_check
          %p330 = pneg %p329
        $region57: #{_lambda_.7} parent=50 // pred_check_branch
          %332 = sbr.rel (%p330) target = $region59
        $region58: #{_lambda_.7} parent=50 // pred_region
          %333 = vst [vmem:[#allocation2] sm:$0xff] 0.0
          %334 = vst [vmem:[#allocation2 + $0x8] sm:$0xff] 0.0
          %335 = vst [vmem:[#allocation2 + $0x10] sm:$0xff] 0.0
          %336 = vst [vmem:[#allocation2 + $0x18] sm:$0xff] 0.0
          %337 = vst [vmem:[#allocation2 + $0x20] sm:$0xff] 0.0
          %338 = vst [vmem:[#allocation2 + $0x28] sm:$0xff] 0.0
          %339 = vst [vmem:[#allocation2 + $0x30] sm:$0xff] 0.0
          %340 = vst [vmem:[#allocation2 + $0x38] sm:$0xff] 0.0
        $region59: #{_lambda_.7} parent=50 // pred_fallthru
          _
        %v341 = vld [vmem:[#allocation2] sm:$0xff]
        %v342 = vld [vmem:[#allocation2 + $0x8] sm:$0xff]
        %v343 = vld [vmem:[#allocation2 + $0x10] sm:$0xff]
        %v344 = vld [vmem:[#allocation2 + $0x18] sm:$0xff]
        %v345 = vld [vmem:[#allocation2 + $0x20] sm:$0xff]
        %v346 = vld [vmem:[#allocation2 + $0x28] sm:$0xff]
        %v347 = vld [vmem:[#allocation2 + $0x30] sm:$0xff]
        %v348 = vld [vmem:[#allocation2 + $0x38] sm:$0xff]
        %v349 = vld [vmem:[%s318] sm:$0xff]
        %v350 = vld [vmem:[%s318 + $0x8] sm:$0xff]
        %v351 = vpack.c.bf16 %v350, %v349
        %v352 = vld [vmem:[%s279] sm:$0xff]
        %v353 = vld [vmem:[%s279 + $0x8] sm:$0xff]
        %v354 = vld [vmem:[%s279 + $0x10] sm:$0xff]
        %v355 = vld [vmem:[%s279 + $0x18] sm:$0xff]
        %v356 = vld [vmem:[%s279 + $0x20] sm:$0xff]
        %v357 = vld [vmem:[%s279 + $0x28] sm:$0xff]
        %v358 = vld [vmem:[%s279 + $0x30] sm:$0xff]
        %v359 = vld [vmem:[%s279 + $0x38] sm:$0xff]
        %v360 = vld [vmem:[%s279 + $0x40] sm:$0xff]
        %v361 = vld [vmem:[%s279 + $0x48] sm:$0xff]
        %v362 = vld [vmem:[%s279 + $0x50] sm:$0xff]
        %v363 = vld [vmem:[%s279 + $0x58] sm:$0xff]
        %v364 = vld [vmem:[%s279 + $0x60] sm:$0xff]
        %v365 = vld [vmem:[%s279 + $0x68] sm:$0xff]
        %v366 = vld [vmem:[%s279 + $0x70] sm:$0xff]
        %v367 = vld [vmem:[%s279 + $0x78] sm:$0xff]
        %v368 = vld [vmem:[%s279 + $0x80] sm:$0xff]
        %v369 = vld [vmem:[%s279 + $0x88] sm:$0xff]
        %v370 = vld [vmem:[%s279 + $0x90] sm:$0xff]
        %v371 = vld [vmem:[%s279 + $0x98] sm:$0xff]
        %v372 = vld [vmem:[%s279 + $0xa0] sm:$0xff]
        %v373 = vld [vmem:[%s279 + $0xa8] sm:$0xff]
        %v374 = vld [vmem:[%s279 + $0xb0] sm:$0xff]
        %v375 = vld [vmem:[%s279 + $0xb8] sm:$0xff]
        %v376 = vld [vmem:[%s279 + $0xc0] sm:$0xff]
        %v377 = vld [vmem:[%s279 + $0xc8] sm:$0xff]
        %v378 = vld [vmem:[%s279 + $0xd0] sm:$0xff]
        %v379 = vld [vmem:[%s279 + $0xd8] sm:$0xff]
        %v380 = vld [vmem:[%s279 + $0xe0] sm:$0xff]
        %v381 = vld [vmem:[%s279 + $0xe8] sm:$0xff]
        %v382 = vld [vmem:[%s279 + $0xf0] sm:$0xff]
        %v383 = vld [vmem:[%s279 + $0xf8] sm:$0xff]
        %v416 = vunpack.c.l.b16 %v352
        %v417 = vunpack.c.h.b16 %v352
        %v418 = vunpack.c.l.b16 %v353
        %v419 = vunpack.c.h.b16 %v353
        %v420 = vunpack.c.l.b16 %v354
        %v421 = vunpack.c.h.b16 %v354
        %v422 = vunpack.c.l.b16 %v355
        %v423 = vunpack.c.h.b16 %v355
        %v424 = vunpack.c.l.b16 %v356
        %v425 = vunpack.c.h.b16 %v356
        %v426 = vunpack.c.l.b16 %v357
        %v427 = vunpack.c.h.b16 %v357
        %v428 = vunpack.c.l.b16 %v358
        %v429 = vunpack.c.h.b16 %v358
        %v430 = vunpack.c.l.b16 %v359
        %v431 = vunpack.c.h.b16 %v359
        %v432 = vunpack.c.l.b16 %v360
        %v433 = vunpack.c.h.b16 %v360
        %v434 = vunpack.c.l.b16 %v361
        %v435 = vunpack.c.h.b16 %v361
        %v436 = vunpack.c.l.b16 %v362
        %v437 = vunpack.c.h.b16 %v362
        %v438 = vunpack.c.l.b16 %v363
        %v439 = vunpack.c.h.b16 %v363
        %v440 = vunpack.c.l.b16 %v364
        %v441 = vunpack.c.h.b16 %v364
        %v442 = vunpack.c.l.b16 %v365
        %v443 = vunpack.c.h.b16 %v365
        %v444 = vunpack.c.l.b16 %v366
        %v445 = vunpack.c.h.b16 %v366
        %v446 = vunpack.c.l.b16 %v367
        %v447 = vunpack.c.h.b16 %v367
        %v448 = vunpack.c.l.b16 %v368
        %v449 = vunpack.c.h.b16 %v368
        %v450 = vunpack.c.l.b16 %v369
        %v451 = vunpack.c.h.b16 %v369
        %v452 = vunpack.c.l.b16 %v370
        %v453 = vunpack.c.h.b16 %v370
        %v454 = vunpack.c.l.b16 %v371
        %v455 = vunpack.c.h.b16 %v371
        %v456 = vunpack.c.l.b16 %v372
        %v457 = vunpack.c.h.b16 %v372
        %v458 = vunpack.c.l.b16 %v373
        %v459 = vunpack.c.h.b16 %v373
        %v460 = vunpack.c.l.b16 %v374
        %v461 = vunpack.c.h.b16 %v374
        %v462 = vunpack.c.l.b16 %v375
        %v463 = vunpack.c.h.b16 %v375
        %v464 = vunpack.c.l.b16 %v376
        %v465 = vunpack.c.h.b16 %v376
        %v466 = vunpack.c.l.b16 %v377
        %v467 = vunpack.c.h.b16 %v377
        %v468 = vunpack.c.l.b16 %v378
        %v469 = vunpack.c.h.b16 %v378
        %v470 = vunpack.c.l.b16 %v379
        %v471 = vunpack.c.h.b16 %v379
        %v472 = vunpack.c.l.b16 %v380
        %v473 = vunpack.c.h.b16 %v380
        %v474 = vunpack.c.l.b16 %v381
        %v475 = vunpack.c.h.b16 %v381
        %v476 = vunpack.c.l.b16 %v382
        %v477 = vunpack.c.h.b16 %v382
        %v478 = vunpack.c.l.b16 %v383
        %v479 = vunpack.c.h.b16 %v383
        %v480 = vpack.c.b16 %v420, %v416
        %v481 = vpack.c.b16 %v421, %v417
        %v482 = vpack.c.b16 %v422, %v418
        %v483 = vpack.c.b16 %v423, %v419
        %v484 = vpack.c.b16 %v428, %v424
        %v485 = vpack.c.b16 %v429, %v425
        %v486 = vpack.c.b16 %v430, %v426
        %v487 = vpack.c.b16 %v431, %v427
        %v488 = vpack.c.b16 %v436, %v432
        %v489 = vpack.c.b16 %v437, %v433
        %v490 = vpack.c.b16 %v438, %v434
        %v491 = vpack.c.b16 %v439, %v435
        %v492 = vpack.c.b16 %v444, %v440
        %v493 = vpack.c.b16 %v445, %v441
        %v494 = vpack.c.b16 %v446, %v442
        %v495 = vpack.c.b16 %v447, %v443
        %v496 = vpack.c.b16 %v452, %v448
        %v497 = vpack.c.b16 %v453, %v449
        %v498 = vpack.c.b16 %v454, %v450
        %v499 = vpack.c.b16 %v455, %v451
        %v500 = vpack.c.b16 %v460, %v456
        %v501 = vpack.c.b16 %v461, %v457
        %v502 = vpack.c.b16 %v462, %v458
        %v503 = vpack.c.b16 %v463, %v459
        %v504 = vpack.c.b16 %v468, %v464
        %v505 = vpack.c.b16 %v469, %v465
        %v506 = vpack.c.b16 %v470, %v466
        %v507 = vpack.c.b16 %v471, %v467
        %v508 = vpack.c.b16 %v476, %v472
        %v509 = vpack.c.b16 %v477, %v473
        %v510 = vpack.c.b16 %v478, %v474
        %v511 = vpack.c.b16 %v479, %v475
        %544 = vmatpush.bf16.msra.mxu0 %v508
        %545 = vmatpush.bf16.msra.mxu0 %v504
        %546 = vmatpush.bf16.msra.mxu0 %v500
        %547 = vmatpush.bf16.msra.mxu0 %v496
        %548 = vmatpush.bf16.msra.mxu0 %v492
        %549 = vmatpush.bf16.msra.mxu0 %v488
        %550 = vmatpush.bf16.msra.mxu0 %v484
        %551 = vmatpush.bf16.msra.mxu0 %v480
        %552 = vmatmul.bf16.gmra.mxu0 %v351
        %v553 = vpop.f32.mrf.mxu0
        %v554 = vadd.f32 0.0, %v553
        %v555 = vpop.f32.mrf.mxu0
        %v556 = vadd.f32 0.0, %v555
        %557 = vdwg.mxu0
        %558 = vmatpush.bf16.msra.mxu0 %v509
        %559 = vmatpush.bf16.msra.mxu0 %v505
        %560 = vmatpush.bf16.msra.mxu0 %v501
        %561 = vmatpush.bf16.msra.mxu0 %v497
        %562 = vmatpush.bf16.msra.mxu0 %v493
        %563 = vmatpush.bf16.msra.mxu0 %v489
        %564 = vmatpush.bf16.msra.mxu0 %v485
        %565 = vmatpush.bf16.msra.mxu0 %v481
        %566 = vmatmul.bf16.gmra.mxu0 %v351
        %v567 = vpop.f32.mrf.mxu0
        %v568 = vadd.f32 0.0, %v567
        %v569 = vpop.f32.mrf.mxu0
        %v570 = vadd.f32 0.0, %v569
        %571 = vdwg.mxu0
        %572 = vmatpush.bf16.msra.mxu0 %v510
        %573 = vmatpush.bf16.msra.mxu0 %v506
        %574 = vmatpush.bf16.msra.mxu0 %v502
        %575 = vmatpush.bf16.msra.mxu0 %v498
        %576 = vmatpush.bf16.msra.mxu0 %v494
        %577 = vmatpush.bf16.msra.mxu0 %v490
        %578 = vmatpush.bf16.msra.mxu0 %v486
        %579 = vmatpush.bf16.msra.mxu0 %v482
        %580 = vmatmul.bf16.gmra.mxu0 %v351
        %v581 = vpop.f32.mrf.mxu0
        %v582 = vadd.f32 0.0, %v581
        %v583 = vpop.f32.mrf.mxu0
        %v584 = vadd.f32 0.0, %v583
        %585 = vdwg.mxu0
        %586 = vmatpush.bf16.msra.mxu0 %v511
        %587 = vmatpush.bf16.msra.mxu0 %v507
        %588 = vmatpush.bf16.msra.mxu0 %v503
        %589 = vmatpush.bf16.msra.mxu0 %v499
        %590 = vmatpush.bf16.msra.mxu0 %v495
        %591 = vmatpush.bf16.msra.mxu0 %v491
        %592 = vmatpush.bf16.msra.mxu0 %v487
        %593 = vmatpush.bf16.msra.mxu0 %v483
        %594 = vmatmul.bf16.gmra.mxu0 %v351
        %v595 = vpop.f32.mrf.mxu0
        %v596 = vadd.f32 0.0, %v595
        %v597 = vpop.f32.mrf.mxu0
        %v598 = vadd.f32 0.0, %v597
        %599 = vdwg.mxu0
        %v600 = vadd.f32 %v341, %v554
        %v601 = vadd.f32 %v342, %v568
        %v602 = vadd.f32 %v343, %v582
        %v603 = vadd.f32 %v344, %v596
        %v604 = vadd.f32 %v345, %v556
        %v605 = vadd.f32 %v346, %v570
        %v606 = vadd.f32 %v347, %v584
        %v607 = vadd.f32 %v348, %v598
        %608 = vst [vmem:[#allocation2] sm:$0xff] %v600
        %609 = vst [vmem:[#allocation2 + $0x8] sm:$0xff] %v601
        %610 = vst [vmem:[#allocation2 + $0x10] sm:$0xff] %v602
        %611 = vst [vmem:[#allocation2 + $0x18] sm:$0xff] %v603
        %612 = vst [vmem:[#allocation2 + $0x20] sm:$0xff] %v604
        %613 = vst [vmem:[#allocation2 + $0x28] sm:$0xff] %v605
        %614 = vst [vmem:[#allocation2 + $0x30] sm:$0xff] %v606
        %615 = vst [vmem:[#allocation2 + $0x38] sm:$0xff] %v607
        // Predicated region
        $region60: #{_lambda_.7} parent=50 // pred_check
          %p616 = pneg %p329
        $region61: #{_lambda_.7} parent=50 // pred_check_branch
          %618 = sbr.rel (%p616) target = $region63
        $region62: #{_lambda_.7} parent=50 // pred_region
          %v619 = vld [vmem:[#allocation2] sm:$0xff]
          %v620 = vld [vmem:[#allocation2 + $0x8] sm:$0xff]
          %v621 = vld [vmem:[#allocation2 + $0x10] sm:$0xff]
          %v622 = vld [vmem:[#allocation2 + $0x18] sm:$0xff]
          %v623 = vld [vmem:[#allocation2 + $0x20] sm:$0xff]
          %v624 = vld [vmem:[#allocation2 + $0x28] sm:$0xff]
          %v625 = vld [vmem:[#allocation2 + $0x30] sm:$0xff]
          %v626 = vld [vmem:[#allocation2 + $0x38] sm:$0xff]
          %v627 = vld [vmem:[%s325] sm:$0xf]
          %v629 = vperm.slane %v627, 0
          %v630 = vperm.slane %v627, 1
          %v631 = vperm.slane %v627, 2
          %v632 = vperm.slane %v627, 3
          %v637 = vadd.f32 %v619, %v629
          %v638 = vadd.f32 %v620, %v630
          %v639 = vadd.f32 %v621, %v631
          %v640 = vadd.f32 %v622, %v632
          %v641 = vadd.f32 %v623, %v629
          %v642 = vadd.f32 %v624, %v630
          %v643 = vadd.f32 %v625, %v631
          %v644 = vadd.f32 %v626, %v632
          %645 = vst [vmem:[%s310] sm:$0xff] %v637
          %646 = vst [vmem:[%s310 + $0x8] sm:$0xff] %v638
          %647 = vst [vmem:[%s310 + $0x10] sm:$0xff] %v639
          %648 = vst [vmem:[%s310 + $0x18] sm:$0xff] %v640
          %649 = vst [vmem:[%s310 + $0x20] sm:$0xff] %v641
          %650 = vst [vmem:[%s310 + $0x28] sm:$0xff] %v642
          %651 = vst [vmem:[%s310 + $0x30] sm:$0xff] %v643
          %652 = vst [vmem:[%s310 + $0x38] sm:$0xff] %v644
        $region63: #{_lambda_.7} parent=50 // pred_fallthru
          _
        %s653 = sand.u32 %s125, 1
        %s654 = sand.u32 %s125, 1
        %s655 = smul.addr %s654, 64
        %s656 = scalar_lea.vmem [#allocation4], %s655
        // Predicated region
        $region64: #{_lambda_.7} parent=50 // pred_check
          %p657 = pneg %p135
        $region65: #{_lambda_.7} parent=50 // pred_check_branch
          %659 = sbr.rel (%p657) target = $region67
        $region66: #{_lambda_.7} parent=50 // pred_region
          %s660 = smul.u32 2, %s19
          %s661 = smul.u32 4, %s20
          %s662 = smul.addr %s660, 8
          %s663 = sadd.s32 %s661, %s662
          %s664 = smul.addr %s663, 8
          %s665 = scalar_lea.vmem %s3, %s664
          // Predicated region
          $region68: #{_lambda_.7} parent=66 // pred_check
            _
          $region69: #{_lambda_.7} parent=66 // pred_check_branch
            %667 = sbr.rel (0) target = $region71
          $region70: #{_lambda_.7} parent=66 // pred_region
            // Predicated region
            $region72: #{_lambda_.7} parent=70 // pred_check
              _
            $region73: #{_lambda_.7} parent=70 // pred_check_branch
              %669 = sbr.rel (0) target = $region75
            $region74: #{_lambda_.7} parent=70 // pred_region
              loop: start=0, step=1, limit=1
              $region76: #{_lambda_.7} parent=74 // loop_pre_header
                _
              $region77: #{_lambda_.7} parent=74 // loop_header
                %s671 = sphi 0, %s675
                %p672 = scmp.ge.s32.totalorder %s671, 1
                %s676 = sphi %s656, %s656
                %s677 = sphi %s665, %s665
              $region78: #{_lambda_.7} parent=74 // loop_header_branch
                %674 = sbr.rel (%p672) target = $region82
              $region79: #{_lambda_.7} parent=74 // loop_body
                %v678 = vld [vmem:[%s676] sm:$0xff]
                %679 = vst [vmem:[%s677] sm:$0xff] %v678
                %v680 = vld [vmem:[%s676 + $0x8] sm:$0xff]
                %681 = vst [vmem:[%s677 + $0x8] sm:$0xff] %v680
                %v682 = vld [vmem:[%s676 + $0x10] sm:$0xff]
                %683 = vst [vmem:[%s677 + $0x10] sm:$0xff] %v682
                %v684 = vld [vmem:[%s676 + $0x18] sm:$0xff]
                %685 = vst [vmem:[%s677 + $0x18] sm:$0xff] %v684
                %v686 = vld [vmem:[%s676 + $0x20] sm:$0xff]
                %687 = vst [vmem:[%s677 + $0x40] sm:$0xff] %v686
                %v688 = vld [vmem:[%s676 + $0x28] sm:$0xff]
                %689 = vst [vmem:[%s677 + $0x48] sm:$0xff] %v688
                %v690 = vld [vmem:[%s676 + $0x30] sm:$0xff]
                %691 = vst [vmem:[%s677 + $0x50] sm:$0xff] %v690
                %v692 = vld [vmem:[%s676 + $0x38] sm:$0xff]
                %693 = vst [vmem:[%s677 + $0x58] sm:$0xff] %v692
              $region80: #{_lambda_.7} parent=74 // loop_footer
                %s675 = sadd.s32 1, %s671
              $region81: #{_lambda_.7} parent=74 // loop_footer_branch
                %670 = sbr.rel target = $region77
              $region82: #{_lambda_.7} parent=74 // loop_exit
                _
            $region75: #{_lambda_.7} parent=70 // pred_fallthru
              _
            // Predicated region
            $region83: #{_lambda_.7} parent=70 // pred_check
              _
            $region84: #{_lambda_.7} parent=70 // pred_check_branch
              %695 = sbr.rel target = $region86
            $region85: #{_lambda_.7} parent=70 // pred_region
              _
            $region86: #{_lambda_.7} parent=70 // pred_fallthru
              _
          $region71: #{_lambda_.7} parent=66 // pred_fallthru
            _
          %696 = vnop
        $region67: #{_lambda_.7} parent=50 // pred_fallthru
          _
      $region51: #{_lambda_.7} parent=5 // pred_fallthru
        _
      %p697 = scmp.le.s32.totalorder 2, %s9
      // Predicated region
      $region87: #{_lambda_.7} parent=5 // pred_check
        %p698 = pneg %p697
      $region88: #{_lambda_.7} parent=5 // pred_check_branch
        %700 = sbr.rel (%p698) target = $region90
      $region89: #{_lambda_.7} parent=5 // pred_region
        %s701 = ssub.s32 %s9, 2
        // Predicated region
        $region91: #{_lambda_.7} parent=89 // pred_check
          %p702 = pneg %p141
        $region92: #{_lambda_.7} parent=89 // pred_check_branch
          %704 = sbr.rel (%p702) target = $region94
        $region93: #{_lambda_.7} parent=89 // pred_region
          %s705 = sand.u32 %s126, 1
          %s706 = sand.u32 %s126, 1
          %s707 = smul.addr %s706, 64
          %s708 = scalar_lea.vmem [#allocation4], %s707
        $region94: #{_lambda_.7} parent=89 // pred_fallthru
          _
      $region90: #{_lambda_.7} parent=5 // pred_fallthru
        _
    $region6: #{_lambda_.7} parent=1 // loop_footer
      %s13 = sadd.s32 1, %s9
    $region7: #{_lambda_.7} parent=1 // loop_footer_branch
      %8 = sbr.rel target = $region3
    $region8: #{_lambda_.7} parent=1 // loop_exit
      _

// kernel: _lambda_.6
$region0: #{_lambda_.6}
  #allocation0 [shape = 'u32[]', space=smem, size = 0x4, offset = 0x4, fixed_abs, tag = 'smem constant byte address 0x4 - core index']
  #allocation1 [shape = 'u32[72,128]{1,0:T(1,128)}', space=vmem, size = 0x9000, scoped, tag = 'internal scratch']
  %s0 = inlined_call_operand.vmem [shape: bf16[16,18,54], index: 0, kind: input, shape index: {}]
  %s1 = inlined_call_operand.vmem [shape: bf16[3,54,256], index: 1, kind: input, shape index: {}]
  %s2 = inlined_call_operand.vmem [shape: f32[1,256], index: 2, kind: input, shape index: {}]
  %s3 = inlined_call_operand.vmem [shape: bf16[256,128], index: 3, kind: input, shape index: {}]
  %s4 = inlined_call_operand.vmem [shape: f32[1,128], index: 4, kind: input, shape index: {}]
  %s5 = inlined_call_operand.vmem [shape: f32[16,128], index: 5, kind: output, shape index: {}]
  %s6 = sld [smem:[#allocation0]]
  $region53: #{_lambda_.6} parent=0
    _
  %s8 = ssub.s32 1, %s6
  %s9 = scalar_select 0, %s8, %s6
  loop: start=0, step=1, limit=4
  $region2: #{_lambda_.6} parent=0 // loop_pre_header
    _
  $region3: #{_lambda_.6} parent=0 // loop_header
    %s11 = sphi 0, %s15
    %p12 = scmp.ge.s32.totalorder %s11, 4
    %s21 = sphi 0, %s23
    %s24 = sphi 0, %s21
    %s25 = sphi 0, %s24
    %s41 = sphi 0, %s25
    %s45 = sphi 0, %s45
    %s47 = sphi 0, %s45
    %s48 = sphi 0, %s47
    %s62 = sphi 0, %s48
    %s66 = sphi 0, %s66
    %s68 = sphi 0, %s66
    %s69 = sphi 0, %s68
    %s83 = sphi 0, %s69
    %s87 = sphi 0, %s87
    %s89 = sphi 0, %s87
    %s90 = sphi 0, %s89
    %s104 = sphi 0, %s90
    %s108 = sphi 0, %s108
    %s110 = sphi 0, %s108
    %s111 = sphi 0, %s110
    %s125 = sphi 0, %s111
    %s131 = sphi 0, %s133
    %s134 = sphi 0, %s131
    %s135 = sphi 0, %s134
    %s151 = sphi 0, %s135
  $region4: #{_lambda_.6} parent=0 // loop_header_branch
    %14 = sbr.rel (%p12) target = $region8
  $region5: #{_lambda_.6} parent=0 // loop_body
    %s16 = ssub.s32 %s11, 1
    %s17 = ssub.s32 %s11, 2
    %s18 = sadd.s32 %s11, 1
    %s19 = ssub.s32 %s11, %s18
    %p20 = scmp.eq.s32.totalorder %s19, 0
    %s22 = sadd.s32 %s21, 1
    %s23 = scalar_select %p20, %s21, %s22
    %p26 = pneg %p20
    %p27 = scmp.eq.s32.totalorder %s11, 1
    %p28 = por %p26, %p27
    %p29 = scmp.ne.s32.totalorder %s21, %s24
    %p30 = scmp.eq.s32.totalorder %s11, 0
    %p31 = por %p29, %p30
    %p32 = scmp.ne.s32.totalorder %s21, %s24
    %p33 = scmp.eq.s32.totalorder %s16, 1
    %p34 = por %p32, %p33
    %p35 = scmp.ne.s32.totalorder %s24, %s25
    %p36 = scmp.eq.s32.totalorder %s16, 0
    %p37 = por %p35, %p36
    %p38 = scmp.ne.s32.totalorder %s24, %s25
    %p39 = scmp.eq.s32.totalorder %s17, 1
    %p40 = por %p38, %p39
    %p42 = scmp.ne.s32.totalorder %s25, %s41
    %p43 = scmp.eq.s32.totalorder %s17, 0
    %p44 = por %p42, %p43
    %s46 = sadd.s32 %s45, 1
    %p49 = scmp.eq.s32.totalorder %s11, 1
    %p50 = scmp.ne.s32.totalorder %s45, %s47
    %p51 = scmp.eq.s32.totalorder %s11, 0
    %p52 = por %p50, %p51
    %p53 = scmp.ne.s32.totalorder %s45, %s47
    %p54 = scmp.eq.s32.totalorder %s16, 1
    %p55 = por %p53, %p54
    %p56 = scmp.ne.s32.totalorder %s47, %s48
    %p57 = scmp.eq.s32.totalorder %s16, 0
    %p58 = por %p56, %p57
    %p59 = scmp.ne.s32.totalorder %s47, %s48
    %p60 = scmp.eq.s32.totalorder %s17, 1
    %p61 = por %p59, %p60
    %p63 = scmp.ne.s32.totalorder %s48, %s62
    %p64 = scmp.eq.s32.totalorder %s17, 0
    %p65 = por %p63, %p64
    %s67 = sadd.s32 %s66, 1
    %p70 = scmp.eq.s32.totalorder %s11, 1
    %p71 = scmp.ne.s32.totalorder %s66, %s68
    %p72 = scmp.eq.s32.totalorder %s11, 0
    %p73 = por %p71, %p72
    %p74 = scmp.ne.s32.totalorder %s66, %s68
    %p75 = scmp.eq.s32.totalorder %s16, 1
    %p76 = por %p74, %p75
    %p77 = scmp.ne.s32.totalorder %s68, %s69
    %p78 = scmp.eq.s32.totalorder %s16, 0
    %p79 = por %p77, %p78
    %p80 = scmp.ne.s32.totalorder %s68, %s69
    %p81 = scmp.eq.s32.totalorder %s17, 1
    %p82 = por %p80, %p81
    %p84 = scmp.ne.s32.totalorder %s69, %s83
    %p85 = scmp.eq.s32.totalorder %s17, 0
    %p86 = por %p84, %p85
    %s88 = sadd.s32 %s87, 1
    %p91 = scmp.eq.s32.totalorder %s11, 1
    %p92 = scmp.ne.s32.totalorder %s87, %s89
    %p93 = scmp.eq.s32.totalorder %s11, 0
    %p94 = por %p92, %p93
    %p95 = scmp.ne.s32.totalorder %s87, %s89
    %p96 = scmp.eq.s32.totalorder %s16, 1
    %p97 = por %p95, %p96
    %p98 = scmp.ne.s32.totalorder %s89, %s90
    %p99 = scmp.eq.s32.totalorder %s16, 0
    %p100 = por %p98, %p99
    %p101 = scmp.ne.s32.totalorder %s89, %s90
    %p102 = scmp.eq.s32.totalorder %s17, 1
    %p103 = por %p101, %p102
    %p105 = scmp.ne.s32.totalorder %s90, %s104
    %p106 = scmp.eq.s32.totalorder %s17, 0
    %p107 = por %p105, %p106
    %s109 = sadd.s32 %s108, 1
    %p112 = scmp.eq.s32.totalorder %s11, 1
    %p113 = scmp.ne.s32.totalorder %s108, %s110
    %p114 = scmp.eq.s32.totalorder %s11, 0
    %p115 = por %p113, %p114
    %p116 = scmp.ne.s32.totalorder %s108, %s110
    %p117 = scmp.eq.s32.totalorder %s16, 1
    %p118 = por %p116, %p117
    %p119 = scmp.ne.s32.totalorder %s110, %s111
    %p120 = scmp.eq.s32.totalorder %s16, 0
    %p121 = por %p119, %p120
    %p122 = scmp.ne.s32.totalorder %s110, %s111
    %p123 = scmp.eq.s32.totalorder %s17, 1
    %p124 = por %p122, %p123
    %p126 = scmp.ne.s32.totalorder %s111, %s125
    %p127 = scmp.eq.s32.totalorder %s17, 0
    %p128 = por %p126, %p127
    %s129 = ssub.s32 %s11, %s18
    %p130 = scmp.eq.s32.totalorder %s129, 0
    %s132 = sadd.s32 %s131, 1
    %s133 = scalar_select %p130, %s131, %s132
    %p136 = pneg %p130
    %p137 = scmp.eq.s32.totalorder %s11, 1
    %p138 = por %p136, %p137
    %p139 = scmp.ne.s32.totalorder %s131, %s134
    %p140 = scmp.eq.s32.totalorder %s11, 0
    %p141 = por %p139, %p140
    %p142 = scmp.ne.s32.totalorder %s131, %s134
    %p143 = scmp.eq.s32.totalorder %s16, 1
    %p144 = por %p142, %p143
    %p145 = scmp.ne.s32.totalorder %s134, %s135
    %p146 = scmp.eq.s32.totalorder %s16, 0
    %p147 = por %p145, %p146
    %p148 = scmp.ne.s32.totalorder %s134, %s135
    %p149 = scmp.eq.s32.totalorder %s17, 1
    %p150 = por %p148, %p149
    %p152 = scmp.ne.s32.totalorder %s135, %s151
    %p153 = scmp.eq.s32.totalorder %s17, 0
    %p154 = por %p152, %p153
    %p155 = scmp.le.s32.totalorder 1, %s11
    %p156 = scmp.lt.s32.totalorder %s11, 3
    %p157 = pnand %p155, %p156
    %p158 = pneg %p157
    // Predicated region
    $region9: #{_lambda_.6} parent=5 // pred_check
      _
    $region10: #{_lambda_.6} parent=5 // pred_check_branch
      %160 = sbr.rel (%p157) target = $region12
    $region11: #{_lambda_.6} parent=5 // pred_region
      %s161 = ssub.s32 %s11, 1
      // Predicated region
      $region13: #{_lambda_.6} parent=11 // pred_check
        %p162 = pneg %p58
      $region14: #{_lambda_.6} parent=11 // pred_check_branch
        %164 = sbr.rel (%p162) target = $region16
      $region15: #{_lambda_.6} parent=11 // pred_region
        _
      $region16: #{_lambda_.6} parent=11 // pred_fallthru
        _
      // Predicated region
      $region17: #{_lambda_.6} parent=11 // pred_check
        %p165 = pneg %p79
      $region18: #{_lambda_.6} parent=11 // pred_check_branch
        %167 = sbr.rel (%p165) target = $region20
      $region19: #{_lambda_.6} parent=11 // pred_region
        _
      $region20: #{_lambda_.6} parent=11 // pred_fallthru
        _
      // Predicated region
      $region21: #{_lambda_.6} parent=11 // pred_check
        %p168 = pneg %p100
      $region22: #{_lambda_.6} parent=11 // pred_check_branch
        %170 = sbr.rel (%p168) target = $region24
      $region23: #{_lambda_.6} parent=11 // pred_region
        _
      $region24: #{_lambda_.6} parent=11 // pred_fallthru
        _
      // Predicated region
      $region25: #{_lambda_.6} parent=11 // pred_check
        %p171 = pneg %p121
      $region26: #{_lambda_.6} parent=11 // pred_check_branch
        %173 = sbr.rel (%p171) target = $region28
      $region27: #{_lambda_.6} parent=11 // pred_region
        _
      $region28: #{_lambda_.6} parent=11 // pred_fallthru
        _
    $region12: #{_lambda_.6} parent=5 // pred_fallthru
      _
    %p174 = scmp.lt.s32.totalorder %s11, 2
    // Predicated region
    $region29: #{_lambda_.6} parent=5 // pred_check
      %p175 = pneg %p174
    $region30: #{_lambda_.6} parent=5 // pred_check_branch
      %177 = sbr.rel (%p175) target = $region32
    $region31: #{_lambda_.6} parent=5 // pred_region
      // Predicated region
      $region33: #{_lambda_.6} parent=31 // pred_check
        %p178 = pneg %p31
      $region34: #{_lambda_.6} parent=31 // pred_check_branch
        %180 = sbr.rel (%p178) target = $region36
      $region35: #{_lambda_.6} parent=31 // pred_region
        %s181 = smul.u32 8, %s11
        %p182 = scmp.lt.s32.totalorder %s181, 15
        %s183 = scalar_select %p182, %s181, 15
        %s184 = smul.addr %s183, 3
        %s185 = smul.addr %s184, 4
        %s186 = scalar_lea.vmem %s0, %s185
        %s187 = smul.u32 8, %s11
      $region36: #{_lambda_.6} parent=31 // pred_fallthru
        _
    $region32: #{_lambda_.6} parent=5 // pred_fallthru
      _
    %p188 = scmp.le.s32.totalorder 1, %s11
    %p189 = scmp.lt.s32.totalorder %s11, 3
    %p190 = pnand %p188, %p189
    %p191 = pneg %p190
    // Predicated region
    $region37: #{_lambda_.6} parent=5 // pred_check
      _
    $region38: #{_lambda_.6} parent=5 // pred_check_branch
      %193 = sbr.rel (%p190) target = $region40
    $region39: #{_lambda_.6} parent=5 // pred_region
      %s194 = ssub.s32 %s11, 1
      %s195 = smul.u32 8, %s16
      %p196 = scmp.lt.s32.totalorder %s195, 15
      %s197 = scalar_select %p196, %s195, 15
      %s198 = smul.addr %s197, 3
      %s199 = smul.addr %s198, 4
      %s200 = scalar_lea.vmem %s0, %s199
      %p201 = pneg %p37
      %p202 = pneg %p34
      %p203 = pneg %p58
      %p204 = pneg %p55
      %p205 = pneg %p79
      %p206 = pneg %p76
      %p207 = pneg %p100
      %p208 = pneg %p97
      %p209 = pneg %p121
      %p210 = pneg %p118
      %p211 = pneg %p147
      %p212 = pneg %p144
      %p213 = scmp.lt.s32.totalorder %s16, 1
      %s214 = scalar_select %p213, %s16, 1
      %s215 = smul.addr %s214, 8
      %s216 = scalar_lea.vmem %s5, %s215
      %s217 = smul.u32 8, %s16
      %p218 = scmp.lt.s32.totalorder %s217, 15
      %s219 = scalar_select %p218, %s217, 15
      %s220 = smul.addr %s219, 3
      %s221 = smul.addr %s220, 4
      %s222 = scalar_lea.vmem %s0, %s221
      %s223 = smul.u32 8, %s16
      %p224 = scmp.lt.s32.totalorder %s16, 1
      %s225 = scalar_select %p224, %s16, 1
      %s226 = smul.addr %s225, 8
      %s227 = scalar_lea.vmem %s5, %s226
      %v229 = vld [vmem:[%s222] sm:$0xf]
      %v230 = vld [vmem:[%s222 + $0x4] sm:$0xf]
      %v231 = vld [vmem:[%s222 + $0xc] sm:$0xf]
      %v232 = vld [vmem:[%s222 + $0x10] sm:$0xf]
      %v233 = vld [vmem:[%s222 + $0x18] sm:$0xf]
      %v234 = vld [vmem:[%s222 + $0x1c] sm:$0xf]
      %v235 = vld [vmem:[%s222 + $0x24] sm:$0xf]
      %v236 = vld [vmem:[%s222 + $0x28] sm:$0xf]
      %v237 = vld [vmem:[%s222 + $0x30] sm:$0xf]
      %v238 = vld [vmem:[%s222 + $0x34] sm:$0xf]
      %v239 = vld [vmem:[%s222 + $0x3c] sm:$0xf]
      %v240 = vld [vmem:[%s222 + $0x40] sm:$0xf]
      %v241 = vld [vmem:[%s222 + $0x48] sm:$0xf]
      %v242 = vld [vmem:[%s222 + $0x4c] sm:$0xf]
      %v243 = vld [vmem:[%s222 + $0x54] sm:$0xf]
      %v244 = vld [vmem:[%s222 + $0x58] sm:$0xf]
      %v245 = vld [vmem:[%s1] sm:$0xff]
      %v246 = vld [vmem:[%s1 + $0x8] sm:$0xff]
      %v247 = vld [vmem:[%s1 + $0x10] sm:$0xff]
      %v248 = vld [vmem:[%s1 + $0x18] sm:$0xff]
      %v249 = vld [vmem:[%s1 + $0x20] sm:$0xff]
      %v250 = vld [vmem:[%s1 + $0x28] sm:$0xff]
      %v251 = vld [vmem:[%s1 + $0x30] sm:$0x77]
      %v252 = vld [vmem:[%s222 + $0x8] sm:$0x1]
      %v253 = vld [vmem:[%s222 + $0x14] sm:$0x1]
      %v254 = vld [vmem:[%s222 + $0x20] sm:$0x1]
      %v255 = vld [vmem:[%s222 + $0x2c] sm:$0x1]
      %v256 = vld [vmem:[%s222 + $0x38] sm:$0x1]
      %v257 = vld [vmem:[%s222 + $0x44] sm:$0x1]
      %v258 = vld [vmem:[%s222 + $0x50] sm:$0x1]
      %v259 = vld [vmem:[%s222 + $0x5c] sm:$0x1]
      %vm260 = vsmask.f32 3328
      %vm261 = vsmask.f32 7440
      %vm262 = vmor %vm260, %vm261
      %v264 = vshrl.u32 %v229, 16
      %v266 = vrot.slane %v264, 4
      %v267 = vshll.u32 %v229, 16
      %v269 = vrot.slane %v267, 5
      %v270 = vor.u32 %v266, %v269
      %v271 = vrot.slane %v270, 4
      %v273 = vshll.u32 %v230, 16
      %v275 = vrot.slane %v273, 5
      %v276 = vsel %vm262, %v271, %v275
      %v277 = vshrl.u32 %v230, 16
      %v279 = vrot.slane %v277, 4
      %v280 = vor.u32 %v279, %v275
      %v281 = vrot.slane %v280, 4
      %v283 = vshll.u32 %v252, 16
      %v285 = vrot.slane %v283, 5
      %v286 = vsel %vm262, %v281, %v285
      %v288 = vshrl.u32 %v231, 16
      %v290 = vrot.slane %v288, 4
      %v291 = vshll.u32 %v231, 16
      %v293 = vrot.slane %v291, 5
      %v294 = vor.u32 %v290, %v293
      %v295 = vrot.slane %v294, 4
      %v297 = vshll.u32 %v232, 16
      %v299 = vrot.slane %v297, 5
      %v300 = vsel %vm262, %v295, %v299
      %v301 = vshrl.u32 %v232, 16
      %v303 = vrot.slane %v301, 4
      %v304 = vor.u32 %v303, %v299
      %v305 = vrot.slane %v304, 4
      %v307 = vshll.u32 %v253, 16
      %v309 = vrot.slane %v307, 5
      %v310 = vsel %vm262, %v305, %v309
      %v312 = vshrl.u32 %v233, 16
      %v314 = vrot.slane %v312, 4
      %v315 = vshll.u32 %v233, 16
      %v317 = vrot.slane %v315, 5
      %v318 = vor.u32 %v314, %v317
      %v319 = vrot.slane %v318, 4
      %v321 = vshll.u32 %v234, 16
      %v323 = vrot.slane %v321, 5
      %v324 = vsel %vm262, %v319, %v323
      %v325 = vshrl.u32 %v234, 16
      %v327 = vrot.slane %v325, 4
      %v328 = vor.u32 %v327, %v323
      %v329 = vrot.slane %v328, 4
      %v331 = vshll.u32 %v254, 16
      %v333 = vrot.slane %v331, 5
      %v334 = vsel %vm262, %v329, %v333
      %v336 = vshrl.u32 %v235, 16
      %v338 = vrot.slane %v336, 4
      %v339 = vshll.u32 %v235, 16
      %v341 = vrot.slane %v339, 5
      %v342 = vor.u32 %v338, %v341
      %v343 = vrot.slane %v342, 4
      %v345 = vshll.u32 %v236, 16
      %v347 = vrot.slane %v345, 5
      %v348 = vsel %vm262, %v343, %v347
      %v349 = vshrl.u32 %v236, 16
      %v351 = vrot.slane %v349, 4
      %v352 = vor.u32 %v351, %v347
      %v353 = vrot.slane %v352, 4
      %v355 = vshll.u32 %v255, 16
      %v357 = vrot.slane %v355, 5
      %v358 = vsel %vm262, %v353, %v357
      %v360 = vshrl.u32 %v237, 16
      %v362 = vrot.slane %v360, 4
      %v363 = vshll.u32 %v237, 16
      %v365 = vrot.slane %v363, 5
      %v366 = vor.u32 %v362, %v365
      %v367 = vrot.slane %v366, 4
      %v369 = vshll.u32 %v238, 16
      %v371 = vrot.slane %v369, 5
      %v372 = vsel %vm262, %v367, %v371
      %v373 = vshrl.u32 %v238, 16
      %v375 = vrot.slane %v373, 4
      %v376 = vor.u32 %v375, %v371
      %v377 = vrot.slane %v376, 4
      %v379 = vshll.u32 %v256, 16
      %v381 = vrot.slane %v379, 5
      %v382 = vsel %vm262, %v377, %v381
      %v384 = vshrl.u32 %v239, 16
      %v386 = vrot.slane %v384, 4
      %v387 = vshll.u32 %v239, 16
      %v389 = vrot.slane %v387, 5
      %v390 = vor.u32 %v386, %v389
      %v391 = vrot.slane %v390, 4
      %v393 = vshll.u32 %v240, 16
      %v395 = vrot.slane %v393, 5
      %v396 = vsel %vm262, %v391, %v395
      %v397 = vshrl.u32 %v240, 16
      %v399 = vrot.slane %v397, 4
      %v400 = vor.u32 %v399, %v395
      %v401 = vrot.slane %v400, 4
      %v403 = vshll.u32 %v257, 16
      %v405 = vrot.slane %v403, 5
      %v406 = vsel %vm262, %v401, %v405
      %v408 = vshrl.u32 %v241, 16
      %v410 = vrot.slane %v408, 4
      %v411 = vshll.u32 %v241, 16
      %v413 = vrot.slane %v411, 5
      %v414 = vor.u32 %v410, %v413
      %v415 = vrot.slane %v414, 4
      %v417 = vshll.u32 %v242, 16
      %v419 = vrot.slane %v417, 5
      %v420 = vsel %vm262, %v415, %v419
      %v421 = vshrl.u32 %v242, 16
      %v423 = vrot.slane %v421, 4
      %v424 = vor.u32 %v423, %v419
      %v425 = vrot.slane %v424, 4
      %v427 = vshll.u32 %v258, 16
      %v429 = vrot.slane %v427, 5
      %v430 = vsel %vm262, %v425, %v429
      %v432 = vshrl.u32 %v243, 16
      %v434 = vrot.slane %v432, 4
      %v435 = vshll.u32 %v243, 16
      %v437 = vrot.slane %v435, 5
      %v438 = vor.u32 %v434, %v437
      %v439 = vrot.slane %v438, 4
      %v441 = vshll.u32 %v244, 16
      %v443 = vrot.slane %v441, 5
      %v444 = vsel %vm262, %v439, %v443
      %v445 = vshrl.u32 %v244, 16
      %v447 = vrot.slane %v445, 4
      %v448 = vor.u32 %v447, %v443
      %v449 = vrot.slane %v448, 4
      %v451 = vshll.u32 %v259, 16
      %v453 = vrot.slane %v451, 5
      %v454 = vsel %vm262, %v449, %v453
      %s455 = scalar_lea.vmem %s1, 56
      %v456 = vld [vmem:[%s455] sm:$0xff]
      %v457 = vld [vmem:[%s455 + $0x8] sm:$0xff]
      %v458 = vld [vmem:[%s455 + $0x10] sm:$0xff]
      %v459 = vld [vmem:[%s455 + $0x18] sm:$0xff]
      %v460 = vld [vmem:[%s455 + $0x20] sm:$0xff]
      %v461 = vld [vmem:[%s455 + $0x28] sm:$0xff]
      %v462 = vld [vmem:[%s455 + $0x30] sm:$0x77]
      %v463 = vunpack.c.l.b16 %v276
      %v464 = vunpack.c.l.b16 %v286
      %v465 = vunpack.c.l.b16 %v300
      %v466 = vunpack.c.l.b16 %v310
      %v467 = vunpack.c.l.b16 %v324
      %v468 = vunpack.c.l.b16 %v334
      %v469 = vunpack.c.l.b16 %v348
      %v470 = vunpack.c.l.b16 %v358
      %v471 = vunpack.c.l.b16 %v372
      %v472 = vunpack.c.l.b16 %v382
      %v473 = vunpack.c.l.b16 %v396
      %v474 = vunpack.c.l.b16 %v406
      %v475 = vunpack.c.l.b16 %v420
      %v476 = vunpack.c.l.b16 %v430
      %v477 = vunpack.c.l.b16 %v444
      %v478 = vunpack.c.l.b16 %v454
      %v479 = vpack.c.b16 %v464, %v463
      %v480 = vpack.c.b16 %v466, %v465
      %v481 = vpack.c.b16 %v468, %v467
      %v482 = vpack.c.b16 %v470, %v469
      %v483 = vpack.c.b16 %v472, %v471
      %v484 = vpack.c.b16 %v474, %v473
      %v485 = vpack.c.b16 %v476, %v475
      %v486 = vpack.c.b16 %v478, %v477
      %v494 = vunpack.c.l.b16 %v456
      %v495 = vunpack.c.h.b16 %v456
      %v496 = vunpack.c.l.b16 %v457
      %v497 = vunpack.c.h.b16 %v457
      %v498 = vunpack.c.l.b16 %v458
      %v499 = vunpack.c.h.b16 %v458
      %v500 = vunpack.c.l.b16 %v459
      %v501 = vunpack.c.h.b16 %v459
      %v502 = vunpack.c.l.b16 %v460
      %v503 = vunpack.c.h.b16 %v460
      %v504 = vunpack.c.l.b16 %v461
      %v505 = vunpack.c.h.b16 %v461
      %v506 = vunpack.c.l.b16 %v462
      %v507 = vunpack.c.h.b16 %v462
      %v508 = vpack.c.b16 %v496, %v494
      %v509 = vpack.c.b16 %v497, %v495
      %v510 = vpack.c.b16 %v500, %v498
      %v511 = vpack.c.b16 %v501, %v499
      %v512 = vpack.c.b16 %v504, %v502
      %v513 = vpack.c.b16 %v505, %v503
      %v514 = vpack.c.b16 %v506, %v506
      %v515 = vpack.c.b16 %v507, %v507
      %vm522 = vcmask 441344
      %v524 = vsel %vm522, %v479, 0
      %v527 = vsel %vm522, %v480, 0
      %v530 = vsel %vm522, %v481, 0
      %v533 = vsel %vm522, %v482, 0
      %v536 = vsel %vm522, %v483, 0
      %v539 = vsel %vm522, %v484, 0
      %v542 = vsel %vm522, %v485, 0
      %v545 = vsel %vm522, %v486, 0
      %vm547 = vcmask 1042432
      %v549 = vsel %vm547, %v514, 0
      %v552 = vsel %vm547, %v515, 0
      %554 = vmatpush.bf16.msra.mxu0 0
      %555 = vmatpush.bf16.msra.mxu0 0
      %556 = vmatpush.bf16.msra.mxu0 0
      %557 = vmatpush.bf16.msra.mxu0 0
      %558 = vmatpush.bf16.msra.mxu0 %v549
      %559 = vmatpush.bf16.msra.mxu0 %v512
      %560 = vmatpush.bf16.msra.mxu0 %v510
      %561 = vmatpush.bf16.msra.mxu0 %v508
      %562 = vmatmul.bf16.gmra.mxu0 %v524
      %v563 = vpop.f32.mrf.mxu0
      %v564 = vadd.f32 0.0, %v563
      %v565 = vpop.f32.mrf.mxu0
      %v566 = vadd.f32 0.0, %v565
      %567 = vmatmul.bf16.gmra.mxu0 %v527
      %v568 = vpop.f32.mrf.mxu0
      %v569 = vadd.f32 0.0, %v568
      %v570 = vpop.f32.mrf.mxu0
      %v571 = vadd.f32 0.0, %v570
      %572 = vmatmul.bf16.gmra.mxu0 %v530
      %v573 = vpop.f32.mrf.mxu0
      %v574 = vadd.f32 0.0, %v573
      %v575 = vpop.f32.mrf.mxu0
      %v576 = vadd.f32 0.0, %v575
      %577 = vmatmul.bf16.gmra.mxu0 %v533
      %v578 = vpop.f32.mrf.mxu0
      %v579 = vadd.f32 0.0, %v578
      %v580 = vpop.f32.mrf.mxu0
      %v581 = vadd.f32 0.0, %v580
      %582 = vmatmul.bf16.gmra.mxu0 %v536
      %v583 = vpop.f32.mrf.mxu0
      %v584 = vadd.f32 0.0, %v583
      %v585 = vpop.f32.mrf.mxu0
      %v586 = vadd.f32 0.0, %v585
      %587 = vmatmul.bf16.gmra.mxu0 %v539
      %v588 = vpop.f32.mrf.mxu0
      %v589 = vadd.f32 0.0, %v588
      %v590 = vpop.f32.mrf.mxu0
      %v591 = vadd.f32 0.0, %v590
      %592 = vmatmul.bf16.gmra.mxu0 %v542
      %v593 = vpop.f32.mrf.mxu0
      %v594 = vadd.f32 0.0, %v593
      %v595 = vpop.f32.mrf.mxu0
      %v596 = vadd.f32 0.0, %v595
      %597 = vmatmul.bf16.gmra.mxu0 %v545
      %v598 = vpop.f32.mrf.mxu0
      %v599 = vadd.f32 0.0, %v598
      %v600 = vpop.f32.mrf.mxu0
      %v601 = vadd.f32 0.0, %v600
      %602 = vdwg.mxu0
      %603 = vmatpush.bf16.msra.mxu0 0
      %604 = vmatpush.bf16.msra.mxu0 0
      %605 = vmatpush.bf16.msra.mxu0 0
      %606 = vmatpush.bf16.msra.mxu0 0
      %607 = vmatpush.bf16.msra.mxu0 %v552
      %608 = vmatpush.bf16.msra.mxu0 %v513
      %609 = vmatpush.bf16.msra.mxu0 %v511
      %610 = vmatpush.bf16.msra.mxu0 %v509
      %611 = vmatmul.bf16.gmra.mxu0 %v524
      %v612 = vpop.f32.mrf.mxu0
      %v613 = vadd.f32 0.0, %v612
      %v614 = vpop.f32.mrf.mxu0
      %v615 = vadd.f32 0.0, %v614
      %616 = vmatmul.bf16.gmra.mxu0 %v527
      %v617 = vpop.f32.mrf.mxu0
      %v618 = vadd.f32 0.0, %v617
      %v619 = vpop.f32.mrf.mxu0
      %v620 = vadd.f32 0.0, %v619
      %621 = vmatmul.bf16.gmra.mxu0 %v530
      %v622 = vpop.f32.mrf.mxu0
      %v623 = vadd.f32 0.0, %v622
      %v624 = vpop.f32.mrf.mxu0
      %v625 = vadd.f32 0.0, %v624
      %626 = vmatmul.bf16.gmra.mxu0 %v533
      %v627 = vpop.f32.mrf.mxu0
      %v628 = vadd.f32 0.0, %v627
      %v629 = vpop.f32.mrf.mxu0
      %v630 = vadd.f32 0.0, %v629
      %631 = vmatmul.bf16.gmra.mxu0 %v536
      %v632 = vpop.f32.mrf.mxu0
      %v633 = vadd.f32 0.0, %v632
      %v634 = vpop.f32.mrf.mxu0
      %v635 = vadd.f32 0.0, %v634
      %636 = vmatmul.bf16.gmra.mxu0 %v539
      %v637 = vpop.f32.mrf.mxu0
      %v638 = vadd.f32 0.0, %v637
      %v639 = vpop.f32.mrf.mxu0
      %v640 = vadd.f32 0.0, %v639
      %641 = vmatmul.bf16.gmra.mxu0 %v542
      %v642 = vpop.f32.mrf.mxu0
      %v643 = vadd.f32 0.0, %v642
      %v644 = vpop.f32.mrf.mxu0
      %v645 = vadd.f32 0.0, %v644
      %646 = vmatmul.bf16.gmra.mxu0 %v545
      %v647 = vpop.f32.mrf.mxu0
      %v648 = vadd.f32 0.0, %v647
      %v649 = vpop.f32.mrf.mxu0
      %v650 = vadd.f32 0.0, %v649
      %651 = vdwg.mxu0
      %v668 = vunpack.c.l.b16 %v229
      %v669 = vunpack.c.l.b16 %v230
      %v670 = vunpack.c.l.b16 %v231
      %v671 = vunpack.c.l.b16 %v232
      %v672 = vunpack.c.l.b16 %v233
      %v673 = vunpack.c.l.b16 %v234
      %v674 = vunpack.c.l.b16 %v235
      %v675 = vunpack.c.l.b16 %v236
      %v676 = vunpack.c.l.b16 %v237
      %v677 = vunpack.c.l.b16 %v238
      %v678 = vunpack.c.l.b16 %v239
      %v679 = vunpack.c.l.b16 %v240
      %v680 = vunpack.c.l.b16 %v241
      %v681 = vunpack.c.l.b16 %v242
      %v682 = vunpack.c.l.b16 %v243
      %v683 = vunpack.c.l.b16 %v244
      %v684 = vpack.c.b16 %v669, %v668
      %v685 = vpack.c.b16 %v671, %v670
      %v686 = vpack.c.b16 %v673, %v672
      %v687 = vpack.c.b16 %v675, %v674
      %v688 = vpack.c.b16 %v677, %v676
      %v689 = vpack.c.b16 %v679, %v678
      %v690 = vpack.c.b16 %v681, %v680
      %v691 = vpack.c.b16 %v683, %v682
      %v699 = vunpack.c.l.b16 %v245
      %v700 = vunpack.c.h.b16 %v245
      %v701 = vunpack.c.l.b16 %v246
      %v702 = vunpack.c.h.b16 %v246
      %v703 = vunpack.c.l.b16 %v247
      %v704 = vunpack.c.h.b16 %v247
      %v705 = vunpack.c.l.b16 %v248
      %v706 = vunpack.c.h.b16 %v248
      %v707 = vunpack.c.l.b16 %v249
      %v708 = vunpack.c.h.b16 %v249
      %v709 = vunpack.c.l.b16 %v250
      %v710 = vunpack.c.h.b16 %v250
      %v711 = vunpack.c.l.b16 %v251
      %v712 = vunpack.c.h.b16 %v251
      %v713 = vpack.c.b16 %v701, %v699
      %v714 = vpack.c.b16 %v702, %v700
      %v715 = vpack.c.b16 %v705, %v703
      %v716 = vpack.c.b16 %v706, %v704
      %v717 = vpack.c.b16 %v709, %v707
      %v718 = vpack.c.b16 %v710, %v708
      %v719 = vpack.c.b16 %v711, %v711
      %v720 = vpack.c.b16 %v712, %v712
      %v728 = vsel %vm522, %v684, 0
      %v731 = vsel %vm522, %v685, 0
      %v734 = vsel %vm522, %v686, 0
      %v737 = vsel %vm522, %v687, 0
      %v740 = vsel %vm522, %v688, 0
      %v743 = vsel %vm522, %v689, 0
      %v746 = vsel %vm522, %v690, 0
      %v749 = vsel %vm522, %v691, 0
      %v752 = vsel %vm547, %v719, 0
      %v755 = vsel %vm547, %v720, 0
      %757 = vmatpush.bf16.msra.mxu0 0
      %758 = vmatpush.bf16.msra.mxu0 0
      %759 = vmatpush.bf16.msra.mxu0 0
      %760 = vmatpush.bf16.msra.mxu0 0
      %761 = vmatpush.bf16.msra.mxu0 %v752
      %762 = vmatpush.bf16.msra.mxu0 %v717
      %763 = vmatpush.bf16.msra.mxu0 %v715
      %764 = vmatpush.bf16.msra.mxu0 %v713
      %765 = vmatmul.bf16.gmra.mxu0 %v728
      %v766 = vpop.f32.mrf.mxu0
      %v767 = vadd.f32 %v564, %v766
      %v768 = vpop.f32.mrf.mxu0
      %v769 = vadd.f32 %v566, %v768
      %770 = vmatmul.bf16.gmra.mxu0 %v731
      %v771 = vpop.f32.mrf.mxu0
      %v772 = vadd.f32 %v569, %v771
      %v773 = vpop.f32.mrf.mxu0
      %v774 = vadd.f32 %v571, %v773
      %775 = vmatmul.bf16.gmra.mxu0 %v734
      %v776 = vpop.f32.mrf.mxu0
      %v777 = vadd.f32 %v574, %v776
      %v778 = vpop.f32.mrf.mxu0
      %v779 = vadd.f32 %v576, %v778
      %780 = vmatmul.bf16.gmra.mxu0 %v737
      %v781 = vpop.f32.mrf.mxu0
      %v782 = vadd.f32 %v579, %v781
      %v783 = vpop.f32.mrf.mxu0
      %v784 = vadd.f32 %v581, %v783
      %785 = vmatmul.bf16.gmra.mxu0 %v740
      %v786 = vpop.f32.mrf.mxu0
      %v787 = vadd.f32 %v584, %v786
      %v788 = vpop.f32.mrf.mxu0
      %v789 = vadd.f32 %v586, %v788
      %790 = vmatmul.bf16.gmra.mxu0 %v743
      %v791 = vpop.f32.mrf.mxu0
      %v792 = vadd.f32 %v589, %v791
      %v793 = vpop.f32.mrf.mxu0
      %v794 = vadd.f32 %v591, %v793
      %795 = vmatmul.bf16.gmra.mxu0 %v746
      %v796 = vpop.f32.mrf.mxu0
      %v797 = vadd.f32 %v594, %v796
      %v798 = vpop.f32.mrf.mxu0
      %v799 = vadd.f32 %v596, %v798
      %800 = vmatmul.bf16.gmra.mxu0 %v749
      %v801 = vpop.f32.mrf.mxu0
      %v802 = vadd.f32 %v599, %v801
      %v803 = vpop.f32.mrf.mxu0
      %v804 = vadd.f32 %v601, %v803
      %805 = vdwg.mxu0
      %806 = vmatpush.bf16.msra.mxu0 0
      %807 = vmatpush.bf16.msra.mxu0 0
      %808 = vmatpush.bf16.msra.mxu0 0
      %809 = vmatpush.bf16.msra.mxu0 0
      %810 = vmatpush.bf16.msra.mxu0 %v755
      %811 = vmatpush.bf16.msra.mxu0 %v718
      %812 = vmatpush.bf16.msra.mxu0 %v716
      %813 = vmatpush.bf16.msra.mxu0 %v714
      %814 = vmatmul.bf16.gmra.mxu0 %v728
      %v815 = vpop.f32.mrf.mxu0
      %v816 = vadd.f32 %v613, %v815
      %v817 = vpop.f32.mrf.mxu0
      %v818 = vadd.f32 %v615, %v817
      %819 = vmatmul.bf16.gmra.mxu0 %v731
      %v820 = vpop.f32.mrf.mxu0
      %v821 = vadd.f32 %v618, %v820
      %v822 = vpop.f32.mrf.mxu0
      %v823 = vadd.f32 %v620, %v822
      %824 = vmatmul.bf16.gmra.mxu0 %v734
      %v825 = vpop.f32.mrf.mxu0
      %v826 = vadd.f32 %v623, %v825
      %v827 = vpop.f32.mrf.mxu0
      %v828 = vadd.f32 %v625, %v827
      %829 = vmatmul.bf16.gmra.mxu0 %v737
      %v830 = vpop.f32.mrf.mxu0
      %v831 = vadd.f32 %v628, %v830
      %v832 = vpop.f32.mrf.mxu0
      %v833 = vadd.f32 %v630, %v832
      %834 = vmatmul.bf16.gmra.mxu0 %v740
      %v835 = vpop.f32.mrf.mxu0
      %v836 = vadd.f32 %v633, %v835
      %v837 = vpop.f32.mrf.mxu0
      %v838 = vadd.f32 %v635, %v837
      %839 = vmatmul.bf16.gmra.mxu0 %v743
      %v840 = vpop.f32.mrf.mxu0
      %v841 = vadd.f32 %v638, %v840
      %v842 = vpop.f32.mrf.mxu0
      %v843 = vadd.f32 %v640, %v842
      %844 = vmatmul.bf16.gmra.mxu0 %v746
      %v845 = vpop.f32.mrf.mxu0
      %v846 = vadd.f32 %v643, %v845
      %v847 = vpop.f32.mrf.mxu0
      %v848 = vadd.f32 %v645, %v847
      %849 = vmatmul.bf16.gmra.mxu0 %v749
      %v850 = vpop.f32.mrf.mxu0
      %v851 = vadd.f32 %v648, %v850
      %v852 = vpop.f32.mrf.mxu0
      %v853 = vadd.f32 %v650, %v852
      %854 = vdwg.mxu0
      %v855 = vld [vmem:[%s222] sm:$0xe]
      %v856 = vld [vmem:[%s222 + $0xc] sm:$0xe]
      %v857 = vld [vmem:[%s222 + $0x18] sm:$0xe]
      %v858 = vld [vmem:[%s222 + $0x24] sm:$0xe]
      %v859 = vld [vmem:[%s222 + $0x30] sm:$0xe]
      %v860 = vld [vmem:[%s222 + $0x3c] sm:$0xe]
      %v861 = vld [vmem:[%s222 + $0x48] sm:$0xe]
      %v862 = vld [vmem:[%s222 + $0x54] sm:$0xe]
      %vm879 = vcmask 1042432
      %vm880 = vcmask 1046532
      %vm881 = vmor %vm879, %vm880
      %v882 = vrot.slane %v855, 5
      %v883 = vrot.slane %v882, 4
      %v884 = vrot.slane %v230, 5
      %v885 = vsel %vm881, %v883, %v884
      %v886 = vrot.slane %v884, 4
      %v887 = vrot.slane %v252, 5
      %v888 = vsel %vm881, %v886, %v887
      %v889 = vrot.slane %v856, 5
      %v890 = vrot.slane %v889, 4
      %v891 = vrot.slane %v232, 5
      %v892 = vsel %vm881, %v890, %v891
      %v893 = vrot.slane %v891, 4
      %v894 = vrot.slane %v253, 5
      %v895 = vsel %vm881, %v893, %v894
      %v896 = vrot.slane %v857, 5
      %v897 = vrot.slane %v896, 4
      %v898 = vrot.slane %v234, 5
      %v899 = vsel %vm881, %v897, %v898
      %v900 = vrot.slane %v898, 4
      %v901 = vrot.slane %v254, 5
      %v902 = vsel %vm881, %v900, %v901
      %v903 = vrot.slane %v858, 5
      %v904 = vrot.slane %v903, 4
      %v905 = vrot.slane %v236, 5
      %v906 = vsel %vm881, %v904, %v905
      %v907 = vrot.slane %v905, 4
      %v908 = vrot.slane %v255, 5
      %v909 = vsel %vm881, %v907, %v908
      %v910 = vrot.slane %v859, 5
      %v911 = vrot.slane %v910, 4
      %v912 = vrot.slane %v238, 5
      %v913 = vsel %vm881, %v911, %v912
      %v914 = vrot.slane %v912, 4
      %v915 = vrot.slane %v256, 5
      %v916 = vsel %vm881, %v914, %v915
      %v917 = vrot.slane %v860, 5
      %v918 = vrot.slane %v917, 4
      %v919 = vrot.slane %v240, 5
      %v920 = vsel %vm881, %v918, %v919
      %v921 = vrot.slane %v919, 4
      %v922 = vrot.slane %v257, 5
      %v923 = vsel %vm881, %v921, %v922
      %v924 = vrot.slane %v861, 5
      %v925 = vrot.slane %v924, 4
      %v926 = vrot.slane %v242, 5
      %v927 = vsel %vm881, %v925, %v926
      %v928 = vrot.slane %v926, 4
      %v929 = vrot.slane %v258, 5
      %v930 = vsel %vm881, %v928, %v929
      %v931 = vrot.slane %v862, 5
      %v932 = vrot.slane %v931, 4
      %v933 = vrot.slane %v244, 5
      %v934 = vsel %vm881, %v932, %v933
      %v935 = vrot.slane %v933, 4
      %v936 = vrot.slane %v259, 5
      %v937 = vsel %vm881, %v935, %v936
      %s938 = scalar_lea.vmem %s1, 112
      %v939 = vld [vmem:[%s938] sm:$0xff]
      %v940 = vld [vmem:[%s938 + $0x8] sm:$0xff]
      %v941 = vld [vmem:[%s938 + $0x10] sm:$0xff]
      %v942 = vld [vmem:[%s938 + $0x18] sm:$0xff]
      %v943 = vld [vmem:[%s938 + $0x20] sm:$0xff]
      %v944 = vld [vmem:[%s938 + $0x28] sm:$0xff]
      %v945 = vld [vmem:[%s938 + $0x30] sm:$0x77]
      %v946 = vunpack.c.l.b16 %v885
      %v947 = vunpack.c.l.b16 %v888
      %v948 = vunpack.c.l.b16 %v892
      %v949 = vunpack.c.l.b16 %v895
      %v950 = vunpack.c.l.b16 %v899
      %v951 = vunpack.c.l.b16 %v902
      %v952 = vunpack.c.l.b16 %v906
      %v953 = vunpack.c.l.b16 %v909
      %v954 = vunpack.c.l.b16 %v913
      %v955 = vunpack.c.l.b16 %v916
      %v956 = vunpack.c.l.b16 %v920
      %v957 = vunpack.c.l.b16 %v923
      %v958 = vunpack.c.l.b16 %v927
      %v959 = vunpack.c.l.b16 %v930
      %v960 = vunpack.c.l.b16 %v934
      %v961 = vunpack.c.l.b16 %v937
      %v962 = vpack.c.b16 %v947, %v946
      %v963 = vpack.c.b16 %v949, %v948
      %v964 = vpack.c.b16 %v951, %v950
      %v965 = vpack.c.b16 %v953, %v952
      %v966 = vpack.c.b16 %v955, %v954
      %v967 = vpack.c.b16 %v957, %v956
      %v968 = vpack.c.b16 %v959, %v958
      %v969 = vpack.c.b16 %v961, %v960
      %v977 = vunpack.c.l.b16 %v939
      %v978 = vunpack.c.h.b16 %v939
      %v979 = vunpack.c.l.b16 %v940
      %v980 = vunpack.c.h.b16 %v940
      %v981 = vunpack.c.l.b16 %v941
      %v982 = vunpack.c.h.b16 %v941
      %v983 = vunpack.c.l.b16 %v942
      %v984 = vunpack.c.h.b16 %v942
      %v985 = vunpack.c.l.b16 %v943
      %v986 = vunpack.c.h.b16 %v943
      %v987 = vunpack.c.l.b16 %v944
      %v988 = vunpack.c.h.b16 %v944
      %v989 = vunpack.c.l.b16 %v945
      %v990 = vunpack.c.h.b16 %v945
      %v991 = vpack.c.b16 %v979, %v977
      %v992 = vpack.c.b16 %v980, %v978
      %v993 = vpack.c.b16 %v983, %v981
      %v994 = vpack.c.b16 %v984, %v982
      %v995 = vpack.c.b16 %v987, %v985
      %v996 = vpack.c.b16 %v988, %v986
      %v997 = vpack.c.b16 %v989, %v989
      %v998 = vpack.c.b16 %v990, %v990
      %v1006 = vsel %vm522, %v962, 0
      %v1009 = vsel %vm522, %v963, 0
      %v1012 = vsel %vm522, %v964, 0
      %v1015 = vsel %vm522, %v965, 0
      %v1018 = vsel %vm522, %v966, 0
      %v1021 = vsel %vm522, %v967, 0
      %v1024 = vsel %vm522, %v968, 0
      %v1027 = vsel %vm522, %v969, 0
      %v1030 = vsel %vm547, %v997, 0
      %v1033 = vsel %vm547, %v998, 0
      %1035 = vmatpush.bf16.msra.mxu0 0
      %1036 = vmatpush.bf16.msra.mxu0 0
      %1037 = vmatpush.bf16.msra.mxu0 0
      %1038 = vmatpush.bf16.msra.mxu0 0
      %1039 = vmatpush.bf16.msra.mxu0 %v1030
      %1040 = vmatpush.bf16.msra.mxu0 %v995
      %1041 = vmatpush.bf16.msra.mxu0 %v993
      %1042 = vmatpush.bf16.msra.mxu0 %v991
      %1043 = vmatmul.bf16.gmra.mxu0 %v1006
      %v1044 = vpop.f32.mrf.mxu0
      %v1045 = vadd.f32 0.0, %v1044
      %v1046 = vpop.f32.mrf.mxu0
      %v1047 = vadd.f32 0.0, %v1046
      %1048 = vmatmul.bf16.gmra.mxu0 %v1009
      %v1049 = vpop.f32.mrf.mxu0
      %v1050 = vadd.f32 0.0, %v1049
      %v1051 = vpop.f32.mrf.mxu0
      %v1052 = vadd.f32 0.0, %v1051
      %1053 = vmatmul.bf16.gmra.mxu0 %v1012
      %v1054 = vpop.f32.mrf.mxu0
      %v1055 = vadd.f32 0.0, %v1054
      %v1056 = vpop.f32.mrf.mxu0
      %v1057 = vadd.f32 0.0, %v1056
      %1058 = vmatmul.bf16.gmra.mxu0 %v1015
      %v1059 = vpop.f32.mrf.mxu0
      %v1060 = vadd.f32 0.0, %v1059
      %v1061 = vpop.f32.mrf.mxu0
      %v1062 = vadd.f32 0.0, %v1061
      %1063 = vmatmul.bf16.gmra.mxu0 %v1018
      %v1064 = vpop.f32.mrf.mxu0
      %v1065 = vadd.f32 0.0, %v1064
      %v1066 = vpop.f32.mrf.mxu0
      %v1067 = vadd.f32 0.0, %v1066
      %1068 = vmatmul.bf16.gmra.mxu0 %v1021
      %v1069 = vpop.f32.mrf.mxu0
      %v1070 = vadd.f32 0.0, %v1069
      %v1071 = vpop.f32.mrf.mxu0
      %v1072 = vadd.f32 0.0, %v1071
      %1073 = vmatmul.bf16.gmra.mxu0 %v1024
      %v1074 = vpop.f32.mrf.mxu0
      %v1075 = vadd.f32 0.0, %v1074
      %v1076 = vpop.f32.mrf.mxu0
      %v1077 = vadd.f32 0.0, %v1076
      %1078 = vmatmul.bf16.gmra.mxu0 %v1027
      %v1079 = vpop.f32.mrf.mxu0
      %v1080 = vadd.f32 0.0, %v1079
      %v1081 = vpop.f32.mrf.mxu0
      %v1082 = vadd.f32 0.0, %v1081
      %1083 = vdwg.mxu0
      %1084 = vmatpush.bf16.msra.mxu0 0
      %1085 = vmatpush.bf16.msra.mxu0 0
      %1086 = vmatpush.bf16.msra.mxu0 0
      %1087 = vmatpush.bf16.msra.mxu0 0
      %1088 = vmatpush.bf16.msra.mxu0 %v1033
      %1089 = vmatpush.bf16.msra.mxu0 %v996
      %1090 = vmatpush.bf16.msra.mxu0 %v994
      %1091 = vmatpush.bf16.msra.mxu0 %v992
      %1092 = vmatmul.bf16.gmra.mxu0 %v1006
      %v1093 = vpop.f32.mrf.mxu0
      %v1094 = vadd.f32 0.0, %v1093
      %v1095 = vpop.f32.mrf.mxu0
      %v1096 = vadd.f32 0.0, %v1095
      %1097 = vmatmul.bf16.gmra.mxu0 %v1009
      %v1098 = vpop.f32.mrf.mxu0
      %v1099 = vadd.f32 0.0, %v1098
      %v1100 = vpop.f32.mrf.mxu0
      %v1101 = vadd.f32 0.0, %v1100
      %1102 = vmatmul.bf16.gmra.mxu0 %v1012
      %v1103 = vpop.f32.mrf.mxu0
      %v1104 = vadd.f32 0.0, %v1103
      %v1105 = vpop.f32.mrf.mxu0
      %v1106 = vadd.f32 0.0, %v1105
      %1107 = vmatmul.bf16.gmra.mxu0 %v1015
      %v1108 = vpop.f32.mrf.mxu0
      %v1109 = vadd.f32 0.0, %v1108
      %v1110 = vpop.f32.mrf.mxu0
      %v1111 = vadd.f32 0.0, %v1110
      %1112 = vmatmul.bf16.gmra.mxu0 %v1018
      %v1113 = vpop.f32.mrf.mxu0
      %v1114 = vadd.f32 0.0, %v1113
      %v1115 = vpop.f32.mrf.mxu0
      %v1116 = vadd.f32 0.0, %v1115
      %1117 = vmatmul.bf16.gmra.mxu0 %v1021
      %v1118 = vpop.f32.mrf.mxu0
      %v1119 = vadd.f32 0.0, %v1118
      %v1120 = vpop.f32.mrf.mxu0
      %v1121 = vadd.f32 0.0, %v1120
      %1122 = vmatmul.bf16.gmra.mxu0 %v1024
      %v1123 = vpop.f32.mrf.mxu0
      %v1124 = vadd.f32 0.0, %v1123
      %v1125 = vpop.f32.mrf.mxu0
      %v1126 = vadd.f32 0.0, %v1125
      %1127 = vmatmul.bf16.gmra.mxu0 %v1027
      %v1128 = vpop.f32.mrf.mxu0
      %v1129 = vadd.f32 0.0, %v1128
      %v1130 = vpop.f32.mrf.mxu0
      %v1131 = vadd.f32 0.0, %v1130
      %1132 = vdwg.mxu0
      %v1133 = vadd.f32 %v767, %v1045
      %v1134 = vadd.f32 %v816, %v1094
      %v1135 = vadd.f32 %v769, %v1047
      %v1136 = vadd.f32 %v818, %v1096
      %v1137 = vadd.f32 %v772, %v1050
      %v1138 = vadd.f32 %v821, %v1099
      %v1139 = vadd.f32 %v774, %v1052
      %v1140 = vadd.f32 %v823, %v1101
      %v1141 = vadd.f32 %v777, %v1055
      %v1142 = vadd.f32 %v826, %v1104
      %v1143 = vadd.f32 %v779, %v1057
      %v1144 = vadd.f32 %v828, %v1106
      %v1145 = vadd.f32 %v782, %v1060
      %v1146 = vadd.f32 %v831, %v1109
      %v1147 = vadd.f32 %v784, %v1062
      %v1148 = vadd.f32 %v833, %v1111
      %v1149 = vadd.f32 %v787, %v1065
      %v1150 = vadd.f32 %v836, %v1114
      %v1151 = vadd.f32 %v789, %v1067
      %v1152 = vadd.f32 %v838, %v1116
      %v1153 = vadd.f32 %v792, %v1070
      %v1154 = vadd.f32 %v841, %v1119
      %v1155 = vadd.f32 %v794, %v1072
      %v1156 = vadd.f32 %v843, %v1121
      %v1157 = vadd.f32 %v797, %v1075
      %v1158 = vadd.f32 %v846, %v1124
      %v1159 = vadd.f32 %v799, %v1077
      %v1160 = vadd.f32 %v848, %v1126
      %v1161 = vadd.f32 %v802, %v1080
      %v1162 = vadd.f32 %v851, %v1129
      %v1163 = vadd.f32 %v804, %v1082
      %v1164 = vadd.f32 %v853, %v1131
      %v1165 = vld [vmem:[%s2] sm:$0x3]
      %v1167 = vperm.slane %v1165, 0
      %v1168 = vperm.slane %v1165, 1
      %v1171 = vadd.f32 %v1133, %v1167
      %v1172 = vadd.f32 %v1134, %v1168
      %v1173 = vadd.f32 %v1135, %v1167
      %v1174 = vadd.f32 %v1136, %v1168
      %v1175 = vadd.f32 %v1137, %v1167
      %v1176 = vadd.f32 %v1138, %v1168
      %v1177 = vadd.f32 %v1139, %v1167
      %v1178 = vadd.f32 %v1140, %v1168
      %v1179 = vadd.f32 %v1141, %v1167
      %v1180 = vadd.f32 %v1142, %v1168
      %v1181 = vadd.f32 %v1143, %v1167
      %v1182 = vadd.f32 %v1144, %v1168
      %v1183 = vadd.f32 %v1145, %v1167
      %v1184 = vadd.f32 %v1146, %v1168
      %v1185 = vadd.f32 %v1147, %v1167
      %v1186 = vadd.f32 %v1148, %v1168
      %v1187 = vadd.f32 %v1149, %v1167
      %v1188 = vadd.f32 %v1150, %v1168
      %v1189 = vadd.f32 %v1151, %v1167
      %v1190 = vadd.f32 %v1152, %v1168
      %v1191 = vadd.f32 %v1153, %v1167
      %v1192 = vadd.f32 %v1154, %v1168
      %v1193 = vadd.f32 %v1155, %v1167
      %v1194 = vadd.f32 %v1156, %v1168
      %v1195 = vadd.f32 %v1157, %v1167
      %v1196 = vadd.f32 %v1158, %v1168
      %v1197 = vadd.f32 %v1159, %v1167
      %v1198 = vadd.f32 %v1160, %v1168
      %v1199 = vadd.f32 %v1161, %v1167
      %v1200 = vadd.f32 %v1162, %v1168
      %v1201 = vadd.f32 %v1163, %v1167
      %v1202 = vadd.f32 %v1164, %v1168
      %v1203 = vmax.f32 %v1171, 0.0
      %v1204 = vmax.f32 %v1172, 0.0
      %v1205 = vmax.f32 %v1173, 0.0
      %v1206 = vmax.f32 %v1174, 0.0
      %v1207 = vmax.f32 %v1175, 0.0
      %v1208 = vmax.f32 %v1176, 0.0
      %v1209 = vmax.f32 %v1177, 0.0
      %v1210 = vmax.f32 %v1178, 0.0
      %v1211 = vmax.f32 %v1179, 0.0
      %v1212 = vmax.f32 %v1180, 0.0
      %v1213 = vmax.f32 %v1181, 0.0
      %v1214 = vmax.f32 %v1182, 0.0
      %v1215 = vmax.f32 %v1183, 0.0
      %v1216 = vmax.f32 %v1184, 0.0
      %v1217 = vmax.f32 %v1185, 0.0
      %v1218 = vmax.f32 %v1186, 0.0
      %v1219 = vmax.f32 %v1187, 0.0
      %v1220 = vmax.f32 %v1188, 0.0
      %v1221 = vmax.f32 %v1189, 0.0
      %v1222 = vmax.f32 %v1190, 0.0
      %v1223 = vmax.f32 %v1191, 0.0
      %v1224 = vmax.f32 %v1192, 0.0
      %v1225 = vmax.f32 %v1193, 0.0
      %v1226 = vmax.f32 %v1194, 0.0
      %v1227 = vmax.f32 %v1195, 0.0
      %v1228 = vmax.f32 %v1196, 0.0
      %v1229 = vmax.f32 %v1197, 0.0
      %v1230 = vmax.f32 %v1198, 0.0
      %v1231 = vmax.f32 %v1199, 0.0
      %v1232 = vmax.f32 %v1200, 0.0
      %v1233 = vmax.f32 %v1201, 0.0
      %v1234 = vmax.f32 %v1202, 0.0
      %v1235 = vpack.c.bf16 %v1205, %v1203
      %v1236 = vpack.c.bf16 %v1206, %v1204
      %v1237 = vpack.c.bf16 %v1209, %v1207
      %v1238 = vpack.c.bf16 %v1210, %v1208
      %v1239 = vpack.c.bf16 %v1213, %v1211
      %v1240 = vpack.c.bf16 %v1214, %v1212
      %v1241 = vpack.c.bf16 %v1217, %v1215
      %v1242 = vpack.c.bf16 %v1218, %v1216
      %v1243 = vpack.c.bf16 %v1221, %v1219
      %v1244 = vpack.c.bf16 %v1222, %v1220
      %v1245 = vpack.c.bf16 %v1225, %v1223
      %v1246 = vpack.c.bf16 %v1226, %v1224
      %v1247 = vpack.c.bf16 %v1229, %v1227
      %v1248 = vpack.c.bf16 %v1230, %v1228
      %v1249 = vpack.c.bf16 %v1233, %v1231
      %v1250 = vpack.c.bf16 %v1234, %v1232
      %v1251 = vld [vmem:[%s3] sm:$0xf]
      %v1252 = vld [vmem:[%s3 + $0x4] sm:$0xf]
      %v1253 = vld [vmem:[%s3 + $0x8] sm:$0xf]
      %v1254 = vld [vmem:[%s3 + $0xc] sm:$0xf]
      %v1255 = vld [vmem:[%s3 + $0x10] sm:$0xf]
      %v1256 = vld [vmem:[%s3 + $0x14] sm:$0xf]
      %v1257 = vld [vmem:[%s3 + $0x18] sm:$0xf]
      %v1258 = vld [vmem:[%s3 + $0x1c] sm:$0xf]
      %v1259 = vld [vmem:[%s3 + $0x20] sm:$0xf]
      %v1260 = vld [vmem:[%s3 + $0x24] sm:$0xf]
      %v1261 = vld [vmem:[%s3 + $0x28] sm:$0xf]
      %v1262 = vld [vmem:[%s3 + $0x2c] sm:$0xf]
      %v1263 = vld [vmem:[%s3 + $0x30] sm:$0xf]
      %v1264 = vld [vmem:[%s3 + $0x34] sm:$0xf]
      %v1265 = vld [vmem:[%s3 + $0x38] sm:$0xf]
      %v1266 = vld [vmem:[%s3 + $0x3c] sm:$0xf]
      %v1267 = vld [vmem:[%s3 + $0x40] sm:$0xf]
      %v1268 = vld [vmem:[%s3 + $0x44] sm:$0xf]
      %v1269 = vld [vmem:[%s3 + $0x48] sm:$0xf]
      %v1270 = vld [vmem:[%s3 + $0x4c] sm:$0xf]
      %v1271 = vld [vmem:[%s3 + $0x50] sm:$0xf]
      %v1272 = vld [vmem:[%s3 + $0x54] sm:$0xf]
      %v1273 = vld [vmem:[%s3 + $0x58] sm:$0xf]
      %v1274 = vld [vmem:[%s3 + $0x5c] sm:$0xf]
      %v1275 = vld [vmem:[%s3 + $0x60] sm:$0xf]
      %v1276 = vld [vmem:[%s3 + $0x64] sm:$0xf]
      %v1277 = vld [vmem:[%s3 + $0x68] sm:$0xf]
      %v1278 = vld [vmem:[%s3 + $0x6c] sm:$0xf]
      %v1279 = vld [vmem:[%s3 + $0x70] sm:$0xf]
      %v1280 = vld [vmem:[%s3 + $0x74] sm:$0xf]
      %v1281 = vld [vmem:[%s3 + $0x78] sm:$0xf]
      %v1282 = vld [vmem:[%s3 + $0x7c] sm:$0xf]
      %v1315 = vunpack.c.l.b16 %v1251
      %v1316 = vunpack.c.l.b16 %v1252
      %v1317 = vunpack.c.l.b16 %v1253
      %v1318 = vunpack.c.l.b16 %v1254
      %v1319 = vunpack.c.l.b16 %v1255
      %v1320 = vunpack.c.l.b16 %v1256
      %v1321 = vunpack.c.l.b16 %v1257
      %v1322 = vunpack.c.l.b16 %v1258
      %v1323 = vunpack.c.l.b16 %v1259
      %v1324 = vunpack.c.l.b16 %v1260
      %v1325 = vunpack.c.l.b16 %v1261
      %v1326 = vunpack.c.l.b16 %v1262
      %v1327 = vunpack.c.l.b16 %v1263
      %v1328 = vunpack.c.l.b16 %v1264
      %v1329 = vunpack.c.l.b16 %v1265
      %v1330 = vunpack.c.l.b16 %v1266
      %v1331 = vunpack.c.l.b16 %v1267
      %v1332 = vunpack.c.l.b16 %v1268
      %v1333 = vunpack.c.l.b16 %v1269
      %v1334 = vunpack.c.l.b16 %v1270
      %v1335 = vunpack.c.l.b16 %v1271
      %v1336 = vunpack.c.l.b16 %v1272
      %v1337 = vunpack.c.l.b16 %v1273
      %v1338 = vunpack.c.l.b16 %v1274
      %v1339 = vunpack.c.l.b16 %v1275
      %v1340 = vunpack.c.l.b16 %v1276
      %v1341 = vunpack.c.l.b16 %v1277
      %v1342 = vunpack.c.l.b16 %v1278
      %v1343 = vunpack.c.l.b16 %v1279
      %v1344 = vunpack.c.l.b16 %v1280
      %v1345 = vunpack.c.l.b16 %v1281
      %v1346 = vunpack.c.l.b16 %v1282
      %v1347 = vpack.c.b16 %v1316, %v1315
      %v1348 = vpack.c.b16 %v1318, %v1317
      %v1349 = vpack.c.b16 %v1320, %v1319
      %v1350 = vpack.c.b16 %v1322, %v1321
      %v1351 = vpack.c.b16 %v1324, %v1323
      %v1352 = vpack.c.b16 %v1326, %v1325
      %v1353 = vpack.c.b16 %v1328, %v1327
      %v1354 = vpack.c.b16 %v1330, %v1329
      %v1355 = vpack.c.b16 %v1332, %v1331
      %v1356 = vpack.c.b16 %v1334, %v1333
      %v1357 = vpack.c.b16 %v1336, %v1335
      %v1358 = vpack.c.b16 %v1338, %v1337
      %v1359 = vpack.c.b16 %v1340, %v1339
      %v1360 = vpack.c.b16 %v1342, %v1341
      %v1361 = vpack.c.b16 %v1344, %v1343
      %v1362 = vpack.c.b16 %v1346, %v1345
      %1379 = vmatpush.bf16.msra.mxu0 %v1354
      %1380 = vmatpush.bf16.msra.mxu0 %v1353
      %1381 = vmatpush.bf16.msra.mxu0 %v1352
      %1382 = vmatpush.bf16.msra.mxu0 %v1351
      %1383 = vmatpush.bf16.msra.mxu0 %v1350
      %1384 = vmatpush.bf16.msra.mxu0 %v1349
      %1385 = vmatpush.bf16.msra.mxu0 %v1348
      %1386 = vmatpush.bf16.msra.mxu0 %v1347
      %1387 = vmatmul.bf16.gmra.mxu0 %v1235
      %v1388 = vpop.f32.mrf.mxu0
      %v1389 = vadd.f32 0.0, %v1388
      %v1390 = vpop.f32.mrf.mxu0
      %v1391 = vadd.f32 0.0, %v1390
      %1392 = vmatmul.bf16.gmra.mxu0 %v1237
      %v1393 = vpop.f32.mrf.mxu0
      %v1394 = vadd.f32 0.0, %v1393
      %v1395 = vpop.f32.mrf.mxu0
      %v1396 = vadd.f32 0.0, %v1395
      %1397 = vmatmul.bf16.gmra.mxu0 %v1239
      %v1398 = vpop.f32.mrf.mxu0
      %v1399 = vadd.f32 0.0, %v1398
      %v1400 = vpop.f32.mrf.mxu0
      %v1401 = vadd.f32 0.0, %v1400
      %1402 = vmatmul.bf16.gmra.mxu0 %v1241
      %v1403 = vpop.f32.mrf.mxu0
      %v1404 = vadd.f32 0.0, %v1403
      %v1405 = vpop.f32.mrf.mxu0
      %v1406 = vadd.f32 0.0, %v1405
      %1407 = vmatmul.bf16.gmra.mxu0 %v1243
      %v1408 = vpop.f32.mrf.mxu0
      %v1409 = vadd.f32 0.0, %v1408
      %v1410 = vpop.f32.mrf.mxu0
      %v1411 = vadd.f32 0.0, %v1410
      %1412 = vmatmul.bf16.gmra.mxu0 %v1245
      %v1413 = vpop.f32.mrf.mxu0
      %v1414 = vadd.f32 0.0, %v1413
      %v1415 = vpop.f32.mrf.mxu0
      %v1416 = vadd.f32 0.0, %v1415
      %1417 = vmatmul.bf16.gmra.mxu0 %v1247
      %v1418 = vpop.f32.mrf.mxu0
      %v1419 = vadd.f32 0.0, %v1418
      %v1420 = vpop.f32.mrf.mxu0
      %v1421 = vadd.f32 0.0, %v1420
      %1422 = vmatmul.bf16.gmra.mxu0 %v1249
      %v1423 = vpop.f32.mrf.mxu0
      %v1424 = vadd.f32 0.0, %v1423
      %v1425 = vpop.f32.mrf.mxu0
      %v1426 = vadd.f32 0.0, %v1425
      %1427 = vdwg.mxu0
      %1428 = vmatpush.bf16.msra.mxu0 %v1362
      %1429 = vmatpush.bf16.msra.mxu0 %v1361
      %1430 = vmatpush.bf16.msra.mxu0 %v1360
      %1431 = vmatpush.bf16.msra.mxu0 %v1359
      %1432 = vmatpush.bf16.msra.mxu0 %v1358
      %1433 = vmatpush.bf16.msra.mxu0 %v1357
      %1434 = vmatpush.bf16.msra.mxu0 %v1356
      %1435 = vmatpush.bf16.msra.mxu0 %v1355
      %1436 = vmatmul.bf16.gmra.mxu0 %v1236
      %v1437 = vpop.f32.mrf.mxu0
      %v1438 = vadd.f32 %v1389, %v1437
      %v1439 = vpop.f32.mrf.mxu0
      %v1440 = vadd.f32 %v1391, %v1439
      %1441 = vmatmul.bf16.gmra.mxu0 %v1238
      %v1442 = vpop.f32.mrf.mxu0
      %v1443 = vadd.f32 %v1394, %v1442
      %v1444 = vpop.f32.mrf.mxu0
      %v1445 = vadd.f32 %v1396, %v1444
      %1446 = vmatmul.bf16.gmra.mxu0 %v1240
      %v1447 = vpop.f32.mrf.mxu0
      %v1448 = vadd.f32 %v1399, %v1447
      %v1449 = vpop.f32.mrf.mxu0
      %v1450 = vadd.f32 %v1401, %v1449
      %1451 = vmatmul.bf16.gmra.mxu0 %v1242
      %v1452 = vpop.f32.mrf.mxu0
      %v1453 = vadd.f32 %v1404, %v1452
      %v1454 = vpop.f32.mrf.mxu0
      %v1455 = vadd.f32 %v1406, %v1454
      %1456 = vmatmul.bf16.gmra.mxu0 %v1244
      %v1457 = vpop.f32.mrf.mxu0
      %v1458 = vadd.f32 %v1409, %v1457
      %v1459 = vpop.f32.mrf.mxu0
      %v1460 = vadd.f32 %v1411, %v1459
      %1461 = vmatmul.bf16.gmra.mxu0 %v1246
      %v1462 = vpop.f32.mrf.mxu0
      %v1463 = vadd.f32 %v1414, %v1462
      %v1464 = vpop.f32.mrf.mxu0
      %v1465 = vadd.f32 %v1416, %v1464
      %1466 = vmatmul.bf16.gmra.mxu0 %v1248
      %v1467 = vpop.f32.mrf.mxu0
      %v1468 = vadd.f32 %v1419, %v1467
      %v1469 = vpop.f32.mrf.mxu0
      %v1470 = vadd.f32 %v1421, %v1469
      %1471 = vmatmul.bf16.gmra.mxu0 %v1250
      %v1472 = vpop.f32.mrf.mxu0
      %v1473 = vadd.f32 %v1424, %v1472
      %v1474 = vpop.f32.mrf.mxu0
      %v1475 = vadd.f32 %v1426, %v1474
      %1476 = vdwg.mxu0
      %v1477 = vadd.f32 %v1438, %v1440
      %v1478 = vrot.slane %v1477, 4
      %v1479 = vadd.f32 %v1477, %v1478
      %v1480 = vrot.slane %v1479, 2
      %v1481 = vadd.f32 %v1479, %v1480
      %v1482 = vrot.slane %v1481, 1
      %v1483 = vadd.f32 %v1481, %v1482
      %v1484 = vadd.f32 %v1443, %v1445
      %v1485 = vrot.slane %v1484, 4
      %v1486 = vadd.f32 %v1484, %v1485
      %v1487 = vrot.slane %v1486, 2
      %v1488 = vadd.f32 %v1486, %v1487
      %v1489 = vrot.slane %v1488, 1
      %v1490 = vadd.f32 %v1488, %v1489
      %v1491 = vadd.f32 %v1448, %v1450
      %v1492 = vrot.slane %v1491, 4
      %v1493 = vadd.f32 %v1491, %v1492
      %v1494 = vrot.slane %v1493, 2
      %v1495 = vadd.f32 %v1493, %v1494
      %v1496 = vrot.slane %v1495, 1
      %v1497 = vadd.f32 %v1495, %v1496
      %v1498 = vadd.f32 %v1453, %v1455
      %v1499 = vrot.slane %v1498, 4
      %v1500 = vadd.f32 %v1498, %v1499
      %v1501 = vrot.slane %v1500, 2
      %v1502 = vadd.f32 %v1500, %v1501
      %v1503 = vrot.slane %v1502, 1
      %v1504 = vadd.f32 %v1502, %v1503
      %v1505 = vadd.f32 %v1458, %v1460
      %v1506 = vrot.slane %v1505, 4
      %v1507 = vadd.f32 %v1505, %v1506
      %v1508 = vrot.slane %v1507, 2
      %v1509 = vadd.f32 %v1507, %v1508
      %v1510 = vrot.slane %v1509, 1
      %v1511 = vadd.f32 %v1509, %v1510
      %v1512 = vadd.f32 %v1463, %v1465
      %v1513 = vrot.slane %v1512, 4
      %v1514 = vadd.f32 %v1512, %v1513
      %v1515 = vrot.slane %v1514, 2
      %v1516 = vadd.f32 %v1514, %v1515
      %v1517 = vrot.slane %v1516, 1
      %v1518 = vadd.f32 %v1516, %v1517
      %v1519 = vadd.f32 %v1468, %v1470
      %v1520 = vrot.slane %v1519, 4
      %v1521 = vadd.f32 %v1519, %v1520
      %v1522 = vrot.slane %v1521, 2
      %v1523 = vadd.f32 %v1521, %v1522
      %v1524 = vrot.slane %v1523, 1
      %v1525 = vadd.f32 %v1523, %v1524
      %v1526 = vadd.f32 %v1473, %v1475
      %v1527 = vrot.slane %v1526, 4
      %v1528 = vadd.f32 %v1526, %v1527
      %v1529 = vrot.slane %v1528, 2
      %v1530 = vadd.f32 %v1528, %v1529
      %v1531 = vrot.slane %v1530, 1
      %v1532 = vadd.f32 %v1530, %v1531
      %v1533 = vld [vmem:[%s4] sm:$0x1]
      %v1535 = vperm.slane %v1533, 0
      %v1537 = vadd.f32 %v1483, %v1535
      %v1538 = vadd.f32 %v1490, %v1535
      %v1539 = vadd.f32 %v1497, %v1535
      %v1540 = vadd.f32 %v1504, %v1535
      %v1541 = vadd.f32 %v1511, %v1535
      %v1542 = vadd.f32 %v1518, %v1535
      %v1543 = vadd.f32 %v1525, %v1535
      %v1544 = vadd.f32 %v1532, %v1535
      %v1553 = vrot.slane %v1538, 7
      %vm1554 = vcmask 1041409
      %v1555 = vsel %vm1554, %v1553, %v1537
      %v1556 = vrot.slane %v1539, 6
      %vm1557 = vcmask 1042434
      %v1558 = vsel %vm1557, %v1556, %v1555
      %v1559 = vrot.slane %v1540, 5
      %vm1560 = vcmask 1043459
      %v1561 = vsel %vm1560, %v1559, %v1558
      %v1562 = vrot.slane %v1541, 4
      %vm1563 = vcmask 1044484
      %v1564 = vsel %vm1563, %v1562, %v1561
      %v1565 = vrot.slane %v1542, 3
      %vm1566 = vcmask 1045509
      %v1567 = vsel %vm1566, %v1565, %v1564
      %v1568 = vrot.slane %v1543, 2
      %vm1569 = vcmask 1046534
      %v1570 = vsel %vm1569, %v1568, %v1567
      %v1571 = vrot.slane %v1544, 1
      %vm1572 = vcmask 1047559
      %v1573 = vsel %vm1572, %v1571, %v1570
      %1575 = vst [vmem:[%s227] sm:$0xff] %v1573
      %p1576 = scmp.lt.s32.totalorder %s16, 1
      %s1577 = scalar_select %p1576, %s16, 1
      %s1578 = smul.addr %s1577, 8
      %s1579 = scalar_lea.vmem %s5, %s1578
      // Predicated region
      $region41: #{_lambda_.6} parent=39 // pred_check
        %p1580 = pneg %p144
      $region42: #{_lambda_.6} parent=39 // pred_check_branch
        %1582 = sbr.rel (%p1580) target = $region44
      $region43: #{_lambda_.6} parent=39 // pred_region
        _
      $region44: #{_lambda_.6} parent=39 // pred_fallthru
        _
    $region40: #{_lambda_.6} parent=5 // pred_fallthru
      _
    %p1583 = scmp.le.s32.totalorder 2, %s11
    // Predicated region
    $region45: #{_lambda_.6} parent=5 // pred_check
      %p1584 = pneg %p1583
    $region46: #{_lambda_.6} parent=5 // pred_check_branch
      %1586 = sbr.rel (%p1584) target = $region48
    $region47: #{_lambda_.6} parent=5 // pred_region
      %s1587 = ssub.s32 %s11, 2
      // Predicated region
      $region49: #{_lambda_.6} parent=47 // pred_check
        %p1588 = pneg %p150
      $region50: #{_lambda_.6} parent=47 // pred_check_branch
        %1590 = sbr.rel (%p1588) target = $region52
      $region51: #{_lambda_.6} parent=47 // pred_region
        %p1591 = scmp.lt.s32.totalorder %s17, 1
        %s1592 = scalar_select %p1591, %s17, 1
        %s1593 = smul.addr %s1592, 8
        %s1594 = scalar_lea.vmem %s5, %s1593
      $region52: #{_lambda_.6} parent=47 // pred_fallthru
        _
    $region48: #{_lambda_.6} parent=5 // pred_fallthru
      _
  $region6: #{_lambda_.6} parent=0 // loop_footer
    %s15 = sadd.s32 1, %s11
  $region7: #{_lambda_.6} parent=0 // loop_footer_branch
    %10 = sbr.rel target = $region3
  $region8: #{_lambda_.6} parent=0 // loop_exit
    _

// kernel: _lambda_.9
$region0: #{_lambda_.9}
  #allocation0 [shape = 'u32[]', space=smem, size = 0x4, offset = 0x4, fixed_abs, tag = 'smem constant byte address 0x4 - core index']
  #allocation1 [shape = 'u32[72,128]{1,0:T(1,128)}', space=vmem, size = 0x9000, scoped, tag = 'internal scratch']
  #allocation2 [shape = 'f32[16,512]{1,0:T(8,128)}', space=vmem, size = 0x8000, scoped, tag = 'scratch operand']
  %s0 = inlined_call_operand.vmem [shape: f32[16,256], index: 0, kind: input, shape index: {}]
  %s1 = inlined_call_operand.vmem [shape: bf16[256,1024], index: 1, kind: input, shape index: {}]
  %s2 = inlined_call_operand.vmem [shape: f32[1,1024], index: 2, kind: input, shape index: {}]
  %s3 = inlined_call_operand.vmem [shape: f32[16,1024], index: 3, kind: output, shape index: {}]
  %s4 = sld [smem:[#allocation0]]
  $region95: #{_lambda_.9} parent=0
    _
  %s6 = ssub.s32 1, %s4
  %s7 = scalar_select 0, %s6, %s4
  $region1: #{_lambda_.9} parent=0
    #allocation3 [shape = 'u8[524288]{0}', space=vmem, size = 0x80000, scoped, tag = 'input window, operand 1']
    #allocation4 [shape = 'u8[65536]{0}', space=vmem, size = 0x10000, scoped, tag = 'output window, operand 0']
    loop: start=0, step=1, limit=4
    $region2: #{_lambda_.9} parent=1 // loop_pre_header
      _
    $region3: #{_lambda_.9} parent=1 // loop_header
      %s9 = sphi 0, %s13
      %p10 = scmp.ge.s32.totalorder %s9, 4
      %s16 = sphi 0, %s35
      %s17 = sphi 0, %s31
      %s18 = sphi 0, %s27
      %s19 = sphi 0, %s16
      %s20 = sphi 0, %s17
      %s21 = sphi 0, %s18
      %s22 = sphi 0, %s19
      %s23 = sphi 0, %s20
      %s24 = sphi 0, %s21
      %s40 = sphi 0, %s42
      %s43 = sphi 0, %s40
      %s44 = sphi 0, %s43
      %s60 = sphi 0, %s44
      %s68 = sphi 0, %s70
      %s71 = sphi 0, %s68
      %s72 = sphi 0, %s71
      %s88 = sphi 0, %s72
      %s94 = sphi 0, %s96
      %s97 = sphi 0, %s94
      %s98 = sphi 0, %s97
      %s114 = sphi 0, %s98
      %s122 = sphi 0, %s124
      %s125 = sphi 0, %s122
      %s126 = sphi 0, %s125
      %s142 = sphi 0, %s126
    $region4: #{_lambda_.9} parent=1 // loop_header_branch
      %12 = sbr.rel (%p10) target = $region8
    $region5: #{_lambda_.9} parent=1 // loop_body
      %s14 = ssub.s32 %s9, 1
      %s15 = ssub.s32 %s9, 2
      %s25 = sadd.s32 1, %s18
      %p26 = scmp.ge.s32.totalorder %s25, 1
      %s27 = scalar_select %p26, 0, %s25
      %s28 = sadd.s32 1, %s17
      %s29 = scalar_select %p26, %s28, %s17
      %p30 = scmp.ge.s32.totalorder %s29, 2
      %s31 = scalar_select %p30, 0, %s29
      %s32 = sadd.s32 1, %s16
      %s33 = scalar_select %p30, %s32, %s16
      %p34 = scmp.ge.s32.totalorder %s33, 1
      %s35 = scalar_select %p34, 0, %s33
      %s36 = ssub.s32 %s16, %s35
      %s37 = ssub.s32 %s18, %s27
      %s38 = sor.u32 %s36, %s37
      %p39 = scmp.eq.s32.totalorder %s38, 0
      %s41 = sadd.s32 %s40, 1
      %s42 = scalar_select %p39, %s40, %s41
      %p45 = pneg %p39
      %p46 = scmp.eq.s32.totalorder %s9, 1
      %p47 = por %p45, %p46
      %p48 = scmp.ne.s32.totalorder %s40, %s43
      %p49 = scmp.eq.s32.totalorder %s9, 0
      %p50 = por %p48, %p49
      %p51 = scmp.ne.s32.totalorder %s40, %s43
      %p52 = scmp.eq.s32.totalorder %s14, 1
      %p53 = por %p51, %p52
      %p54 = scmp.ne.s32.totalorder %s43, %s44
      %p55 = scmp.eq.s32.totalorder %s14, 0
      %p56 = por %p54, %p55
      %p57 = scmp.ne.s32.totalorder %s43, %s44
      %p58 = scmp.eq.s32.totalorder %s15, 1
      %p59 = por %p57, %p58
      %p61 = scmp.ne.s32.totalorder %s44, %s60
      %p62 = scmp.eq.s32.totalorder %s15, 0
      %p63 = por %p61, %p62
      %s64 = ssub.s32 %s18, %s27
      %s65 = ssub.s32 %s17, %s31
      %s66 = sor.u32 %s64, %s65
      %p67 = scmp.eq.s32.totalorder %s66, 0
      %s69 = sadd.s32 %s68, 1
      %s70 = scalar_select %p67, %s68, %s69
      %p73 = pneg %p67
      %p74 = scmp.eq.s32.totalorder %s9, 1
      %p75 = por %p73, %p74
      %p76 = scmp.ne.s32.totalorder %s68, %s71
      %p77 = scmp.eq.s32.totalorder %s9, 0
      %p78 = por %p76, %p77
      %p79 = scmp.ne.s32.totalorder %s68, %s71
      %p80 = scmp.eq.s32.totalorder %s14, 1
      %p81 = por %p79, %p80
      %p82 = scmp.ne.s32.totalorder %s71, %s72
      %p83 = scmp.eq.s32.totalorder %s14, 0
      %p84 = por %p82, %p83
      %p85 = scmp.ne.s32.totalorder %s71, %s72
      %p86 = scmp.eq.s32.totalorder %s15, 1
      %p87 = por %p85, %p86
      %p89 = scmp.ne.s32.totalorder %s72, %s88
      %p90 = scmp.eq.s32.totalorder %s15, 0
      %p91 = por %p89, %p90
      %s92 = ssub.s32 %s17, %s31
      %p93 = scmp.eq.s32.totalorder %s92, 0
      %s95 = sadd.s32 %s94, 1
      %s96 = scalar_select %p93, %s94, %s95
      %p99 = pneg %p93
      %p100 = scmp.eq.s32.totalorder %s9, 1
      %p101 = por %p99, %p100
      %p102 = scmp.ne.s32.totalorder %s94, %s97
      %p103 = scmp.eq.s32.totalorder %s9, 0
      %p104 = por %p102, %p103
      %p105 = scmp.ne.s32.totalorder %s94, %s97
      %p106 = scmp.eq.s32.totalorder %s14, 1
      %p107 = por %p105, %p106
      %p108 = scmp.ne.s32.totalorder %s97, %s98
      %p109 = scmp.eq.s32.totalorder %s14, 0
      %p110 = por %p108, %p109
      %p111 = scmp.ne.s32.totalorder %s97, %s98
      %p112 = scmp.eq.s32.totalorder %s15, 1
      %p113 = por %p111, %p112
      %p115 = scmp.ne.s32.totalorder %s98, %s114
      %p116 = scmp.eq.s32.totalorder %s15, 0
      %p117 = por %p115, %p116
      %s118 = ssub.s32 %s16, %s35
      %s119 = ssub.s32 %s17, %s31
      %s120 = sor.u32 %s118, %s119
      %p121 = scmp.eq.s32.totalorder %s120, 0
      %s123 = sadd.s32 %s122, 1
      %s124 = scalar_select %p121, %s122, %s123
      %p127 = pneg %p121
      %p128 = scmp.eq.s32.totalorder %s9, 1
      %p129 = por %p127, %p128
      %p130 = scmp.ne.s32.totalorder %s122, %s125
      %p131 = scmp.eq.s32.totalorder %s9, 0
      %p132 = por %p130, %p131
      %p133 = scmp.ne.s32.totalorder %s122, %s125
      %p134 = scmp.eq.s32.totalorder %s14, 1
      %p135 = por %p133, %p134
      %p136 = scmp.ne.s32.totalorder %s125, %s126
      %p137 = scmp.eq.s32.totalorder %s14, 0
      %p138 = por %p136, %p137
      %p139 = scmp.ne.s32.totalorder %s125, %s126
      %p140 = scmp.eq.s32.totalorder %s15, 1
      %p141 = por %p139, %p140
      %p143 = scmp.ne.s32.totalorder %s126, %s142
      %p144 = scmp.eq.s32.totalorder %s15, 0
      %p145 = por %p143, %p144
      %p146 = scmp.le.s32.totalorder 1, %s9
      %p147 = scmp.lt.s32.totalorder %s9, 3
      %p148 = pnand %p146, %p147
      %p149 = pneg %p148
      // Predicated region
      $region9: #{_lambda_.9} parent=5 // pred_check
        _
      $region10: #{_lambda_.9} parent=5 // pred_check_branch
        %151 = sbr.rel (%p148) target = $region12
      $region11: #{_lambda_.9} parent=5 // pred_region
        %s152 = ssub.s32 %s9, 1
        // Predicated region
        $region13: #{_lambda_.9} parent=11 // pred_check
          %p153 = pneg %p56
        $region14: #{_lambda_.9} parent=11 // pred_check_branch
          %155 = sbr.rel (%p153) target = $region16
        $region15: #{_lambda_.9} parent=11 // pred_region
          %s156 = smul.u32 2, %s19
          %s157 = smul.u32 2, %s21
          %p158 = scmp.lt.s32.totalorder %s156, 1
          %s159 = scalar_select %p158, %s156, 1
          %p160 = scmp.lt.s32.totalorder %s157, 1
          %s161 = scalar_select %p160, %s157, 1
          %s162 = smul.addr %s159, 2
          %s163 = sadd.s32 %s161, %s162
          %s164 = smul.addr %s163, 8
          %s165 = scalar_lea.vmem %s0, %s164
          %s166 = smul.u32 2, %s19
          %s167 = smul.u32 2, %s21
        $region16: #{_lambda_.9} parent=11 // pred_fallthru
          _
      $region12: #{_lambda_.9} parent=5 // pred_fallthru
        _
      %p168 = scmp.lt.s32.totalorder %s9, 2
      // Predicated region
      $region17: #{_lambda_.9} parent=5 // pred_check
        %p169 = pneg %p168
      $region18: #{_lambda_.9} parent=5 // pred_check_branch
        %171 = sbr.rel (%p169) target = $region20
      $region19: #{_lambda_.9} parent=5 // pred_region
        // Predicated region
        $region21: #{_lambda_.9} parent=19 // pred_check
          %p172 = pneg %p78
        $region22: #{_lambda_.9} parent=19 // pred_check_branch
          %174 = sbr.rel (%p172) target = $region24
        $region23: #{_lambda_.9} parent=19 // pred_region
          %s175 = sand.u32 %s68, 1
          %s176 = sand.u32 %s68, 1
          %s177 = smul.addr %s176, 512
          %s178 = scalar_lea.vmem [#allocation3], %s177
          %s179 = smul.u32 32, %s18
          %s180 = smul.u32 4, %s17
          %s181 = smul.addr %s179, 8
          %s182 = sadd.s32 %s180, %s181
          %s183 = smul.addr %s182, 4
          %s184 = scalar_lea.vmem %s1, %s183
          // Predicated region
          $region25: #{_lambda_.9} parent=23 // pred_check
            _
          $region26: #{_lambda_.9} parent=23 // pred_check_branch
            %186 = sbr.rel (0) target = $region28
          $region27: #{_lambda_.9} parent=23 // pred_region
            // Predicated region
            $region29: #{_lambda_.9} parent=27 // pred_check
              _
            $region30: #{_lambda_.9} parent=27 // pred_check_branch
              %188 = sbr.rel (0) target = $region32
            $region31: #{_lambda_.9} parent=27 // pred_region
              loop: start=0, step=1, limit=1
              $region33: #{_lambda_.9} parent=31 // loop_pre_header
                _
              $region34: #{_lambda_.9} parent=31 // loop_header
                %s190 = sphi 0, %s194
                %p191 = scmp.ge.s32.totalorder %s190, 1
                %s195 = sphi %s184, %s184
                %s196 = sphi %s178, %s178
              $region35: #{_lambda_.9} parent=31 // loop_header_branch
                %193 = sbr.rel (%p191) target = $region39
              $region36: #{_lambda_.9} parent=31 // loop_body
                %v197 = vld [vmem:[%s195] sm:$0xff]
                %198 = vst [vmem:[%s196] sm:$0xff] %v197
                %v199 = vld [vmem:[%s195 + $0x8] sm:$0xff]
                %200 = vst [vmem:[%s196 + $0x8] sm:$0xff] %v199
                %v201 = vld [vmem:[%s195 + $0x20] sm:$0xff]
                %202 = vst [vmem:[%s196 + $0x10] sm:$0xff] %v201
                %v203 = vld [vmem:[%s195 + $0x28] sm:$0xff]
                %204 = vst [vmem:[%s196 + $0x18] sm:$0xff] %v203
                %v205 = vld [vmem:[%s195 + $0x40] sm:$0xff]
                %206 = vst [vmem:[%s196 + $0x20] sm:$0xff] %v205
                %v207 = vld [vmem:[%s195 + $0x48] sm:$0xff]
                %208 = vst [vmem:[%s196 + $0x28] sm:$0xff] %v207
                %v209 = vld [vmem:[%s195 + $0x60] sm:$0xff]
                %210 = vst [vmem:[%s196 + $0x30] sm:$0xff] %v209
                %v211 = vld [vmem:[%s195 + $0x68] sm:$0xff]
                %212 = vst [vmem:[%s196 + $0x38] sm:$0xff] %v211
                %v213 = vld [vmem:[%s195 + $0x80] sm:$0xff]
                %214 = vst [vmem:[%s196 + $0x40] sm:$0xff] %v213
                %v215 = vld [vmem:[%s195 + $0x88] sm:$0xff]
                %216 = vst [vmem:[%s196 + $0x48] sm:$0xff] %v215
                %v217 = vld [vmem:[%s195 + $0xa0] sm:$0xff]
                %218 = vst [vmem:[%s196 + $0x50] sm:$0xff] %v217
                %v219 = vld [vmem:[%s195 + $0xa8] sm:$0xff]
                %220 = vst [vmem:[%s196 + $0x58] sm:$0xff] %v219
                %v221 = vld [vmem:[%s195 + $0xc0] sm:$0xff]
                %222 = vst [vmem:[%s196 + $0x60] sm:$0xff] %v221
                %v223 = vld [vmem:[%s195 + $0xc8] sm:$0xff]
                %224 = vst [vmem:[%s196 + $0x68] sm:$0xff] %v223
                %v225 = vld [vmem:[%s195 + $0xe0] sm:$0xff]
                %226 = vst [vmem:[%s196 + $0x70] sm:$0xff] %v225
                %v227 = vld [vmem:[%s195 + $0xe8] sm:$0xff]
                %228 = vst [vmem:[%s196 + $0x78] sm:$0xff] %v227
                %v229 = vld [vmem:[%s195 + $0x100] sm:$0xff]
                %230 = vst [vmem:[%s196 + $0x80] sm:$0xff] %v229
                %v231 = vld [vmem:[%s195 + $0x108] sm:$0xff]
                %232 = vst [vmem:[%s196 + $0x88] sm:$0xff] %v231
                %v233 = vld [vmem:[%s195 + $0x120] sm:$0xff]
                %234 = vst [vmem:[%s196 + $0x90] sm:$0xff] %v233
                %v235 = vld [vmem:[%s195 + $0x128] sm:$0xff]
                %236 = vst [vmem:[%s196 + $0x98] sm:$0xff] %v235
                %v237 = vld [vmem:[%s195 + $0x140] sm:$0xff]
                %238 = vst [vmem:[%s196 + $0xa0] sm:$0xff] %v237
                %v239 = vld [vmem:[%s195 + $0x148] sm:$0xff]
                %240 = vst [vmem:[%s196 + $0xa8] sm:$0xff] %v239
                %v241 = vld [vmem:[%s195 + $0x160] sm:$0xff]
                %242 = vst [vmem:[%s196 + $0xb0] sm:$0xff] %v241
                %v243 = vld [vmem:[%s195 + $0x168] sm:$0xff]
                %244 = vst [vmem:[%s196 + $0xb8] sm:$0xff] %v243
                %v245 = vld [vmem:[%s195 + $0x180] sm:$0xff]
                %246 = vst [vmem:[%s196 + $0xc0] sm:$0xff] %v245
                %v247 = vld [vmem:[%s195 + $0x188] sm:$0xff]
                %248 = vst [vmem:[%s196 + $0xc8] sm:$0xff] %v247
                %v249 = vld [vmem:[%s195 + $0x1a0] sm:$0xff]
                %250 = vst [vmem:[%s196 + $0xd0] sm:$0xff] %v249
                %v251 = vld [vmem:[%s195 + $0x1a8] sm:$0xff]
                %252 = vst [vmem:[%s196 + $0xd8] sm:$0xff] %v251
                %v253 = vld [vmem:[%s195 + $0x1c0] sm:$0xff]
                %254 = vst [vmem:[%s196 + $0xe0] sm:$0xff] %v253
                %v255 = vld [vmem:[%s195 + $0x1c8] sm:$0xff]
                %256 = vst [vmem:[%s196 + $0xe8] sm:$0xff] %v255
                %v257 = vld [vmem:[%s195 + $0x1e0] sm:$0xff]
                %258 = vst [vmem:[%s196 + $0xf0] sm:$0xff] %v257
                %v259 = vld [vmem:[%s195 + $0x1e8] sm:$0xff]
                %260 = vst [vmem:[%s196 + $0xf8] sm:$0xff] %v259
                %v261 = vld [vmem:[%s195 + $0x200] sm:$0xff]
                %262 = vst [vmem:[%s196 + $0x100] sm:$0xff] %v261
                %v263 = vld [vmem:[%s195 + $0x208] sm:$0xff]
                %264 = vst [vmem:[%s196 + $0x108] sm:$0xff] %v263
                %v265 = vld [vmem:[%s195 + $0x220] sm:$0xff]
                %266 = vst [vmem:[%s196 + $0x110] sm:$0xff] %v265
                %v267 = vld [vmem:[%s195 + $0x228] sm:$0xff]
                %268 = vst [vmem:[%s196 + $0x118] sm:$0xff] %v267
                %v269 = vld [vmem:[%s195 + $0x240] sm:$0xff]
                %270 = vst [vmem:[%s196 + $0x120] sm:$0xff] %v269
                %v271 = vld [vmem:[%s195 + $0x248] sm:$0xff]
                %272 = vst [vmem:[%s196 + $0x128] sm:$0xff] %v271
                %v273 = vld [vmem:[%s195 + $0x260] sm:$0xff]
                %274 = vst [vmem:[%s196 + $0x130] sm:$0xff] %v273
                %v275 = vld [vmem:[%s195 + $0x268] sm:$0xff]
                %276 = vst [vmem:[%s196 + $0x138] sm:$0xff] %v275
                %v277 = vld [vmem:[%s195 + $0x280] sm:$0xff]
                %278 = vst [vmem:[%s196 + $0x140] sm:$0xff] %v277
                %v279 = vld [vmem:[%s195 + $0x288] sm:$0xff]
                %280 = vst [vmem:[%s196 + $0x148] sm:$0xff] %v279
                %v281 = vld [vmem:[%s195 + $0x2a0] sm:$0xff]
                %282 = vst [vmem:[%s196 + $0x150] sm:$0xff] %v281
                %v283 = vld [vmem:[%s195 + $0x2a8] sm:$0xff]
                %284 = vst [vmem:[%s196 + $0x158] sm:$0xff] %v283
                %v285 = vld [vmem:[%s195 + $0x2c0] sm:$0xff]
                %286 = vst [vmem:[%s196 + $0x160] sm:$0xff] %v285
                %v287 = vld [vmem:[%s195 + $0x2c8] sm:$0xff]
                %288 = vst [vmem:[%s196 + $0x168] sm:$0xff] %v287
                %v289 = vld [vmem:[%s195 + $0x2e0] sm:$0xff]
                %290 = vst [vmem:[%s196 + $0x170] sm:$0xff] %v289
                %v291 = vld [vmem:[%s195 + $0x2e8] sm:$0xff]
                %292 = vst [vmem:[%s196 + $0x178] sm:$0xff] %v291
                %v293 = vld [vmem:[%s195 + $0x300] sm:$0xff]
                %294 = vst [vmem:[%s196 + $0x180] sm:$0xff] %v293
                %v295 = vld [vmem:[%s195 + $0x308] sm:$0xff]
                %296 = vst [vmem:[%s196 + $0x188] sm:$0xff] %v295
                %v297 = vld [vmem:[%s195 + $0x320] sm:$0xff]
                %298 = vst [vmem:[%s196 + $0x190] sm:$0xff] %v297
                %v299 = vld [vmem:[%s195 + $0x328] sm:$0xff]
                %300 = vst [vmem:[%s196 + $0x198] sm:$0xff] %v299
                %v301 = vld [vmem:[%s195 + $0x340] sm:$0xff]
                %302 = vst [vmem:[%s196 + $0x1a0] sm:$0xff] %v301
                %v303 = vld [vmem:[%s195 + $0x348] sm:$0xff]
                %304 = vst [vmem:[%s196 + $0x1a8] sm:$0xff] %v303
                %v305 = vld [vmem:[%s195 + $0x360] sm:$0xff]
                %306 = vst [vmem:[%s196 + $0x1b0] sm:$0xff] %v305
                %v307 = vld [vmem:[%s195 + $0x368] sm:$0xff]
                %308 = vst [vmem:[%s196 + $0x1b8] sm:$0xff] %v307
                %v309 = vld [vmem:[%s195 + $0x380] sm:$0xff]
                %310 = vst [vmem:[%s196 + $0x1c0] sm:$0xff] %v309
                %v311 = vld [vmem:[%s195 + $0x388] sm:$0xff]
                %312 = vst [vmem:[%s196 + $0x1c8] sm:$0xff] %v311
                %v313 = vld [vmem:[%s195 + $0x3a0] sm:$0xff]
                %314 = vst [vmem:[%s196 + $0x1d0] sm:$0xff] %v313
                %v315 = vld [vmem:[%s195 + $0x3a8] sm:$0xff]
                %316 = vst [vmem:[%s196 + $0x1d8] sm:$0xff] %v315
                %v317 = vld [vmem:[%s195 + $0x3c0] sm:$0xff]
                %318 = vst [vmem:[%s196 + $0x1e0] sm:$0xff] %v317
                %v319 = vld [vmem:[%s195 + $0x3c8] sm:$0xff]
                %320 = vst [vmem:[%s196 + $0x1e8] sm:$0xff] %v319
                %v321 = vld [vmem:[%s195 + $0x3e0] sm:$0xff]
                %322 = vst [vmem:[%s196 + $0x1f0] sm:$0xff] %v321
                %v323 = vld [vmem:[%s195 + $0x3e8] sm:$0xff]
                %324 = vst [vmem:[%s196 + $0x1f8] sm:$0xff] %v323
              $region37: #{_lambda_.9} parent=31 // loop_footer
                %s194 = sadd.s32 1, %s190
              $region38: #{_lambda_.9} parent=31 // loop_footer_branch
                %189 = sbr.rel target = $region34
              $region39: #{_lambda_.9} parent=31 // loop_exit
                _
            $region32: #{_lambda_.9} parent=27 // pred_fallthru
              _
            // Predicated region
            $region40: #{_lambda_.9} parent=27 // pred_check
              _
            $region41: #{_lambda_.9} parent=27 // pred_check_branch
              %326 = sbr.rel target = $region43
            $region42: #{_lambda_.9} parent=27 // pred_region
              _
            $region43: #{_lambda_.9} parent=27 // pred_fallthru
              _
          $region28: #{_lambda_.9} parent=23 // pred_fallthru
            _
          %327 = vnop
        $region24: #{_lambda_.9} parent=19 // pred_fallthru
          _
        // Predicated region
        $region44: #{_lambda_.9} parent=19 // pred_check
          %p328 = pneg %p104
        $region45: #{_lambda_.9} parent=19 // pred_check_branch
          %330 = sbr.rel (%p328) target = $region47
        $region46: #{_lambda_.9} parent=19 // pred_region
          %s331 = smul.u32 4, %s17
          %p332 = scmp.lt.s32.totalorder %s331, 7
          %s333 = scalar_select %p332, %s331, 7
          %s334 = scalar_lea.vmem %s2, %s333
          %s335 = smul.u32 4, %s17
        $region47: #{_lambda_.9} parent=19 // pred_fallthru
          _
      $region20: #{_lambda_.9} parent=5 // pred_fallthru
        _
      %p336 = scmp.le.s32.totalorder 1, %s9
      %p337 = scmp.lt.s32.totalorder %s9, 3
      %p338 = pnand %p336, %p337
      %p339 = pneg %p338
      // Predicated region
      $region48: #{_lambda_.9} parent=5 // pred_check
        _
      $region49: #{_lambda_.9} parent=5 // pred_check_branch
        %341 = sbr.rel (%p338) target = $region51
      $region50: #{_lambda_.9} parent=5 // pred_region
        %s342 = ssub.s32 %s9, 1
        %s343 = sand.u32 %s71, 1
        %s344 = sand.u32 %s71, 1
        %s345 = smul.addr %s344, 512
        %s346 = scalar_lea.vmem [#allocation3], %s345
        // Predicated region
        $region52: #{_lambda_.9} parent=50 // pred_check
          %p347 = pneg %p84
        $region53: #{_lambda_.9} parent=50 // pred_check_branch
          %349 = sbr.rel (%p347) target = $region55
        $region54: #{_lambda_.9} parent=50 // pred_region
          _
        $region55: #{_lambda_.9} parent=50 // pred_fallthru
          _
        %s350 = smul.u32 2, %s19
        %s351 = smul.u32 2, %s21
        %p352 = scmp.lt.s32.totalorder %s350, 1
        %s353 = scalar_select %p352, %s350, 1
        %p354 = scmp.lt.s32.totalorder %s351, 1
        %s355 = scalar_select %p354, %s351, 1
        %s356 = smul.addr %s353, 2
        %s357 = sadd.s32 %s355, %s356
        %s358 = smul.addr %s357, 8
        %s359 = scalar_lea.vmem %s0, %s358
        %p360 = pneg %p56
        %p361 = pneg %p53
        %s362 = sand.u32 %s71, 1
        %s363 = sand.u32 %s71, 1
        %s364 = smul.addr %s363, 512
        %s365 = scalar_lea.vmem [#allocation3], %s364
        %p366 = pneg %p84
        %p367 = pneg %p81
        %s368 = smul.u32 4, %s20
        %p369 = scmp.lt.s32.totalorder %s368, 7
        %s370 = scalar_select %p369, %s368, 7
        %s371 = scalar_lea.vmem %s2, %s370
        %p372 = pneg %p110
        %p373 = pneg %p107
        %p374 = pneg %p138
        %p375 = pneg %p135
        %s376 = sand.u32 %s125, 1
        %s377 = sand.u32 %s125, 1
        %s378 = smul.addr %s377, 64
        %s379 = scalar_lea.vmem [#allocation4], %s378
        %s380 = smul.u32 2, %s19
        %s381 = smul.u32 2, %s21
        %p382 = scmp.lt.s32.totalorder %s380, 1
        %s383 = scalar_select %p382, %s380, 1
        %p384 = scmp.lt.s32.totalorder %s381, 1
        %s385 = scalar_select %p384, %s381, 1
        %s386 = smul.addr %s383, 2
        %s387 = sadd.s32 %s385, %s386
        %s388 = smul.addr %s387, 8
        %s389 = scalar_lea.vmem %s0, %s388
        %s390 = smul.u32 2, %s19
        %s391 = smul.u32 2, %s21
        %s392 = smul.u32 32, %s21
        %s393 = smul.u32 4, %s20
        %s394 = smul.u32 4, %s20
        %p395 = scmp.lt.s32.totalorder %s394, 7
        %s396 = scalar_select %p395, %s394, 7
        %s397 = scalar_lea.vmem %s2, %s396
        %s398 = smul.u32 4, %s20
        %s399 = smul.u32 2, %s19
        %s400 = smul.u32 4, %s20
        %p401 = scmp.eq.s32.totalorder %s21, 0
        // Predicated region
        $region56: #{_lambda_.9} parent=50 // pred_check
          %p402 = pneg %p401
        $region57: #{_lambda_.9} parent=50 // pred_check_branch
          %404 = sbr.rel (%p402) target = $region59
        $region58: #{_lambda_.9} parent=50 // pred_region
          %405 = vst [vmem:[#allocation2] sm:$0xff] 0.0
          %406 = vst [vmem:[#allocation2 + $0x8] sm:$0xff] 0.0
          %407 = vst [vmem:[#allocation2 + $0x10] sm:$0xff] 0.0
          %408 = vst [vmem:[#allocation2 + $0x18] sm:$0xff] 0.0
          %409 = vst [vmem:[#allocation2 + $0x20] sm:$0xff] 0.0
          %410 = vst [vmem:[#allocation2 + $0x28] sm:$0xff] 0.0
          %411 = vst [vmem:[#allocation2 + $0x30] sm:$0xff] 0.0
          %412 = vst [vmem:[#allocation2 + $0x38] sm:$0xff] 0.0
        $region59: #{_lambda_.9} parent=50 // pred_fallthru
          _
        %v413 = vld [vmem:[#allocation2] sm:$0xff]
        %v414 = vld [vmem:[#allocation2 + $0x8] sm:$0xff]
        %v415 = vld [vmem:[#allocation2 + $0x10] sm:$0xff]
        %v416 = vld [vmem:[#allocation2 + $0x18] sm:$0xff]
        %v417 = vld [vmem:[#allocation2 + $0x20] sm:$0xff]
        %v418 = vld [vmem:[#allocation2 + $0x28] sm:$0xff]
        %v419 = vld [vmem:[#allocation2 + $0x30] sm:$0xff]
        %v420 = vld [vmem:[#allocation2 + $0x38] sm:$0xff]
        %v421 = vld [vmem:[%s389] sm:$0xff]
        %v422 = vld [vmem:[%s389 + $0x8] sm:$0xff]
        %v423 = vld [vmem:[%s389 + $0x10] sm:$0xff]
        %v424 = vld [vmem:[%s389 + $0x18] sm:$0xff]
        %v425 = vpack.c.bf16 %v423, %v421
        %v426 = vpack.c.bf16 %v424, %v422
        %v427 = vld [vmem:[%s346] sm:$0xff]
        %v428 = vld [vmem:[%s346 + $0x8] sm:$0xff]
        %v429 = vld [vmem:[%s346 + $0x10] sm:$0xff]
        %v430 = vld [vmem:[%s346 + $0x18] sm:$0xff]
        %v431 = vld [vmem:[%s346 + $0x20] sm:$0xff]
        %v432 = vld [vmem:[%s346 + $0x28] sm:$0xff]
        %v433 = vld [vmem:[%s346 + $0x30] sm:$0xff]
        %v434 = vld [vmem:[%s346 + $0x38] sm:$0xff]
        %v435 = vld [vmem:[%s346 + $0x40] sm:$0xff]
        %v436 = vld [vmem:[%s346 + $0x48] sm:$0xff]
        %v437 = vld [vmem:[%s346 + $0x50] sm:$0xff]
        %v438 = vld [vmem:[%s346 + $0x58] sm:$0xff]
        %v439 = vld [vmem:[%s346 + $0x60] sm:$0xff]
        %v440 = vld [vmem:[%s346 + $0x68] sm:$0xff]
        %v441 = vld [vmem:[%s346 + $0x70] sm:$0xff]
        %v442 = vld [vmem:[%s346 + $0x78] sm:$0xff]
        %v443 = vld [vmem:[%s346 + $0x80] sm:$0xff]
        %v444 = vld [vmem:[%s346 + $0x88] sm:$0xff]
        %v445 = vld [vmem:[%s346 + $0x90] sm:$0xff]
        %v446 = vld [vmem:[%s346 + $0x98] sm:$0xff]
        %v447 = vld [vmem:[%s346 + $0xa0] sm:$0xff]
        %v448 = vld [vmem:[%s346 + $0xa8] sm:$0xff]
        %v449 = vld [vmem:[%s346 + $0xb0] sm:$0xff]
        %v450 = vld [vmem:[%s346 + $0xb8] sm:$0xff]
        %v451 = vld [vmem:[%s346 + $0xc0] sm:$0xff]
        %v452 = vld [vmem:[%s346 + $0xc8] sm:$0xff]
        %v453 = vld [vmem:[%s346 + $0xd0] sm:$0xff]
        %v454 = vld [vmem:[%s346 + $0xd8] sm:$0xff]
        %v455 = vld [vmem:[%s346 + $0xe0] sm:$0xff]
        %v456 = vld [vmem:[%s346 + $0xe8] sm:$0xff]
        %v457 = vld [vmem:[%s346 + $0xf0] sm:$0xff]
        %v458 = vld [vmem:[%s346 + $0xf8] sm:$0xff]
        %v459 = vld [vmem:[%s346 + $0x100] sm:$0xff]
        %v460 = vld [vmem:[%s346 + $0x108] sm:$0xff]
        %v461 = vld [vmem:[%s346 + $0x110] sm:$0xff]
        %v462 = vld [vmem:[%s346 + $0x118] sm:$0xff]
        %v463 = vld [vmem:[%s346 + $0x120] sm:$0xff]
        %v464 = vld [vmem:[%s346 + $0x128] sm:$0xff]
        %v465 = vld [vmem:[%s346 + $0x130] sm:$0xff]
        %v466 = vld [vmem:[%s346 + $0x138] sm:$0xff]
        %v467 = vld [vmem:[%s346 + $0x140] sm:$0xff]
        %v468 = vld [vmem:[%s346 + $0x148] sm:$0xff]
        %v469 = vld [vmem:[%s346 + $0x150] sm:$0xff]
        %v470 = vld [vmem:[%s346 + $0x158] sm:$0xff]
        %v471 = vld [vmem:[%s346 + $0x160] sm:$0xff]
        %v472 = vld [vmem:[%s346 + $0x168] sm:$0xff]
        %v473 = vld [vmem:[%s346 + $0x170] sm:$0xff]
        %v474 = vld [vmem:[%s346 + $0x178] sm:$0xff]
        %v475 = vld [vmem:[%s346 + $0x180] sm:$0xff]
        %v476 = vld [vmem:[%s346 + $0x188] sm:$0xff]
        %v477 = vld [vmem:[%s346 + $0x190] sm:$0xff]
        %v478 = vld [vmem:[%s346 + $0x198] sm:$0xff]
        %v479 = vld [vmem:[%s346 + $0x1a0] sm:$0xff]
        %v480 = vld [vmem:[%s346 + $0x1a8] sm:$0xff]
        %v481 = vld [vmem:[%s346 + $0x1b0] sm:$0xff]
        %v482 = vld [vmem:[%s346 + $0x1b8] sm:$0xff]
        %v483 = vld [vmem:[%s346 + $0x1c0] sm:$0xff]
        %v484 = vld [vmem:[%s346 + $0x1c8] sm:$0xff]
        %v485 = vld [vmem:[%s346 + $0x1d0] sm:$0xff]
        %v486 = vld [vmem:[%s346 + $0x1d8] sm:$0xff]
        %v487 = vld [vmem:[%s346 + $0x1e0] sm:$0xff]
        %v488 = vld [vmem:[%s346 + $0x1e8] sm:$0xff]
        %v489 = vld [vmem:[%s346 + $0x1f0] sm:$0xff]
        %v490 = vld [vmem:[%s346 + $0x1f8] sm:$0xff]
        %v555 = vunpack.c.l.b16 %v427
        %v556 = vunpack.c.h.b16 %v427
        %v557 = vunpack.c.l.b16 %v428
        %v558 = vunpack.c.h.b16 %v428
        %v559 = vunpack.c.l.b16 %v429
        %v560 = vunpack.c.h.b16 %v429
        %v561 = vunpack.c.l.b16 %v430
        %v562 = vunpack.c.h.b16 %v430
        %v563 = vunpack.c.l.b16 %v431
        %v564 = vunpack.c.h.b16 %v431
        %v565 = vunpack.c.l.b16 %v432
        %v566 = vunpack.c.h.b16 %v432
        %v567 = vunpack.c.l.b16 %v433
        %v568 = vunpack.c.h.b16 %v433
        %v569 = vunpack.c.l.b16 %v434
        %v570 = vunpack.c.h.b16 %v434
        %v571 = vunpack.c.l.b16 %v435
        %v572 = vunpack.c.h.b16 %v435
        %v573 = vunpack.c.l.b16 %v436
        %v574 = vunpack.c.h.b16 %v436
        %v575 = vunpack.c.l.b16 %v437
        %v576 = vunpack.c.h.b16 %v437
        %v577 = vunpack.c.l.b16 %v438
        %v578 = vunpack.c.h.b16 %v438
        %v579 = vunpack.c.l.b16 %v439
        %v580 = vunpack.c.h.b16 %v439
        %v581 = vunpack.c.l.b16 %v440
        %v582 = vunpack.c.h.b16 %v440
        %v583 = vunpack.c.l.b16 %v441
        %v584 = vunpack.c.h.b16 %v441
        %v585 = vunpack.c.l.b16 %v442
        %v586 = vunpack.c.h.b16 %v442
        %v587 = vunpack.c.l.b16 %v443
        %v588 = vunpack.c.h.b16 %v443
        %v589 = vunpack.c.l.b16 %v444
        %v590 = vunpack.c.h.b16 %v444
        %v591 = vunpack.c.l.b16 %v445
        %v592 = vunpack.c.h.b16 %v445
        %v593 = vunpack.c.l.b16 %v446
        %v594 = vunpack.c.h.b16 %v446
        %v595 = vunpack.c.l.b16 %v447
        %v596 = vunpack.c.h.b16 %v447
        %v597 = vunpack.c.l.b16 %v448
        %v598 = vunpack.c.h.b16 %v448
        %v599 = vunpack.c.l.b16 %v449
        %v600 = vunpack.c.h.b16 %v449
        %v601 = vunpack.c.l.b16 %v450
        %v602 = vunpack.c.h.b16 %v450
        %v603 = vunpack.c.l.b16 %v451
        %v604 = vunpack.c.h.b16 %v451
        %v605 = vunpack.c.l.b16 %v452
        %v606 = vunpack.c.h.b16 %v452
        %v607 = vunpack.c.l.b16 %v453
        %v608 = vunpack.c.h.b16 %v453
        %v609 = vunpack.c.l.b16 %v454
        %v610 = vunpack.c.h.b16 %v454
        %v611 = vunpack.c.l.b16 %v455
        %v612 = vunpack.c.h.b16 %v455
        %v613 = vunpack.c.l.b16 %v456
        %v614 = vunpack.c.h.b16 %v456
        %v615 = vunpack.c.l.b16 %v457
        %v616 = vunpack.c.h.b16 %v457
        %v617 = vunpack.c.l.b16 %v458
        %v618 = vunpack.c.h.b16 %v458
        %v619 = vunpack.c.l.b16 %v459
        %v620 = vunpack.c.h.b16 %v459
        %v621 = vunpack.c.l.b16 %v460
        %v622 = vunpack.c.h.b16 %v460
        %v623 = vunpack.c.l.b16 %v461
        %v624 = vunpack.c.h.b16 %v461
        %v625 = vunpack.c.l.b16 %v462
        %v626 = vunpack.c.h.b16 %v462
        %v627 = vunpack.c.l.b16 %v463
        %v628 = vunpack.c.h.b16 %v463
        %v629 = vunpack.c.l.b16 %v464
        %v630 = vunpack.c.h.b16 %v464
        %v631 = vunpack.c.l.b16 %v465
        %v632 = vunpack.c.h.b16 %v465
        %v633 = vunpack.c.l.b16 %v466
        %v634 = vunpack.c.h.b16 %v466
        %v635 = vunpack.c.l.b16 %v467
        %v636 = vunpack.c.h.b16 %v467
        %v637 = vunpack.c.l.b16 %v468
        %v638 = vunpack.c.h.b16 %v468
        %v639 = vunpack.c.l.b16 %v469
        %v640 = vunpack.c.h.b16 %v469
        %v641 = vunpack.c.l.b16 %v470
        %v642 = vunpack.c.h.b16 %v470
        %v643 = vunpack.c.l.b16 %v471
        %v644 = vunpack.c.h.b16 %v471
        %v645 = vunpack.c.l.b16 %v472
        %v646 = vunpack.c.h.b16 %v472
        %v647 = vunpack.c.l.b16 %v473
        %v648 = vunpack.c.h.b16 %v473
        %v649 = vunpack.c.l.b16 %v474
        %v650 = vunpack.c.h.b16 %v474
        %v651 = vunpack.c.l.b16 %v475
        %v652 = vunpack.c.h.b16 %v475
        %v653 = vunpack.c.l.b16 %v476
        %v654 = vunpack.c.h.b16 %v476
        %v655 = vunpack.c.l.b16 %v477
        %v656 = vunpack.c.h.b16 %v477
        %v657 = vunpack.c.l.b16 %v478
        %v658 = vunpack.c.h.b16 %v478
        %v659 = vunpack.c.l.b16 %v479
        %v660 = vunpack.c.h.b16 %v479
        %v661 = vunpack.c.l.b16 %v480
        %v662 = vunpack.c.h.b16 %v480
        %v663 = vunpack.c.l.b16 %v481
        %v664 = vunpack.c.h.b16 %v481
        %v665 = vunpack.c.l.b16 %v482
        %v666 = vunpack.c.h.b16 %v482
        %v667 = vunpack.c.l.b16 %v483
        %v668 = vunpack.c.h.b16 %v483
        %v669 = vunpack.c.l.b16 %v484
        %v670 = vunpack.c.h.b16 %v484
        %v671 = vunpack.c.l.b16 %v485
        %v672 = vunpack.c.h.b16 %v485
        %v673 = vunpack.c.l.b16 %v486
        %v674 = vunpack.c.h.b16 %v486
        %v675 = vunpack.c.l.b16 %v487
        %v676 = vunpack.c.h.b16 %v487
        %v677 = vunpack.c.l.b16 %v488
        %v678 = vunpack.c.h.b16 %v488
        %v679 = vunpack.c.l.b16 %v489
        %v680 = vunpack.c.h.b16 %v489
        %v681 = vunpack.c.l.b16 %v490
        %v682 = vunpack.c.h.b16 %v490
        %v683 = vpack.c.b16 %v559, %v555
        %v684 = vpack.c.b16 %v560, %v556
        %v685 = vpack.c.b16 %v561, %v557
        %v686 = vpack.c.b16 %v562, %v558
        %v687 = vpack.c.b16 %v567, %v563
        %v688 = vpack.c.b16 %v568, %v564
        %v689 = vpack.c.b16 %v569, %v565
        %v690 = vpack.c.b16 %v570, %v566
        %v691 = vpack.c.b16 %v575, %v571
        %v692 = vpack.c.b16 %v576, %v572
        %v693 = vpack.c.b16 %v577, %v573
        %v694 = vpack.c.b16 %v578, %v574
        %v695 = vpack.c.b16 %v583, %v579
        %v696 = vpack.c.b16 %v584, %v580
        %v697 = vpack.c.b16 %v585, %v581
        %v698 = vpack.c.b16 %v586, %v582
        %v699 = vpack.c.b16 %v591, %v587
        %v700 = vpack.c.b16 %v592, %v588
        %v701 = vpack.c.b16 %v593, %v589
        %v702 = vpack.c.b16 %v594, %v590
        %v703 = vpack.c.b16 %v599, %v595
        %v704 = vpack.c.b16 %v600, %v596
        %v705 = vpack.c.b16 %v601, %v597
        %v706 = vpack.c.b16 %v602, %v598
        %v707 = vpack.c.b16 %v607, %v603
        %v708 = vpack.c.b16 %v608, %v604
        %v709 = vpack.c.b16 %v609, %v605
        %v710 = vpack.c.b16 %v610, %v606
        %v711 = vpack.c.b16 %v615, %v611
        %v712 = vpack.c.b16 %v616, %v612
        %v713 = vpack.c.b16 %v617, %v613
        %v714 = vpack.c.b16 %v618, %v614
        %v715 = vpack.c.b16 %v623, %v619
        %v716 = vpack.c.b16 %v624, %v620
        %v717 = vpack.c.b16 %v625, %v621
        %v718 = vpack.c.b16 %v626, %v622
        %v719 = vpack.c.b16 %v631, %v627
        %v720 = vpack.c.b16 %v632, %v628
        %v721 = vpack.c.b16 %v633, %v629
        %v722 = vpack.c.b16 %v634, %v630
        %v723 = vpack.c.b16 %v639, %v635
        %v724 = vpack.c.b16 %v640, %v636
        %v725 = vpack.c.b16 %v641, %v637
        %v726 = vpack.c.b16 %v642, %v638
        %v727 = vpack.c.b16 %v647, %v643
        %v728 = vpack.c.b16 %v648, %v644
        %v729 = vpack.c.b16 %v649, %v645
        %v730 = vpack.c.b16 %v650, %v646
        %v731 = vpack.c.b16 %v655, %v651
        %v732 = vpack.c.b16 %v656, %v652
        %v733 = vpack.c.b16 %v657, %v653
        %v734 = vpack.c.b16 %v658, %v654
        %v735 = vpack.c.b16 %v663, %v659
        %v736 = vpack.c.b16 %v664, %v660
        %v737 = vpack.c.b16 %v665, %v661
        %v738 = vpack.c.b16 %v666, %v662
        %v739 = vpack.c.b16 %v671, %v667
        %v740 = vpack.c.b16 %v672, %v668
        %v741 = vpack.c.b16 %v673, %v669
        %v742 = vpack.c.b16 %v674, %v670
        %v743 = vpack.c.b16 %v679, %v675
        %v744 = vpack.c.b16 %v680, %v676
        %v745 = vpack.c.b16 %v681, %v677
        %v746 = vpack.c.b16 %v682, %v678
        %811 = vmatpush.bf16.msra.mxu0 %v711
        %812 = vmatpush.bf16.msra.mxu0 %v707
        %813 = vmatpush.bf16.msra.mxu0 %v703
        %814 = vmatpush.bf16.msra.mxu0 %v699
        %815 = vmatpush.bf16.msra.mxu0 %v695
        %816 = vmatpush.bf16.msra.mxu0 %v691
        %817 = vmatpush.bf16.msra.mxu0 %v687
        %818 = vmatpush.bf16.msra.mxu0 %v683
        %819 = vmatmul.bf16.gmra.mxu0 %v425
        %v820 = vpop.f32.mrf.mxu0
        %v821 = vadd.f32 0.0, %v820
        %v822 = vpop.f32.mrf.mxu0
        %v823 = vadd.f32 0.0, %v822
        %824 = vdwg.mxu0
        %825 = vmatpush.bf16.msra.mxu0 %v743
        %826 = vmatpush.bf16.msra.mxu0 %v739
        %827 = vmatpush.bf16.msra.mxu0 %v735
        %828 = vmatpush.bf16.msra.mxu0 %v731
        %829 = vmatpush.bf16.msra.mxu0 %v727
        %830 = vmatpush.bf16.msra.mxu0 %v723
        %831 = vmatpush.bf16.msra.mxu0 %v719
        %832 = vmatpush.bf16.msra.mxu0 %v715
        %833 = vmatmul.bf16.gmra.mxu0 %v426
        %v834 = vpop.f32.mrf.mxu0
        %v835 = vadd.f32 %v821, %v834
        %v836 = vpop.f32.mrf.mxu0
        %v837 = vadd.f32 %v823, %v836
        %838 = vdwg.mxu0
        %839 = vmatpush.bf16.msra.mxu0 %v712
        %840 = vmatpush.bf16.msra.mxu0 %v708
        %841 = vmatpush.bf16.msra.mxu0 %v704
        %842 = vmatpush.bf16.msra.mxu0 %v700
        %843 = vmatpush.bf16.msra.mxu0 %v696
        %844 = vmatpush.bf16.msra.mxu0 %v692
        %845 = vmatpush.bf16.msra.mxu0 %v688
        %846 = vmatpush.bf16.msra.mxu0 %v684
        %847 = vmatmul.bf16.gmra.mxu0 %v425
        %v848 = vpop.f32.mrf.mxu0
        %v849 = vadd.f32 0.0, %v848
        %v850 = vpop.f32.mrf.mxu0
        %v851 = vadd.f32 0.0, %v850
        %852 = vdwg.mxu0
        %853 = vmatpush.bf16.msra.mxu0 %v744
        %854 = vmatpush.bf16.msra.mxu0 %v740
        %855 = vmatpush.bf16.msra.mxu0 %v736
        %856 = vmatpush.bf16.msra.mxu0 %v732
        %857 = vmatpush.bf16.msra.mxu0 %v728
        %858 = vmatpush.bf16.msra.mxu0 %v724
        %859 = vmatpush.bf16.msra.mxu0 %v720
        %860 = vmatpush.bf16.msra.mxu0 %v716
        %861 = vmatmul.bf16.gmra.mxu0 %v426
        %v862 = vpop.f32.mrf.mxu0
        %v863 = vadd.f32 %v849, %v862
        %v864 = vpop.f32.mrf.mxu0
        %v865 = vadd.f32 %v851, %v864
        %866 = vdwg.mxu0
        %867 = vmatpush.bf16.msra.mxu0 %v713
        %868 = vmatpush.bf16.msra.mxu0 %v709
        %869 = vmatpush.bf16.msra.mxu0 %v705
        %870 = vmatpush.bf16.msra.mxu0 %v701
        %871 = vmatpush.bf16.msra.mxu0 %v697
        %872 = vmatpush.bf16.msra.mxu0 %v693
        %873 = vmatpush.bf16.msra.mxu0 %v689
        %874 = vmatpush.bf16.msra.mxu0 %v685
        %875 = vmatmul.bf16.gmra.mxu0 %v425
        %v876 = vpop.f32.mrf.mxu0
        %v877 = vadd.f32 0.0, %v876
        %v878 = vpop.f32.mrf.mxu0
        %v879 = vadd.f32 0.0, %v878
        %880 = vdwg.mxu0
        %881 = vmatpush.bf16.msra.mxu0 %v745
        %882 = vmatpush.bf16.msra.mxu0 %v741
        %883 = vmatpush.bf16.msra.mxu0 %v737
        %884 = vmatpush.bf16.msra.mxu0 %v733
        %885 = vmatpush.bf16.msra.mxu0 %v729
        %886 = vmatpush.bf16.msra.mxu0 %v725
        %887 = vmatpush.bf16.msra.mxu0 %v721
        %888 = vmatpush.bf16.msra.mxu0 %v717
        %889 = vmatmul.bf16.gmra.mxu0 %v426
        %v890 = vpop.f32.mrf.mxu0
        %v891 = vadd.f32 %v877, %v890
        %v892 = vpop.f32.mrf.mxu0
        %v893 = vadd.f32 %v879, %v892
        %894 = vdwg.mxu0
        %895 = vmatpush.bf16.msra.mxu0 %v714
        %896 = vmatpush.bf16.msra.mxu0 %v710
        %897 = vmatpush.bf16.msra.mxu0 %v706
        %898 = vmatpush.bf16.msra.mxu0 %v702
        %899 = vmatpush.bf16.msra.mxu0 %v698
        %900 = vmatpush.bf16.msra.mxu0 %v694
        %901 = vmatpush.bf16.msra.mxu0 %v690
        %902 = vmatpush.bf16.msra.mxu0 %v686
        %903 = vmatmul.bf16.gmra.mxu0 %v425
        %v904 = vpop.f32.mrf.mxu0
        %v905 = vadd.f32 0.0, %v904
        %v906 = vpop.f32.mrf.mxu0
        %v907 = vadd.f32 0.0, %v906
        %908 = vdwg.mxu0
        %909 = vmatpush.bf16.msra.mxu0 %v746
        %910 = vmatpush.bf16.msra.mxu0 %v742
        %911 = vmatpush.bf16.msra.mxu0 %v738
        %912 = vmatpush.bf16.msra.mxu0 %v734
        %913 = vmatpush.bf16.msra.mxu0 %v730
        %914 = vmatpush.bf16.msra.mxu0 %v726
        %915 = vmatpush.bf16.msra.mxu0 %v722
        %916 = vmatpush.bf16.msra.mxu0 %v718
        %917 = vmatmul.bf16.gmra.mxu0 %v426
        %v918 = vpop.f32.mrf.mxu0
        %v919 = vadd.f32 %v905, %v918
        %v920 = vpop.f32.mrf.mxu0
        %v921 = vadd.f32 %v907, %v920
        %922 = vdwg.mxu0
        %v923 = vadd.f32 %v413, %v835
        %v924 = vadd.f32 %v414, %v863
        %v925 = vadd.f32 %v415, %v891
        %v926 = vadd.f32 %v416, %v919
        %v927 = vadd.f32 %v417, %v837
        %v928 = vadd.f32 %v418, %v865
        %v929 = vadd.f32 %v419, %v893
        %v930 = vadd.f32 %v420, %v921
        %931 = vst [vmem:[#allocation2] sm:$0xff] %v923
        %932 = vst [vmem:[#allocation2 + $0x8] sm:$0xff] %v924
        %933 = vst [vmem:[#allocation2 + $0x10] sm:$0xff] %v925
        %934 = vst [vmem:[#allocation2 + $0x18] sm:$0xff] %v926
        %935 = vst [vmem:[#allocation2 + $0x20] sm:$0xff] %v927
        %936 = vst [vmem:[#allocation2 + $0x28] sm:$0xff] %v928
        %937 = vst [vmem:[#allocation2 + $0x30] sm:$0xff] %v929
        %938 = vst [vmem:[#allocation2 + $0x38] sm:$0xff] %v930
        // Predicated region
        $region60: #{_lambda_.9} parent=50 // pred_check
          %p939 = pneg %p401
        $region61: #{_lambda_.9} parent=50 // pred_check_branch
          %941 = sbr.rel (%p939) target = $region63
        $region62: #{_lambda_.9} parent=50 // pred_region
          %v942 = vld [vmem:[#allocation2] sm:$0xff]
          %v943 = vld [vmem:[#allocation2 + $0x8] sm:$0xff]
          %v944 = vld [vmem:[#allocation2 + $0x10] sm:$0xff]
          %v945 = vld [vmem:[#allocation2 + $0x18] sm:$0xff]
          %v946 = vld [vmem:[#allocation2 + $0x20] sm:$0xff]
          %v947 = vld [vmem:[#allocation2 + $0x28] sm:$0xff]
          %v948 = vld [vmem:[#allocation2 + $0x30] sm:$0xff]
          %v949 = vld [vmem:[#allocation2 + $0x38] sm:$0xff]
          %v950 = vld [vmem:[%s397] sm:$0xf]
          %v952 = vperm.slane %v950, 0
          %v953 = vperm.slane %v950, 1
          %v954 = vperm.slane %v950, 2
          %v955 = vperm.slane %v950, 3
          %v960 = vadd.f32 %v942, %v952
          %v961 = vadd.f32 %v943, %v953
          %v962 = vadd.f32 %v944, %v954
          %v963 = vadd.f32 %v945, %v955
          %v964 = vadd.f32 %v946, %v952
          %v965 = vadd.f32 %v947, %v953
          %v966 = vadd.f32 %v948, %v954
          %v967 = vadd.f32 %v949, %v955
          %968 = vst [vmem:[%s379] sm:$0xff] %v960
          %969 = vst [vmem:[%s379 + $0x8] sm:$0xff] %v961
          %970 = vst [vmem:[%s379 + $0x10] sm:$0xff] %v962
          %971 = vst [vmem:[%s379 + $0x18] sm:$0xff] %v963
          %972 = vst [vmem:[%s379 + $0x20] sm:$0xff] %v964
          %973 = vst [vmem:[%s379 + $0x28] sm:$0xff] %v965
          %974 = vst [vmem:[%s379 + $0x30] sm:$0xff] %v966
          %975 = vst [vmem:[%s379 + $0x38] sm:$0xff] %v967
        $region63: #{_lambda_.9} parent=50 // pred_fallthru
          _
        %s976 = sand.u32 %s125, 1
        %s977 = sand.u32 %s125, 1
        %s978 = smul.addr %s977, 64
        %s979 = scalar_lea.vmem [#allocation4], %s978
        // Predicated region
        $region64: #{_lambda_.9} parent=50 // pred_check
          %p980 = pneg %p135
        $region65: #{_lambda_.9} parent=50 // pred_check_branch
          %982 = sbr.rel (%p980) target = $region67
        $region66: #{_lambda_.9} parent=50 // pred_region
          %s983 = smul.u32 2, %s19
          %s984 = smul.u32 4, %s20
          %s985 = smul.addr %s983, 8
          %s986 = sadd.s32 %s984, %s985
          %s987 = smul.addr %s986, 8
          %s988 = scalar_lea.vmem %s3, %s987
          // Predicated region
          $region68: #{_lambda_.9} parent=66 // pred_check
            _
          $region69: #{_lambda_.9} parent=66 // pred_check_branch
            %990 = sbr.rel (0) target = $region71
          $region70: #{_lambda_.9} parent=66 // pred_region
            // Predicated region
            $region72: #{_lambda_.9} parent=70 // pred_check
              _
            $region73: #{_lambda_.9} parent=70 // pred_check_branch
              %992 = sbr.rel (0) target = $region75
            $region74: #{_lambda_.9} parent=70 // pred_region
              loop: start=0, step=1, limit=1
              $region76: #{_lambda_.9} parent=74 // loop_pre_header
                _
              $region77: #{_lambda_.9} parent=74 // loop_header
                %s994 = sphi 0, %s998
                %p995 = scmp.ge.s32.totalorder %s994, 1
                %s999 = sphi %s979, %s979
                %s1000 = sphi %s988, %s988
              $region78: #{_lambda_.9} parent=74 // loop_header_branch
                %997 = sbr.rel (%p995) target = $region82
              $region79: #{_lambda_.9} parent=74 // loop_body
                %v1001 = vld [vmem:[%s999] sm:$0xff]
                %1002 = vst [vmem:[%s1000] sm:$0xff] %v1001
                %v1003 = vld [vmem:[%s999 + $0x8] sm:$0xff]
                %1004 = vst [vmem:[%s1000 + $0x8] sm:$0xff] %v1003
                %v1005 = vld [vmem:[%s999 + $0x10] sm:$0xff]
                %1006 = vst [vmem:[%s1000 + $0x10] sm:$0xff] %v1005
                %v1007 = vld [vmem:[%s999 + $0x18] sm:$0xff]
                %1008 = vst [vmem:[%s1000 + $0x18] sm:$0xff] %v1007
                %v1009 = vld [vmem:[%s999 + $0x20] sm:$0xff]
                %1010 = vst [vmem:[%s1000 + $0x40] sm:$0xff] %v1009
                %v1011 = vld [vmem:[%s999 + $0x28] sm:$0xff]
                %1012 = vst [vmem:[%s1000 + $0x48] sm:$0xff] %v1011
                %v1013 = vld [vmem:[%s999 + $0x30] sm:$0xff]
                %1014 = vst [vmem:[%s1000 + $0x50] sm:$0xff] %v1013
                %v1015 = vld [vmem:[%s999 + $0x38] sm:$0xff]
                %1016 = vst [vmem:[%s1000 + $0x58] sm:$0xff] %v1015
              $region80: #{_lambda_.9} parent=74 // loop_footer
                %s998 = sadd.s32 1, %s994
              $region81: #{_lambda_.9} parent=74 // loop_footer_branch
                %993 = sbr.rel target = $region77
              $region82: #{_lambda_.9} parent=74 // loop_exit
                _
            $region75: #{_lambda_.9} parent=70 // pred_fallthru
              _
            // Predicated region
            $region83: #{_lambda_.9} parent=70 // pred_check
              _
            $region84: #{_lambda_.9} parent=70 // pred_check_branch
              %1018 = sbr.rel target = $region86
            $region85: #{_lambda_.9} parent=70 // pred_region
              _
            $region86: #{_lambda_.9} parent=70 // pred_fallthru
              _
          $region71: #{_lambda_.9} parent=66 // pred_fallthru
            _
          %1019 = vnop
        $region67: #{_lambda_.9} parent=50 // pred_fallthru
          _
      $region51: #{_lambda_.9} parent=5 // pred_fallthru
        _
      %p1020 = scmp.le.s32.totalorder 2, %s9
      // Predicated region
      $region87: #{_lambda_.9} parent=5 // pred_check
        %p1021 = pneg %p1020
      $region88: #{_lambda_.9} parent=5 // pred_check_branch
        %1023 = sbr.rel (%p1021) target = $region90
      $region89: #{_lambda_.9} parent=5 // pred_region
        %s1024 = ssub.s32 %s9, 2
        // Predicated region
        $region91: #{_lambda_.9} parent=89 // pred_check
          %p1025 = pneg %p141
        $region92: #{_lambda_.9} parent=89 // pred_check_branch
          %1027 = sbr.rel (%p1025) target = $region94
        $region93: #{_lambda_.9} parent=89 // pred_region
          %s1028 = sand.u32 %s126, 1
          %s1029 = sand.u32 %s126, 1
          %s1030 = smul.addr %s1029, 64
          %s1031 = scalar_lea.vmem [#allocation4], %s1030
        $region94: #{_lambda_.9} parent=89 // pred_fallthru
          _
      $region90: #{_lambda_.9} parent=5 // pred_fallthru
        _
    $region6: #{_lambda_.9} parent=1 // loop_footer
      %s13 = sadd.s32 1, %s9
    $region7: #{_lambda_.9} parent=1 // loop_footer_branch
      %8 = sbr.rel target = $region3
    $region8: #{_lambda_.9} parent=1 // loop_exit
      _

// kernel: _lambda_.11
$region0: #{_lambda_.11}
  #allocation0 [shape = 'u32[]', space=smem, size = 0x4, offset = 0x4, fixed_abs, tag = 'smem constant byte address 0x4 - core index']
  #allocation1 [shape = 'u32[72,128]{1,0:T(1,128)}', space=vmem, size = 0x9000, scoped, tag = 'internal scratch']
  #allocation2 [shape = 'f32[2,8]{1,0:T(2,128)}', space=vmem, size = 0x400, scoped, tag = 'scratch operand']
  %s0 = inlined_call_operand.vmem [shape: f32[2,256], index: 0, kind: input, shape index: {}]
  %s1 = inlined_call_operand.vmem [shape: bf16[256,8], index: 1, kind: input, shape index: {}]
  %s2 = inlined_call_operand.vmem [shape: f32[1,8], index: 2, kind: input, shape index: {}]
  %s3 = inlined_call_operand.hbm [shape: f32[2,8], index: 3, kind: output, shape index: {}]
  %s4 = sld [smem:[#allocation0]]
  $region30: #{_lambda_.11} parent=0
    _
  %s6 = ssub.s32 1, %s4
  %s7 = scalar_select 0, %s6, %s4
  $region1: #{_lambda_.11} parent=0
    #allocation3 [shape = 'u8[1024]{0}', space=vmem, size = 0x400, scoped, tag = 'output window, operand 0, single buffered']
    #allocation4 [shape = 's32[1]{0}', space=sflag, size = 0x4, scoped, tag = 'scoped memory for _lambda_.11']
    %8 = vsyncpa [#allocation4], 0
    // Predicated region
    $region2: #{_lambda_.11} parent=1 // pred_check
      _
    $region3: #{_lambda_.11} parent=1 // pred_check_branch
      %10 = sbr.rel (0) target = $region5
    $region4: #{_lambda_.11} parent=1 // pred_region
      _
    $region5: #{_lambda_.11} parent=1 // pred_fallthru
      _
    // Predicated region
    $region6: #{_lambda_.11} parent=1 // pred_check
      _
    $region7: #{_lambda_.11} parent=1 // pred_check_branch
      %12 = sbr.rel (0) target = $region9
    $region8: #{_lambda_.11} parent=1 // pred_region
      _
    $region9: #{_lambda_.11} parent=1 // pred_fallthru
      _
    // Predicated region
    $region10: #{_lambda_.11} parent=1 // pred_check
      _
    $region11: #{_lambda_.11} parent=1 // pred_check_branch
      %14 = sbr.rel (0) target = $region13
    $region12: #{_lambda_.11} parent=1 // pred_region
      _
    $region13: #{_lambda_.11} parent=1 // pred_fallthru
      _
    %p15 = scmp.eq.s32.totalorder 0, 0
    // Predicated region
    $region14: #{_lambda_.11} parent=1 // pred_check
      %p16 = pneg %p15
    $region15: #{_lambda_.11} parent=1 // pred_check_branch
      %18 = sbr.rel (%p16) target = $region17
    $region16: #{_lambda_.11} parent=1 // pred_region
      %vm19 = vcmask 58368
      %20 = vst.msk [vmem:[#allocation2] sm:$0x3] %vm19, 0.0
    $region17: #{_lambda_.11} parent=1 // pred_fallthru
      _
    %v21 = vld [vmem:[#allocation2] sm:$0x3]
    %v22 = vld [vmem:[%s0] sm:$0xf]
    %24 = vst [vmem:[#allocation1] ss:$4 sm:$0xff] %v22
    %v25 = vld.sshfl [vmem:[#allocation1] sm:$0xff pattern:$0x73625140]
    %v26 = vld.sshfl [vmem:[#allocation1 + $0x8] sm:$0xff pattern:$0x73625140]
    %v29 = vpack.c.bf16 %v25, %v25
    %v30 = vpack.c.bf16 %v26, %v26
    %v31 = vld [vmem:[%s1] sm:$0xf]
    %v32 = vld [vmem:[%s1 + $0x4] sm:$0xf]
    %v33 = vld [vmem:[%s1 + $0x8] sm:$0xf]
    %v34 = vld [vmem:[%s1 + $0xc] sm:$0xf]
    %v35 = vld [vmem:[%s1 + $0x10] sm:$0xf]
    %v36 = vld [vmem:[%s1 + $0x14] sm:$0xf]
    %v37 = vld [vmem:[%s1 + $0x18] sm:$0xf]
    %v38 = vld [vmem:[%s1 + $0x1c] sm:$0xf]
    %v39 = vld [vmem:[%s1 + $0x20] sm:$0xf]
    %v40 = vld [vmem:[%s1 + $0x24] sm:$0xf]
    %v41 = vld [vmem:[%s1 + $0x28] sm:$0xf]
    %v42 = vld [vmem:[%s1 + $0x2c] sm:$0xf]
    %v43 = vld [vmem:[%s1 + $0x30] sm:$0xf]
    %v44 = vld [vmem:[%s1 + $0x34] sm:$0xf]
    %v45 = vld [vmem:[%s1 + $0x38] sm:$0xf]
    %v46 = vld [vmem:[%s1 + $0x3c] sm:$0xf]
    %v47 = vld [vmem:[%s1 + $0x40] sm:$0xf]
    %v48 = vld [vmem:[%s1 + $0x44] sm:$0xf]
    %v49 = vld [vmem:[%s1 + $0x48] sm:$0xf]
    %v50 = vld [vmem:[%s1 + $0x4c] sm:$0xf]
    %v51 = vld [vmem:[%s1 + $0x50] sm:$0xf]
    %v52 = vld [vmem:[%s1 + $0x54] sm:$0xf]
    %v53 = vld [vmem:[%s1 + $0x58] sm:$0xf]
    %v54 = vld [vmem:[%s1 + $0x5c] sm:$0xf]
    %v55 = vld [vmem:[%s1 + $0x60] sm:$0xf]
    %v56 = vld [vmem:[%s1 + $0x64] sm:$0xf]
    %v57 = vld [vmem:[%s1 + $0x68] sm:$0xf]
    %v58 = vld [vmem:[%s1 + $0x6c] sm:$0xf]
    %v59 = vld [vmem:[%s1 + $0x70] sm:$0xf]
    %v60 = vld [vmem:[%s1 + $0x74] sm:$0xf]
    %v61 = vld [vmem:[%s1 + $0x78] sm:$0xf]
    %v62 = vld [vmem:[%s1 + $0x7c] sm:$0xf]
    %v95 = vunpack.c.l.b16 %v31
    %v96 = vunpack.c.l.b16 %v32
    %v97 = vunpack.c.l.b16 %v33
    %v98 = vunpack.c.l.b16 %v34
    %v99 = vunpack.c.l.b16 %v35
    %v100 = vunpack.c.l.b16 %v36
    %v101 = vunpack.c.l.b16 %v37
    %v102 = vunpack.c.l.b16 %v38
    %v103 = vunpack.c.l.b16 %v39
    %v104 = vunpack.c.l.b16 %v40
    %v105 = vunpack.c.l.b16 %v41
    %v106 = vunpack.c.l.b16 %v42
    %v107 = vunpack.c.l.b16 %v43
    %v108 = vunpack.c.l.b16 %v44
    %v109 = vunpack.c.l.b16 %v45
    %v110 = vunpack.c.l.b16 %v46
    %v111 = vunpack.c.l.b16 %v47
    %v112 = vunpack.c.l.b16 %v48
    %v113 = vunpack.c.l.b16 %v49
    %v114 = vunpack.c.l.b16 %v50
    %v115 = vunpack.c.l.b16 %v51
    %v116 = vunpack.c.l.b16 %v52
    %v117 = vunpack.c.l.b16 %v53
    %v118 = vunpack.c.l.b16 %v54
    %v119 = vunpack.c.l.b16 %v55
    %v120 = vunpack.c.l.b16 %v56
    %v121 = vunpack.c.l.b16 %v57
    %v122 = vunpack.c.l.b16 %v58
    %v123 = vunpack.c.l.b16 %v59
    %v124 = vunpack.c.l.b16 %v60
    %v125 = vunpack.c.l.b16 %v61
    %v126 = vunpack.c.l.b16 %v62
    %v127 = vpack.c.b16 %v96, %v95
    %v128 = vpack.c.b16 %v98, %v97
    %v129 = vpack.c.b16 %v100, %v99
    %v130 = vpack.c.b16 %v102, %v101
    %v131 = vpack.c.b16 %v104, %v103
    %v132 = vpack.c.b16 %v106, %v105
    %v133 = vpack.c.b16 %v108, %v107
    %v134 = vpack.c.b16 %v110, %v109
    %v135 = vpack.c.b16 %v112, %v111
    %v136 = vpack.c.b16 %v114, %v113
    %v137 = vpack.c.b16 %v116, %v115
    %v138 = vpack.c.b16 %v118, %v117
    %v139 = vpack.c.b16 %v120, %v119
    %v140 = vpack.c.b16 %v122, %v121
    %v141 = vpack.c.b16 %v124, %v123
    %v142 = vpack.c.b16 %v126, %v125
    %159 = vmatpush.bf16.msra.mxu0 %v134
    %160 = vmatpush.bf16.msra.mxu0 %v133
    %161 = vmatpush.bf16.msra.mxu0 %v132
    %162 = vmatpush.bf16.msra.mxu0 %v131
    %163 = vmatpush.bf16.msra.mxu0 %v130
    %164 = vmatpush.bf16.msra.mxu0 %v129
    %165 = vmatpush.bf16.msra.mxu0 %v128
    %166 = vmatpush.bf16.msra.mxu0 %v127
    %167 = vmatmul.bf16.gmra.mxu0 %v29
    %v168 = vpop.f32.mrf.mxu0
    %v169 = vadd.f32 0.0, %v168
    %v170 = vpop.f32.mrf.mxu0
    %171 = vdwg.mxu0
    %172 = vmatpush.bf16.msra.mxu0 %v142
    %173 = vmatpush.bf16.msra.mxu0 %v141
    %174 = vmatpush.bf16.msra.mxu0 %v140
    %175 = vmatpush.bf16.msra.mxu0 %v139
    %176 = vmatpush.bf16.msra.mxu0 %v138
    %177 = vmatpush.bf16.msra.mxu0 %v137
    %178 = vmatpush.bf16.msra.mxu0 %v136
    %179 = vmatpush.bf16.msra.mxu0 %v135
    %180 = vmatmul.bf16.gmra.mxu0 %v30
    %v181 = vpop.f32.mrf.mxu0
    %v182 = vadd.f32 %v169, %v181
    %v183 = vpop.f32.mrf.mxu0
    %184 = vdwg.mxu0
    %v185 = vadd.f32 %v21, %v182
    %vm186 = vcmask 58368
    %187 = vst.msk [vmem:[#allocation2] sm:$0x3] %vm186, %v185
    // Predicated region
    $region18: #{_lambda_.11} parent=1 // pred_check
      %p188 = pneg %p15
    $region19: #{_lambda_.11} parent=1 // pred_check_branch
      %190 = sbr.rel (%p188) target = $region21
    $region20: #{_lambda_.11} parent=1 // pred_region
      %v191 = vld [vmem:[#allocation2] sm:$0x3]
      %v192 = vld [vmem:[%s2] sm:$0x1]
      %v194 = vperm.slane %v192, 0
      %v196 = vadd.f32 %v191, %v194
      %v197 = vsel %vm186, %v196, -inf
      %198 = vmax.xlane.f32.xlu0 %v197
      %v199 = vpop.xlane.xlu0 %198
      %v200 = vsub.f32 %v196, %v199
      %v201 = vmul.f32 %v200, 1.442695
      %v202 = vpow.pop %v201
      %v203 = vsel %vm186, %v202, 0.0
      %204 = vadd.xlane.f32.xlu0 %v203
      %v205 = vpop.xlane.xlu0 %204
      %v206 = vrcp.pop %v205
      %v207 = vmul.f32 %v205, %v206
      %v208 = vsub.f32 1.0, %v207
      %v209 = vmul.f32 %v206, %v208
      %v210 = vadd.f32 %v206, %v209
      %vm211 = vweird.f32 %v205
      %vm212 = vweird.f32 %v206
      %vm213 = vmor %vm211, %vm212
      %v214 = vsel %vm213, %v206, %v210
      %v215 = vand.u32 2147483647, %v205
      %vm216 = vcmp.eq.f32.partialorder %v215, 8.507059e+37
      %v217 = vand.u32 %v205, 2147483648
      %v218 = vor.u32 1.1754944e-38, %v217
      %v219 = vsel %vm216, %v218, %v214
      %v220 = vmul.f32 %v202, %v219
      %221 = vst.msk [vmem:[#allocation3] sm:$0x3] %vm186, %v220
    $region21: #{_lambda_.11} parent=1 // pred_fallthru
      _
    // Predicated region
    $region22: #{_lambda_.11} parent=1 // pred_check
      _
    $region23: #{_lambda_.11} parent=1 // pred_check_branch
      %223 = sbr.rel (0) target = $region25
    $region24: #{_lambda_.11} parent=1 // pred_region
      %225 = vsyncadd [#allocation4], 0
      %s227 = sshll.u32 [#allocation3], 4
      %s228 = int_to_ptr.vmem [resolvable:$true] %s227
      %s229 = sshll.u32 %s3, 4
      %s230 = int_to_ptr.hbm [resolvable:$true] %s229
      %232 = dma.vmem_to_hbm [thread:$0]  %s228, 32, %s230, [#allocation4]
    $region25: #{_lambda_.11} parent=1 // pred_fallthru
      _
    // Predicated region
    $region26: #{_lambda_.11} parent=1 // pred_check
      _
    $region27: #{_lambda_.11} parent=1 // pred_check_branch
      %234 = sbr.rel (0) target = $region29
    $region28: #{_lambda_.11} parent=1 // pred_region
      %236 = dma.done [#allocation4], 32
    $region29: #{_lambda_.11} parent=1 // pred_fallthru
      _
    %237 = vsyncpa [#allocation4], 1

// kernel: _lambda_.8
$region0: #{_lambda_.8}
  #allocation0 [shape = 'u32[]', space=smem, size = 0x4, offset = 0x4, fixed_abs, tag = 'smem constant byte address 0x4 - core index']
  #allocation1 [shape = 'u32[72,128]{1,0:T(1,128)}', space=vmem, size = 0x9000, scoped, tag = 'internal scratch']
  %s0 = inlined_call_operand.vmem [shape: f32[8,2,1024], index: 0, kind: input, shape index: {}]
  %s1 = inlined_call_operand.vmem [shape: bf16[2,128,512], index: 1, kind: input, shape index: {}]
  %s2 = inlined_call_operand.vmem [shape: f32[8,2,256], index: 2, kind: output, shape index: {}]
  %s3 = sld [smem:[#allocation0]]
  $region116: #{_lambda_.8} parent=0
    _
  %s5 = ssub.s32 1, %s3
  %s6 = scalar_select 0, %s5, %s3
  $region1: #{_lambda_.8} parent=0
    #allocation2 [shape = 'u8[65536]{0}', space=vmem, size = 0x10000, scoped, tag = 'input window, operand 0']
    #allocation3 [shape = 'u8[16384]{0}', space=vmem, size = 0x4000, scoped, tag = 'output window, operand 0']
    loop: start=0, step=1, limit=4
    $region2: #{_lambda_.8} parent=1 // loop_pre_header
      _
    $region3: #{_lambda_.8} parent=1 // loop_header
      %s8 = sphi 0, %s12
      %p9 = scmp.ge.s32.totalorder %s8, 4
      %s18 = sphi 0, %s20
      %s21 = sphi 0, %s18
      %s22 = sphi 0, %s21
      %s38 = sphi 0, %s22
      %s44 = sphi 0, %s46
      %s47 = sphi 0, %s44
      %s48 = sphi 0, %s47
      %s64 = sphi 0, %s48
      %s70 = sphi 0, %s72
      %s73 = sphi 0, %s70
      %s74 = sphi 0, %s73
      %s90 = sphi 0, %s74
    $region4: #{_lambda_.8} parent=1 // loop_header_branch
      %11 = sbr.rel (%p9) target = $region8
    $region5: #{_lambda_.8} parent=1 // loop_body
      %s13 = ssub.s32 %s8, 1
      %s14 = ssub.s32 %s8, 2
      %s15 = sadd.s32 %s8, 1
      %s16 = ssub.s32 %s8, %s15
      %p17 = scmp.eq.s32.totalorder %s16, 0
      %s19 = sadd.s32 %s18, 1
      %s20 = scalar_select %p17, %s18, %s19
      %p23 = pneg %p17
      %p24 = scmp.eq.s32.totalorder %s8, 1
      %p25 = por %p23, %p24
      %p26 = scmp.ne.s32.totalorder %s18, %s21
      %p27 = scmp.eq.s32.totalorder %s8, 0
      %p28 = por %p26, %p27
      %p29 = scmp.ne.s32.totalorder %s18, %s21
      %p30 = scmp.eq.s32.totalorder %s13, 1
      %p31 = por %p29, %p30
      %p32 = scmp.ne.s32.totalorder %s21, %s22
      %p33 = scmp.eq.s32.totalorder %s13, 0
      %p34 = por %p32, %p33
      %p35 = scmp.ne.s32.totalorder %s21, %s22
      %p36 = scmp.eq.s32.totalorder %s14, 1
      %p37 = por %p35, %p36
      %p39 = scmp.ne.s32.totalorder %s22, %s38
      %p40 = scmp.eq.s32.totalorder %s14, 0
      %p41 = por %p39, %p40
      %s42 = ssub.s32 %s8, %s15
      %p43 = scmp.eq.s32.totalorder %s42, 0
      %s45 = sadd.s32 %s44, 1
      %s46 = scalar_select %p43, %s44, %s45
      %p49 = pneg %p43
      %p50 = scmp.eq.s32.totalorder %s8, 1
      %p51 = por %p49, %p50
      %p52 = scmp.ne.s32.totalorder %s44, %s47
      %p53 = scmp.eq.s32.totalorder %s8, 0
      %p54 = por %p52, %p53
      %p55 = scmp.ne.s32.totalorder %s44, %s47
      %p56 = scmp.eq.s32.totalorder %s13, 1
      %p57 = por %p55, %p56
      %p58 = scmp.ne.s32.totalorder %s47, %s48
      %p59 = scmp.eq.s32.totalorder %s13, 0
      %p60 = por %p58, %p59
      %p61 = scmp.ne.s32.totalorder %s47, %s48
      %p62 = scmp.eq.s32.totalorder %s14, 1
      %p63 = por %p61, %p62
      %p65 = scmp.ne.s32.totalorder %s48, %s64
      %p66 = scmp.eq.s32.totalorder %s14, 0
      %p67 = por %p65, %p66
      %s68 = ssub.s32 %s8, %s15
      %p69 = scmp.eq.s32.totalorder %s68, 0
      %s71 = sadd.s32 %s70, 1
      %s72 = scalar_select %p69, %s70, %s71
      %p75 = pneg %p69
      %p76 = scmp.eq.s32.totalorder %s8, 1
      %p77 = por %p75, %p76
      %p78 = scmp.ne.s32.totalorder %s70, %s73
      %p79 = scmp.eq.s32.totalorder %s8, 0
      %p80 = por %p78, %p79
      %p81 = scmp.ne.s32.totalorder %s70, %s73
      %p82 = scmp.eq.s32.totalorder %s13, 1
      %p83 = por %p81, %p82
      %p84 = scmp.ne.s32.totalorder %s73, %s74
      %p85 = scmp.eq.s32.totalorder %s13, 0
      %p86 = por %p84, %p85
      %p87 = scmp.ne.s32.totalorder %s73, %s74
      %p88 = scmp.eq.s32.totalorder %s14, 1
      %p89 = por %p87, %p88
      %p91 = scmp.ne.s32.totalorder %s74, %s90
      %p92 = scmp.eq.s32.totalorder %s14, 0
      %p93 = por %p91, %p92
      %p94 = scmp.le.s32.totalorder 1, %s8
      %p95 = scmp.lt.s32.totalorder %s8, 3
      %p96 = pnand %p94, %p95
      %p97 = pneg %p96
      // Predicated region
      $region9: #{_lambda_.8} parent=5 // pred_check
        _
      $region10: #{_lambda_.8} parent=5 // pred_check_branch
        %99 = sbr.rel (%p96) target = $region12
      $region11: #{_lambda_.8} parent=5 // pred_region
        %s100 = ssub.s32 %s8, 1
      $region12: #{_lambda_.8} parent=5 // pred_fallthru
        _
      %p101 = scmp.lt.s32.totalorder %s8, 2
      // Predicated region
      $region13: #{_lambda_.8} parent=5 // pred_check
        %p102 = pneg %p101
      $region14: #{_lambda_.8} parent=5 // pred_check_branch
        %104 = sbr.rel (%p102) target = $region16
      $region15: #{_lambda_.8} parent=5 // pred_region
        // Predicated region
        $region17: #{_lambda_.8} parent=15 // pred_check
          %p105 = pneg %p28
        $region18: #{_lambda_.8} parent=15 // pred_check_branch
          %107 = sbr.rel (%p105) target = $region20
        $region19: #{_lambda_.8} parent=15 // pred_region
          %s108 = sand.u32 %s18, 1
          %s109 = sand.u32 %s18, 1
          %s110 = smul.addr %s109, 64
          %s111 = scalar_lea.vmem [#allocation2], %s110
          %s112 = smul.u32 4, %s8
          %s113 = smul.addr %s112, 2
          %s114 = scalar_lea.vmem %s0, %s113
          // Predicated region
          $region21: #{_lambda_.8} parent=19 // pred_check
            _
          $region22: #{_lambda_.8} parent=19 // pred_check_branch
            %116 = sbr.rel (0) target = $region24
          $region23: #{_lambda_.8} parent=19 // pred_region
            // Predicated region
            $region25: #{_lambda_.8} parent=23 // pred_check
              _
            $region26: #{_lambda_.8} parent=23 // pred_check_branch
              %118 = sbr.rel (0) target = $region28
            $region27: #{_lambda_.8} parent=23 // pred_region
              // Predicated region
              $region40: #{_lambda_.8} parent=27 // pred_check
                _
              $region41: #{_lambda_.8} parent=27 // pred_check_branch
                %148 = sbr.rel (0) target = $region43
              $region42: #{_lambda_.8} parent=27 // pred_region
                loop: start=0, step=1, limit=1
                $region44: #{_lambda_.8} parent=42 // loop_pre_header
                  _
                $region45: #{_lambda_.8} parent=42 // loop_header
                  %s150 = sphi 0, %s154
                  %p151 = scmp.ge.s32.totalorder %s150, 1
                  %s155 = sphi %s114, %s114
                  %s156 = sphi %s111, %s111
                $region46: #{_lambda_.8} parent=42 // loop_header_branch
                  %153 = sbr.rel (%p151) target = $region50
                $region47: #{_lambda_.8} parent=42 // loop_body
                  %v157 = vld [vmem:[%s155] sm:$0xff]
                  %158 = vst [vmem:[%s156] sm:$0xff] %v157
                  %v159 = vld [vmem:[%s155 + $0x10] sm:$0xff]
                  %160 = vst [vmem:[%s156 + $0x8] sm:$0xff] %v159
                  %v161 = vld [vmem:[%s155 + $0x20] sm:$0xff]
                  %162 = vst [vmem:[%s156 + $0x10] sm:$0xff] %v161
                  %v163 = vld [vmem:[%s155 + $0x30] sm:$0xff]
                  %164 = vst [vmem:[%s156 + $0x18] sm:$0xff] %v163
                  %v165 = vld [vmem:[%s155 + $0x40] sm:$0xff]
                  %166 = vst [vmem:[%s156 + $0x20] sm:$0xff] %v165
                  %v167 = vld [vmem:[%s155 + $0x50] sm:$0xff]
                  %168 = vst [vmem:[%s156 + $0x28] sm:$0xff] %v167
                  %v169 = vld [vmem:[%s155 + $0x60] sm:$0xff]
                  %170 = vst [vmem:[%s156 + $0x30] sm:$0xff] %v169
                  %v171 = vld [vmem:[%s155 + $0x70] sm:$0xff]
                  %172 = vst [vmem:[%s156 + $0x38] sm:$0xff] %v171
                $region48: #{_lambda_.8} parent=42 // loop_footer
                  %s154 = sadd.s32 1, %s150
                $region49: #{_lambda_.8} parent=42 // loop_footer_branch
                  %149 = sbr.rel target = $region45
                $region50: #{_lambda_.8} parent=42 // loop_exit
                  _
              $region43: #{_lambda_.8} parent=27 // pred_fallthru
                _
              // Predicated region
              $region51: #{_lambda_.8} parent=27 // pred_check
                _
              $region52: #{_lambda_.8} parent=27 // pred_check_branch
                %174 = sbr.rel target = $region54
              $region53: #{_lambda_.8} parent=27 // pred_region
                _
              $region54: #{_lambda_.8} parent=27 // pred_fallthru
                _
            $region28: #{_lambda_.8} parent=23 // pred_fallthru
              _
            // Predicated region
            $region29: #{_lambda_.8} parent=23 // pred_check
              _
            $region30: #{_lambda_.8} parent=23 // pred_check_branch
              %120 = sbr.rel target = $region32
            $region31: #{_lambda_.8} parent=23 // pred_region
              %s122 = ssub.s32 256, 1
              loop: start=0, step=1, limit=1
              $region33: #{_lambda_.8} parent=31 // loop_pre_header
                _
              $region34: #{_lambda_.8} parent=31 // loop_header
                %s124 = sphi 0, %s128
                %p125 = scmp.ge.s32.totalorder %s124, 1
                %s129 = sphi %s114, %s114
                %s130 = sphi %s111, %s111
              $region35: #{_lambda_.8} parent=31 // loop_header_branch
                %127 = sbr.rel (%p125) target = $region39
              $region36: #{_lambda_.8} parent=31 // loop_body
                %v131 = vld [vmem:[%s129] sm:%s122]
                %132 = vst [vmem:[%s130] sm:%s122] %v131
                %v133 = vld [vmem:[%s129 + $0x10] sm:%s122]
                %134 = vst [vmem:[%s130 + $0x8] sm:%s122] %v133
                %v135 = vld [vmem:[%s129 + $0x20] sm:%s122]
                %136 = vst [vmem:[%s130 + $0x10] sm:%s122] %v135
                %v137 = vld [vmem:[%s129 + $0x30] sm:%s122]
                %138 = vst [vmem:[%s130 + $0x18] sm:%s122] %v137
                %v139 = vld [vmem:[%s129 + $0x40] sm:%s122]
                %140 = vst [vmem:[%s130 + $0x20] sm:%s122] %v139
                %v141 = vld [vmem:[%s129 + $0x50] sm:%s122]
                %142 = vst [vmem:[%s130 + $0x28] sm:%s122] %v141
                %v143 = vld [vmem:[%s129 + $0x60] sm:%s122]
                %144 = vst [vmem:[%s130 + $0x30] sm:%s122] %v143
                %v145 = vld [vmem:[%s129 + $0x70] sm:%s122]
                %146 = vst [vmem:[%s130 + $0x38] sm:%s122] %v145
              $region37: #{_lambda_.8} parent=31 // loop_footer
                %s128 = sadd.s32 1, %s124
              $region38: #{_lambda_.8} parent=31 // loop_footer_branch
                %123 = sbr.rel target = $region34
              $region39: #{_lambda_.8} parent=31 // loop_exit
                _
            $region32: #{_lambda_.8} parent=23 // pred_fallthru
              _
          $region24: #{_lambda_.8} parent=19 // pred_fallthru
            _
          %175 = vnop
        $region20: #{_lambda_.8} parent=15 // pred_fallthru
          _
        // Predicated region
        $region55: #{_lambda_.8} parent=15 // pred_check
          %p176 = pneg %p54
        $region56: #{_lambda_.8} parent=15 // pred_check_branch
          %178 = sbr.rel (%p176) target = $region58
        $region57: #{_lambda_.8} parent=15 // pred_region
          %p179 = scmp.lt.s32.totalorder %s8, 1
          %s180 = scalar_select %p179, %s8, 1
          %s181 = smul.addr %s180, 64
          %s182 = smul.addr %s181, 4
          %s183 = scalar_lea.vmem %s1, %s182
        $region58: #{_lambda_.8} parent=15 // pred_fallthru
          _
      $region16: #{_lambda_.8} parent=5 // pred_fallthru
        _
      %p184 = scmp.le.s32.totalorder 1, %s8
      %p185 = scmp.lt.s32.totalorder %s8, 3
      %p186 = pnand %p184, %p185
      %p187 = pneg %p186
      // Predicated region
      $region59: #{_lambda_.8} parent=5 // pred_check
        _
      $region60: #{_lambda_.8} parent=5 // pred_check_branch
        %189 = sbr.rel (%p186) target = $region62
      $region61: #{_lambda_.8} parent=5 // pred_region
        %s190 = ssub.s32 %s8, 1
        %s191 = sand.u32 %s21, 1
        %s192 = sand.u32 %s21, 1
        %s193 = smul.addr %s192, 64
        %s194 = scalar_lea.vmem [#allocation2], %s193
        // Predicated region
        $region63: #{_lambda_.8} parent=61 // pred_check
          %p195 = pneg %p34
        $region64: #{_lambda_.8} parent=61 // pred_check_branch
          %197 = sbr.rel (%p195) target = $region66
        $region65: #{_lambda_.8} parent=61 // pred_region
          _
        $region66: #{_lambda_.8} parent=61 // pred_fallthru
          _
        %s198 = sand.u32 %s21, 1
        %s199 = sand.u32 %s21, 1
        %s200 = smul.addr %s199, 64
        %s201 = scalar_lea.vmem [#allocation2], %s200
        %p202 = pneg %p34
        %p203 = pneg %p31
        %p204 = scmp.lt.s32.totalorder %s13, 1
        %s205 = scalar_select %p204, %s13, 1
        %s206 = smul.addr %s205, 64
        %s207 = smul.addr %s206, 4
        %s208 = scalar_lea.vmem %s1, %s207
        %p209 = pneg %p60
        %p210 = pneg %p57
        %p211 = pneg %p86
        %p212 = pneg %p83
        %s213 = sand.u32 %s73, 1
        %s214 = sand.u32 %s73, 1
        %s215 = smul.addr %s214, 16
        %s216 = scalar_lea.vmem [#allocation3], %s215
        %s217 = smul.u32 4, %s13
        %p218 = scmp.lt.s32.totalorder %s13, 1
        %s219 = scalar_select %p218, %s13, 1
        %s220 = smul.addr %s219, 64
        %s221 = smul.addr %s220, 4
        %s222 = scalar_lea.vmem %s1, %s221
        %v224 = vld [vmem:[%s222] sm:$0xff]
        %v225 = vld [vmem:[%s222 + $0x8] sm:$0xff]
        %v226 = vld [vmem:[%s222 + $0x10] sm:$0xff]
        %v227 = vld [vmem:[%s222 + $0x18] sm:$0xff]
        %v228 = vld [vmem:[%s222 + $0x20] sm:$0xff]
        %v229 = vld [vmem:[%s222 + $0x28] sm:$0xff]
        %v230 = vld [vmem:[%s222 + $0x30] sm:$0xff]
        %v231 = vld [vmem:[%s222 + $0x38] sm:$0xff]
        %v232 = vld [vmem:[%s222 + $0x40] sm:$0xff]
        %v233 = vld [vmem:[%s222 + $0x48] sm:$0xff]
        %v234 = vld [vmem:[%s222 + $0x50] sm:$0xff]
        %v235 = vld [vmem:[%s222 + $0x58] sm:$0xff]
        %v236 = vld [vmem:[%s222 + $0x60] sm:$0xff]
        %v237 = vld [vmem:[%s222 + $0x68] sm:$0xff]
        %v238 = vld [vmem:[%s222 + $0x70] sm:$0xff]
        %v239 = vld [vmem:[%s222 + $0x78] sm:$0xff]
        %v240 = vld [vmem:[%s222 + $0x80] sm:$0xff]
        %v241 = vld [vmem:[%s222 + $0x88] sm:$0xff]
        %v242 = vld [vmem:[%s222 + $0x90] sm:$0xff]
        %v243 = vld [vmem:[%s222 + $0x98] sm:$0xff]
        %v244 = vld [vmem:[%s222 + $0xa0] sm:$0xff]
        %v245 = vld [vmem:[%s222 + $0xa8] sm:$0xff]
        %v246 = vld [vmem:[%s222 + $0xb0] sm:$0xff]
        %v247 = vld [vmem:[%s222 + $0xb8] sm:$0xff]
        %v248 = vld [vmem:[%s222 + $0xc0] sm:$0xff]
        %v249 = vld [vmem:[%s222 + $0xc8] sm:$0xff]
        %v250 = vld [vmem:[%s222 + $0xd0] sm:$0xff]
        %v251 = vld [vmem:[%s222 + $0xd8] sm:$0xff]
        %v252 = vld [vmem:[%s222 + $0xe0] sm:$0xff]
        %v253 = vld [vmem:[%s222 + $0xe8] sm:$0xff]
        %v254 = vld [vmem:[%s222 + $0xf0] sm:$0xff]
        %v255 = vld [vmem:[%s222 + $0xf8] sm:$0xff]
        %p256 = scmp.eq.s32.totalorder %s13, 0
        %s257 = scalar_select %p256, 0, 7
        %s258 = smul.u32 %s257, 4
        %s259 = smul.addr %s258, 2
        %s260 = scalar_lea.vmem %s194, %s259 [#allocation2]
        %v261 = vld [vmem:[%s260] sm:$0xff]
        %v294 = vunpack.c.l.b16 %v224
        %v295 = vunpack.c.h.b16 %v224
        %v296 = vunpack.c.l.b16 %v225
        %v297 = vunpack.c.h.b16 %v225
        %v298 = vunpack.c.l.b16 %v226
        %v299 = vunpack.c.h.b16 %v226
        %v300 = vunpack.c.l.b16 %v227
        %v301 = vunpack.c.h.b16 %v227
        %v302 = vunpack.c.l.b16 %v228
        %v303 = vunpack.c.h.b16 %v228
        %v304 = vunpack.c.l.b16 %v229
        %v305 = vunpack.c.h.b16 %v229
        %v306 = vunpack.c.l.b16 %v230
        %v307 = vunpack.c.h.b16 %v230
        %v308 = vunpack.c.l.b16 %v231
        %v309 = vunpack.c.h.b16 %v231
        %v310 = vunpack.c.l.b16 %v232
        %v311 = vunpack.c.h.b16 %v232
        %v312 = vunpack.c.l.b16 %v233
        %v313 = vunpack.c.h.b16 %v233
        %v314 = vunpack.c.l.b16 %v234
        %v315 = vunpack.c.h.b16 %v234
        %v316 = vunpack.c.l.b16 %v235
        %v317 = vunpack.c.h.b16 %v235
        %v318 = vunpack.c.l.b16 %v236
        %v319 = vunpack.c.h.b16 %v236
        %v320 = vunpack.c.l.b16 %v237
        %v321 = vunpack.c.h.b16 %v237
        %v322 = vunpack.c.l.b16 %v238
        %v323 = vunpack.c.h.b16 %v238
        %v324 = vunpack.c.l.b16 %v239
        %v325 = vunpack.c.h.b16 %v239
        %v326 = vunpack.c.l.b16 %v240
        %v327 = vunpack.c.h.b16 %v240
        %v328 = vunpack.c.l.b16 %v241
        %v329 = vunpack.c.h.b16 %v241
        %v330 = vunpack.c.l.b16 %v242
        %v331 = vunpack.c.h.b16 %v242
        %v332 = vunpack.c.l.b16 %v243
        %v333 = vunpack.c.h.b16 %v243
        %v334 = vunpack.c.l.b16 %v244
        %v335 = vunpack.c.h.b16 %v244
        %v336 = vunpack.c.l.b16 %v245
        %v337 = vunpack.c.h.b16 %v245
        %v338 = vunpack.c.l.b16 %v246
        %v339 = vunpack.c.h.b16 %v246
        %v340 = vunpack.c.l.b16 %v247
        %v341 = vunpack.c.h.b16 %v247
        %v342 = vunpack.c.l.b16 %v248
        %v343 = vunpack.c.h.b16 %v248
        %v344 = vunpack.c.l.b16 %v249
        %v345 = vunpack.c.h.b16 %v249
        %v346 = vunpack.c.l.b16 %v250
        %v347 = vunpack.c.h.b16 %v250
        %v348 = vunpack.c.l.b16 %v251
        %v349 = vunpack.c.h.b16 %v251
        %v350 = vunpack.c.l.b16 %v252
        %v351 = vunpack.c.h.b16 %v252
        %v352 = vunpack.c.l.b16 %v253
        %v353 = vunpack.c.h.b16 %v253
        %v354 = vunpack.c.l.b16 %v254
        %v355 = vunpack.c.h.b16 %v254
        %v356 = vunpack.c.l.b16 %v255
        %v357 = vunpack.c.h.b16 %v255
        %v358 = vpack.c.b16 %v298, %v294
        %v359 = vpack.c.b16 %v299, %v295
        %v360 = vpack.c.b16 %v300, %v296
        %v361 = vpack.c.b16 %v301, %v297
        %v362 = vpack.c.b16 %v306, %v302
        %v363 = vpack.c.b16 %v307, %v303
        %v364 = vpack.c.b16 %v308, %v304
        %v365 = vpack.c.b16 %v309, %v305
        %v366 = vpack.c.b16 %v314, %v310
        %v367 = vpack.c.b16 %v315, %v311
        %v368 = vpack.c.b16 %v316, %v312
        %v369 = vpack.c.b16 %v317, %v313
        %v370 = vpack.c.b16 %v322, %v318
        %v371 = vpack.c.b16 %v323, %v319
        %v372 = vpack.c.b16 %v324, %v320
        %v373 = vpack.c.b16 %v325, %v321
        %v374 = vpack.c.b16 %v330, %v326
        %v375 = vpack.c.b16 %v331, %v327
        %v376 = vpack.c.b16 %v332, %v328
        %v377 = vpack.c.b16 %v333, %v329
        %v378 = vpack.c.b16 %v338, %v334
        %v379 = vpack.c.b16 %v339, %v335
        %v380 = vpack.c.b16 %v340, %v336
        %v381 = vpack.c.b16 %v341, %v337
        %v382 = vpack.c.b16 %v346, %v342
        %v383 = vpack.c.b16 %v347, %v343
        %v384 = vpack.c.b16 %v348, %v344
        %v385 = vpack.c.b16 %v349, %v345
        %v386 = vpack.c.b16 %v354, %v350
        %v387 = vpack.c.b16 %v355, %v351
        %v388 = vpack.c.b16 %v356, %v352
        %v389 = vpack.c.b16 %v357, %v353
        %422 = vmatpush.bf16.msra.mxu0 %v386
        %423 = vmatpush.bf16.msra.mxu0 %v382
        %424 = vmatpush.bf16.msra.mxu0 %v378
        %425 = vmatpush.bf16.msra.mxu0 %v374
        %426 = vmatpush.bf16.msra.mxu0 %v370
        %427 = vmatpush.bf16.msra.mxu0 %v366
        %428 = vmatpush.bf16.msra.mxu0 %v362
        %429 = vmatpush.bf16.msra.mxu0 %v358
        %430 = vmatmul.bf16.gmra.mxu0 0
        %v431 = vpop.f32.mrf.mxu0
        %v432 = vadd.f32 0.0, %v431
        %v433 = vpop.f32.mrf.mxu0
        %434 = vdwg.mxu0
        %435 = vmatpush.bf16.msra.mxu0 %v387
        %436 = vmatpush.bf16.msra.mxu0 %v383
        %437 = vmatpush.bf16.msra.mxu0 %v379
        %438 = vmatpush.bf16.msra.mxu0 %v375
        %439 = vmatpush.bf16.msra.mxu0 %v371
        %440 = vmatpush.bf16.msra.mxu0 %v367
        %441 = vmatpush.bf16.msra.mxu0 %v363
        %442 = vmatpush.bf16.msra.mxu0 %v359
        %443 = vmatmul.bf16.gmra.mxu0 0
        %v444 = vpop.f32.mrf.mxu0
        %v445 = vadd.f32 0.0, %v444
        %v446 = vpop.f32.mrf.mxu0
        %447 = vdwg.mxu0
        %448 = vmatpush.bf16.msra.mxu0 %v388
        %449 = vmatpush.bf16.msra.mxu0 %v384
        %450 = vmatpush.bf16.msra.mxu0 %v380
        %451 = vmatpush.bf16.msra.mxu0 %v376
        %452 = vmatpush.bf16.msra.mxu0 %v372
        %453 = vmatpush.bf16.msra.mxu0 %v368
        %454 = vmatpush.bf16.msra.mxu0 %v364
        %455 = vmatpush.bf16.msra.mxu0 %v360
        %456 = vmatmul.bf16.gmra.mxu0 0
        %v457 = vpop.f32.mrf.mxu0
        %v458 = vadd.f32 0.0, %v457
        %v459 = vpop.f32.mrf.mxu0
        %460 = vdwg.mxu0
        %461 = vmatpush.bf16.msra.mxu0 %v389
        %462 = vmatpush.bf16.msra.mxu0 %v385
        %463 = vmatpush.bf16.msra.mxu0 %v381
        %464 = vmatpush.bf16.msra.mxu0 %v377
        %465 = vmatpush.bf16.msra.mxu0 %v373
        %466 = vmatpush.bf16.msra.mxu0 %v369
        %467 = vmatpush.bf16.msra.mxu0 %v365
        %468 = vmatpush.bf16.msra.mxu0 %v361
        %469 = vmatmul.bf16.gmra.mxu0 0
        %v470 = vpop.f32.mrf.mxu0
        %v471 = vadd.f32 0.0, %v470
        %v472 = vpop.f32.mrf.mxu0
        %473 = vdwg.mxu0
        %v478 = vrot.slane %v445, 6
        %v479 = vrot.slane %v458, 4
        %v480 = vrot.slane %v471, 2
        %vm481 = vcmask 1041408
        %v482 = vsel %vm481, %v432, %v478
        %vm483 = vcmask 1045508
        %v484 = vsel %vm483, %v479, %v480
        %vm485 = vcmask 1043456
        %v486 = vsel %vm485, %v482, %v484
        %v488 = vadd.f32 %v261, %v486
        %v489 = vxor.u32 %v488, 2147483648
        %v490 = vmul.f32 %v489, 1.442695
        %v491 = vpow.pop %v490
        %v492 = vadd.f32 %v491, 1.0
        %v493 = vrcp.pop %v492
        %v494 = vmul.f32 %v492, %v493
        %v495 = vsub.f32 1.0, %v494
        %v496 = vmul.f32 %v493, %v495
        %v497 = vadd.f32 %v493, %v496
        %vm498 = vweird.f32 %v492
        %vm499 = vweird.f32 %v493
        %vm500 = vmor %vm498, %vm499
        %v501 = vsel %vm500, %v493, %v497
        %v502 = vand.u32 2147483647, %v492
        %vm503 = vcmp.eq.f32.partialorder %v502, 8.507059e+37
        %v504 = vand.u32 %v492, 2147483648
        %v505 = vor.u32 1.1754944e-38, %v504
        %v506 = vsel %vm503, %v505, %v501
        %v507 = vmul.f32 1.0, %v506
        %v509 = vrot.slane %v488, 2
        %v511 = vxor.u32 %v509, 2147483648
        %v512 = vmul.f32 %v511, 1.442695
        %v513 = vpow.pop %v512
        %v514 = vadd.f32 %v513, 1.0
        %v515 = vrcp.pop %v514
        %v516 = vmul.f32 %v514, %v515
        %v517 = vsub.f32 1.0, %v516
        %v518 = vmul.f32 %v515, %v517
        %v519 = vadd.f32 %v515, %v518
        %vm520 = vweird.f32 %v514
        %vm521 = vweird.f32 %v515
        %vm522 = vmor %vm520, %vm521
        %v523 = vsel %vm522, %v515, %v519
        %v524 = vand.u32 2147483647, %v514
        %vm525 = vcmp.eq.f32.partialorder %v524, 8.507059e+37
        %v526 = vand.u32 %v514, 2147483648
        %v527 = vor.u32 1.1754944e-38, %v526
        %v528 = vsel %vm525, %v527, %v523
        %v529 = vmul.f32 1.0, %v528
        %v530 = vrot.slane %v488, 4
        %v532 = vtanh.pop %v530
        %v533 = vrot.slane %v488, 6
        %v535 = vxor.u32 %v533, 2147483648
        %v536 = vmul.f32 %v535, 1.442695
        %v537 = vpow.pop %v536
        %v538 = vadd.f32 %v537, 1.0
        %v539 = vrcp.pop %v538
        %v540 = vmul.f32 %v538, %v539
        %v541 = vsub.f32 1.0, %v540
        %v542 = vmul.f32 %v539, %v541
        %v543 = vadd.f32 %v539, %v542
        %vm544 = vweird.f32 %v538
        %vm545 = vweird.f32 %v539
        %vm546 = vmor %vm544, %vm545
        %v547 = vsel %vm546, %v539, %v543
        %v548 = vand.u32 2147483647, %v538
        %vm549 = vcmp.eq.f32.partialorder %v548, 8.507059e+37
        %v550 = vand.u32 %v538, 2147483648
        %v551 = vor.u32 1.1754944e-38, %v550
        %v552 = vsel %vm549, %v551, %v547
        %v553 = vmul.f32 1.0, %v552
        %v554 = vmul.f32 %v529, 0.0
        %v555 = vmul.f32 %v507, %v532
        %v556 = vadd.f32 %v554, %v555
        %v557 = vtanh.pop %v556
        %v558 = vmul.f32 %v553, %v557
        %s559 = smul.u32 %s257, 2
        %s560 = scalar_lea.vmem %s216, %s559 [#allocation3]
        %561 = vst [vmem:[%s560] sm:$0x3] %v558
        %s562 = scalar_select %p256, 1, 6
        %s563 = smul.u32 %s562, 4
        %s564 = smul.addr %s563, 2
        %s565 = scalar_lea.vmem %s194, %s564 [#allocation2]
        %v566 = vld [vmem:[%s565] sm:$0xff]
        %v567 = vpack.c.bf16 %v558, %v558
        %568 = vmatpush.bf16.msra.mxu0 %v386
        %569 = vmatpush.bf16.msra.mxu0 %v382
        %570 = vmatpush.bf16.msra.mxu0 %v378
        %571 = vmatpush.bf16.msra.mxu0 %v374
        %572 = vmatpush.bf16.msra.mxu0 %v370
        %573 = vmatpush.bf16.msra.mxu0 %v366
        %574 = vmatpush.bf16.msra.mxu0 %v362
        %575 = vmatpush.bf16.msra.mxu0 %v358
        %576 = vmatmul.bf16.gmra.mxu0 %v567
        %v577 = vpop.f32.mrf.mxu0
        %v578 = vadd.f32 0.0, %v577
        %v579 = vpop.f32.mrf.mxu0
        %580 = vdwg.mxu0
        %581 = vmatpush.bf16.msra.mxu0 %v387
        %582 = vmatpush.bf16.msra.mxu0 %v383
        %583 = vmatpush.bf16.msra.mxu0 %v379
        %584 = vmatpush.bf16.msra.mxu0 %v375
        %585 = vmatpush.bf16.msra.mxu0 %v371
        %586 = vmatpush.bf16.msra.mxu0 %v367
        %587 = vmatpush.bf16.msra.mxu0 %v363
        %588 = vmatpush.bf16.msra.mxu0 %v359
        %589 = vmatmul.bf16.gmra.mxu0 %v567
        %v590 = vpop.f32.mrf.mxu0
        %v591 = vadd.f32 0.0, %v590
        %v592 = vpop.f32.mrf.mxu0
        %593 = vdwg.mxu0
        %594 = vmatpush.bf16.msra.mxu0 %v388
        %595 = vmatpush.bf16.msra.mxu0 %v384
        %596 = vmatpush.bf16.msra.mxu0 %v380
        %597 = vmatpush.bf16.msra.mxu0 %v376
        %598 = vmatpush.bf16.msra.mxu0 %v372
        %599 = vmatpush.bf16.msra.mxu0 %v368
        %600 = vmatpush.bf16.msra.mxu0 %v364
        %601 = vmatpush.bf16.msra.mxu0 %v360
        %602 = vmatmul.bf16.gmra.mxu0 %v567
        %v603 = vpop.f32.mrf.mxu0
        %v604 = vadd.f32 0.0, %v603
        %v605 = vpop.f32.mrf.mxu0
        %606 = vdwg.mxu0
        %607 = vmatpush.bf16.msra.mxu0 %v389
        %608 = vmatpush.bf16.msra.mxu0 %v385
        %609 = vmatpush.bf16.msra.mxu0 %v381
        %610 = vmatpush.bf16.msra.mxu0 %v377
        %611 = vmatpush.bf16.msra.mxu0 %v373
        %612 = vmatpush.bf16.msra.mxu0 %v369
        %613 = vmatpush.bf16.msra.mxu0 %v365
        %614 = vmatpush.bf16.msra.mxu0 %v361
        %615 = vmatmul.bf16.gmra.mxu0 %v567
        %v616 = vpop.f32.mrf.mxu0
        %v617 = vadd.f32 0.0, %v616
        %v618 = vpop.f32.mrf.mxu0
        %619 = vdwg.mxu0
        %v624 = vrot.slane %v591, 6
        %v625 = vrot.slane %v604, 4
        %v626 = vrot.slane %v617, 2
        %v627 = vsel %vm481, %v578, %v624
        %v628 = vsel %vm483, %v625, %v626
        %v629 = vsel %vm485, %v627, %v628
        %v631 = vadd.f32 %v566, %v629
        %v632 = vxor.u32 %v631, 2147483648
        %v633 = vmul.f32 %v632, 1.442695
        %v634 = vpow.pop %v633
        %v635 = vadd.f32 %v634, 1.0
        %v636 = vrcp.pop %v635
        %v637 = vmul.f32 %v635, %v636
        %v638 = vsub.f32 1.0, %v637
        %v639 = vmul.f32 %v636, %v638
        %v640 = vadd.f32 %v636, %v639
        %vm641 = vweird.f32 %v635
        %vm642 = vweird.f32 %v636
        %vm643 = vmor %vm641, %vm642
        %v644 = vsel %vm643, %v636, %v640
        %v645 = vand.u32 2147483647, %v635
        %vm646 = vcmp.eq.f32.partialorder %v645, 8.507059e+37
        %v647 = vand.u32 %v635, 2147483648
        %v648 = vor.u32 1.1754944e-38, %v647
        %v649 = vsel %vm646, %v648, %v644
        %v650 = vmul.f32 1.0, %v649
        %v652 = vrot.slane %v631, 2
        %v654 = vxor.u32 %v652, 2147483648
        %v655 = vmul.f32 %v654, 1.442695
        %v656 = vpow.pop %v655
        %v657 = vadd.f32 %v656, 1.0
        %v658 = vrcp.pop %v657
        %v659 = vmul.f32 %v657, %v658
        %v660 = vsub.f32 1.0, %v659
        %v661 = vmul.f32 %v658, %v660
        %v662 = vadd.f32 %v658, %v661
        %vm663 = vweird.f32 %v657
        %vm664 = vweird.f32 %v658
        %vm665 = vmor %vm663, %vm664
        %v666 = vsel %vm665, %v658, %v662
        %v667 = vand.u32 2147483647, %v657
        %vm668 = vcmp.eq.f32.partialorder %v667, 8.507059e+37
        %v669 = vand.u32 %v657, 2147483648
        %v670 = vor.u32 1.1754944e-38, %v669
        %v671 = vsel %vm668, %v670, %v666
        %v672 = vmul.f32 1.0, %v671
        %v673 = vrot.slane %v631, 4
        %v675 = vtanh.pop %v673
        %v676 = vrot.slane %v631, 6
        %v678 = vxor.u32 %v676, 2147483648
        %v679 = vmul.f32 %v678, 1.442695
        %v680 = vpow.pop %v679
        %v681 = vadd.f32 %v680, 1.0
        %v682 = vrcp.pop %v681
        %v683 = vmul.f32 %v681, %v682
        %v684 = vsub.f32 1.0, %v683
        %v685 = vmul.f32 %v682, %v684
        %v686 = vadd.f32 %v682, %v685
        %vm687 = vweird.f32 %v681
        %vm688 = vweird.f32 %v682
        %vm689 = vmor %vm687, %vm688
        %v690 = vsel %vm689, %v682, %v686
        %v691 = vand.u32 2147483647, %v681
        %vm692 = vcmp.eq.f32.partialorder %v691, 8.507059e+37
        %v693 = vand.u32 %v681, 2147483648
        %v694 = vor.u32 1.1754944e-38, %v693
        %v695 = vsel %vm692, %v694, %v690
        %v696 = vmul.f32 1.0, %v695
        %v697 = vmul.f32 %v672, %v556
        %v698 = vmul.f32 %v650, %v675
        %v699 = vadd.f32 %v697, %v698
        %v700 = vtanh.pop %v699
        %v701 = vmul.f32 %v696, %v700
        %s702 = smul.u32 %s562, 2
        %s703 = scalar_lea.vmem %s216, %s702 [#allocation3]
        %704 = vst [vmem:[%s703] sm:$0x3] %v701
        %s705 = scalar_select %p256, 2, 5
        %s706 = smul.u32 %s705, 4
        %s707 = smul.addr %s706, 2
        %s708 = scalar_lea.vmem %s194, %s707 [#allocation2]
        %v709 = vld [vmem:[%s708] sm:$0xff]
        %v710 = vpack.c.bf16 %v701, %v701
        %711 = vmatpush.bf16.msra.mxu0 %v386
        %712 = vmatpush.bf16.msra.mxu0 %v382
        %713 = vmatpush.bf16.msra.mxu0 %v378
        %714 = vmatpush.bf16.msra.mxu0 %v374
        %715 = vmatpush.bf16.msra.mxu0 %v370
        %716 = vmatpush.bf16.msra.mxu0 %v366
        %717 = vmatpush.bf16.msra.mxu0 %v362
        %718 = vmatpush.bf16.msra.mxu0 %v358
        %719 = vmatmul.bf16.gmra.mxu0 %v710
        %v720 = vpop.f32.mrf.mxu0
        %v721 = vadd.f32 0.0, %v720
        %v722 = vpop.f32.mrf.mxu0
        %723 = vdwg.mxu0
        %724 = vmatpush.bf16.msra.mxu0 %v387
        %725 = vmatpush.bf16.msra.mxu0 %v383
        %726 = vmatpush.bf16.msra.mxu0 %v379
        %727 = vmatpush.bf16.msra.mxu0 %v375
        %728 = vmatpush.bf16.msra.mxu0 %v371
        %729 = vmatpush.bf16.msra.mxu0 %v367
        %730 = vmatpush.bf16.msra.mxu0 %v363
        %731 = vmatpush.bf16.msra.mxu0 %v359
        %732 = vmatmul.bf16.gmra.mxu0 %v710
        %v733 = vpop.f32.mrf.mxu0
        %v734 = vadd.f32 0.0, %v733
        %v735 = vpop.f32.mrf.mxu0
        %736 = vdwg.mxu0
        %737 = vmatpush.bf16.msra.mxu0 %v388
        %738 = vmatpush.bf16.msra.mxu0 %v384
        %739 = vmatpush.bf16.msra.mxu0 %v380
        %740 = vmatpush.bf16.msra.mxu0 %v376
        %741 = vmatpush.bf16.msra.mxu0 %v372
        %742 = vmatpush.bf16.msra.mxu0 %v368
        %743 = vmatpush.bf16.msra.mxu0 %v364
        %744 = vmatpush.bf16.msra.mxu0 %v360
        %745 = vmatmul.bf16.gmra.mxu0 %v710
        %v746 = vpop.f32.mrf.mxu0
        %v747 = vadd.f32 0.0, %v746
        %v748 = vpop.f32.mrf.mxu0
        %749 = vdwg.mxu0
        %750 = vmatpush.bf16.msra.mxu0 %v389
        %751 = vmatpush.bf16.msra.mxu0 %v385
        %752 = vmatpush.bf16.msra.mxu0 %v381
        %753 = vmatpush.bf16.msra.mxu0 %v377
        %754 = vmatpush.bf16.msra.mxu0 %v373
        %755 = vmatpush.bf16.msra.mxu0 %v369
        %756 = vmatpush.bf16.msra.mxu0 %v365
        %757 = vmatpush.bf16.msra.mxu0 %v361
        %758 = vmatmul.bf16.gmra.mxu0 %v710
        %v759 = vpop.f32.mrf.mxu0
        %v760 = vadd.f32 0.0, %v759
        %v761 = vpop.f32.mrf.mxu0
        %762 = vdwg.mxu0
        %v767 = vrot.slane %v734, 6
        %v768 = vrot.slane %v747, 4
        %v769 = vrot.slane %v760, 2
        %v770 = vsel %vm481, %v721, %v767
        %v771 = vsel %vm483, %v768, %v769
        %v772 = vsel %vm485, %v770, %v771
        %v774 = vadd.f32 %v709, %v772
        %v775 = vxor.u32 %v774, 2147483648
        %v776 = vmul.f32 %v775, 1.442695
        %v777 = vpow.pop %v776
        %v778 = vadd.f32 %v777, 1.0
        %v779 = vrcp.pop %v778
        %v780 = vmul.f32 %v778, %v779
        %v781 = vsub.f32 1.0, %v780
        %v782 = vmul.f32 %v779, %v781
        %v783 = vadd.f32 %v779, %v782
        %vm784 = vweird.f32 %v778
        %vm785 = vweird.f32 %v779
        %vm786 = vmor %vm784, %vm785
        %v787 = vsel %vm786, %v779, %v783
        %v788 = vand.u32 2147483647, %v778
        %vm789 = vcmp.eq.f32.partialorder %v788, 8.507059e+37
        %v790 = vand.u32 %v778, 2147483648
        %v791 = vor.u32 1.1754944e-38, %v790
        %v792 = vsel %vm789, %v791, %v787
        %v793 = vmul.f32 1.0, %v792
        %v795 = vrot.slane %v774, 2
        %v797 = vxor.u32 %v795, 2147483648
        %v798 = vmul.f32 %v797, 1.442695
        %v799 = vpow.pop %v798
        %v800 = vadd.f32 %v799, 1.0
        %v801 = vrcp.pop %v800
        %v802 = vmul.f32 %v800, %v801
        %v803 = vsub.f32 1.0, %v802
        %v804 = vmul.f32 %v801, %v803
        %v805 = vadd.f32 %v801, %v804
        %vm806 = vweird.f32 %v800
        %vm807 = vweird.f32 %v801
        %vm808 = vmor %vm806, %vm807
        %v809 = vsel %vm808, %v801, %v805
        %v810 = vand.u32 2147483647, %v800
        %vm811 = vcmp.eq.f32.partialorder %v810, 8.507059e+37
        %v812 = vand.u32 %v800, 2147483648
        %v813 = vor.u32 1.1754944e-38, %v812
        %v814 = vsel %vm811, %v813, %v809
        %v815 = vmul.f32 1.0, %v814
        %v816 = vrot.slane %v774, 4
        %v818 = vtanh.pop %v816
        %v819 = vrot.slane %v774, 6
        %v821 = vxor.u32 %v819, 2147483648
        %v822 = vmul.f32 %v821, 1.442695
        %v823 = vpow.pop %v822
        %v824 = vadd.f32 %v823, 1.0
        %v825 = vrcp.pop %v824
        %v826 = vmul.f32 %v824, %v825
        %v827 = vsub.f32 1.0, %v826
        %v828 = vmul.f32 %v825, %v827
        %v829 = vadd.f32 %v825, %v828
        %vm830 = vweird.f32 %v824
        %vm831 = vweird.f32 %v825
        %vm832 = vmor %vm830, %vm831
        %v833 = vsel %vm832, %v825, %v829
        %v834 = vand.u32 2147483647, %v824
        %vm835 = vcmp.eq.f32.partialorder %v834, 8.507059e+37
        %v836 = vand.u32 %v824, 2147483648
        %v837 = vor.u32 1.1754944e-38, %v836
        %v838 = vsel %vm835, %v837, %v833
        %v839 = vmul.f32 1.0, %v838
        %v840 = vmul.f32 %v815, %v699
        %v841 = vmul.f32 %v793, %v818
        %v842 = vadd.f32 %v840, %v841
        %v843 = vtanh.pop %v842
        %v844 = vmul.f32 %v839, %v843
        %s845 = smul.u32 %s705, 2
        %s846 = scalar_lea.vmem %s216, %s845 [#allocation3]
        %847 = vst [vmem:[%s846] sm:$0x3] %v844
        %s848 = scalar_select %p256, 3, 4
        %s849 = smul.u32 %s848, 4
        %s850 = smul.addr %s849, 2
        %s851 = scalar_lea.vmem %s194, %s850 [#allocation2]
        %v852 = vld [vmem:[%s851] sm:$0xff]
        %v853 = vpack.c.bf16 %v844, %v844
        %854 = vmatpush.bf16.msra.mxu0 %v386
        %855 = vmatpush.bf16.msra.mxu0 %v382
        %856 = vmatpush.bf16.msra.mxu0 %v378
        %857 = vmatpush.bf16.msra.mxu0 %v374
        %858 = vmatpush.bf16.msra.mxu0 %v370
        %859 = vmatpush.bf16.msra.mxu0 %v366
        %860 = vmatpush.bf16.msra.mxu0 %v362
        %861 = vmatpush.bf16.msra.mxu0 %v358
        %862 = vmatmul.bf16.gmra.mxu0 %v853
        %v863 = vpop.f32.mrf.mxu0
        %v864 = vadd.f32 0.0, %v863
        %v865 = vpop.f32.mrf.mxu0
        %866 = vdwg.mxu0
        %867 = vmatpush.bf16.msra.mxu0 %v387
        %868 = vmatpush.bf16.msra.mxu0 %v383
        %869 = vmatpush.bf16.msra.mxu0 %v379
        %870 = vmatpush.bf16.msra.mxu0 %v375
        %871 = vmatpush.bf16.msra.mxu0 %v371
        %872 = vmatpush.bf16.msra.mxu0 %v367
        %873 = vmatpush.bf16.msra.mxu0 %v363
        %874 = vmatpush.bf16.msra.mxu0 %v359
        %875 = vmatmul.bf16.gmra.mxu0 %v853
        %v876 = vpop.f32.mrf.mxu0
        %v877 = vadd.f32 0.0, %v876
        %v878 = vpop.f32.mrf.mxu0
        %879 = vdwg.mxu0
        %880 = vmatpush.bf16.msra.mxu0 %v388
        %881 = vmatpush.bf16.msra.mxu0 %v384
        %882 = vmatpush.bf16.msra.mxu0 %v380
        %883 = vmatpush.bf16.msra.mxu0 %v376
        %884 = vmatpush.bf16.msra.mxu0 %v372
        %885 = vmatpush.bf16.msra.mxu0 %v368
        %886 = vmatpush.bf16.msra.mxu0 %v364
        %887 = vmatpush.bf16.msra.mxu0 %v360
        %888 = vmatmul.bf16.gmra.mxu0 %v853
        %v889 = vpop.f32.mrf.mxu0
        %v890 = vadd.f32 0.0, %v889
        %v891 = vpop.f32.mrf.mxu0
        %892 = vdwg.mxu0
        %893 = vmatpush.bf16.msra.mxu0 %v389
        %894 = vmatpush.bf16.msra.mxu0 %v385
        %895 = vmatpush.bf16.msra.mxu0 %v381
        %896 = vmatpush.bf16.msra.mxu0 %v377
        %897 = vmatpush.bf16.msra.mxu0 %v373
        %898 = vmatpush.bf16.msra.mxu0 %v369
        %899 = vmatpush.bf16.msra.mxu0 %v365
        %900 = vmatpush.bf16.msra.mxu0 %v361
        %901 = vmatmul.bf16.gmra.mxu0 %v853
        %v902 = vpop.f32.mrf.mxu0
        %v903 = vadd.f32 0.0, %v902
        %v904 = vpop.f32.mrf.mxu0
        %905 = vdwg.mxu0
        %v910 = vrot.slane %v877, 6
        %v911 = vrot.slane %v890, 4
        %v912 = vrot.slane %v903, 2
        %v913 = vsel %vm481, %v864, %v910
        %v914 = vsel %vm483, %v911, %v912
        %v915 = vsel %vm485, %v913, %v914
        %v917 = vadd.f32 %v852, %v915
        %v918 = vxor.u32 %v917, 2147483648
        %v919 = vmul.f32 %v918, 1.442695
        %v920 = vpow.pop %v919
        %v921 = vadd.f32 %v920, 1.0
        %v922 = vrcp.pop %v921
        %v923 = vmul.f32 %v921, %v922
        %v924 = vsub.f32 1.0, %v923
        %v925 = vmul.f32 %v922, %v924
        %v926 = vadd.f32 %v922, %v925
        %vm927 = vweird.f32 %v921
        %vm928 = vweird.f32 %v922
        %vm929 = vmor %vm927, %vm928
        %v930 = vsel %vm929, %v922, %v926
        %v931 = vand.u32 2147483647, %v921
        %vm932 = vcmp.eq.f32.partialorder %v931, 8.507059e+37
        %v933 = vand.u32 %v921, 2147483648
        %v934 = vor.u32 1.1754944e-38, %v933
        %v935 = vsel %vm932, %v934, %v930
        %v936 = vmul.f32 1.0, %v935
        %v938 = vrot.slane %v917, 2
        %v940 = vxor.u32 %v938, 2147483648
        %v941 = vmul.f32 %v940, 1.442695
        %v942 = vpow.pop %v941
        %v943 = vadd.f32 %v942, 1.0
        %v944 = vrcp.pop %v943
        %v945 = vmul.f32 %v943, %v944
        %v946 = vsub.f32 1.0, %v945
        %v947 = vmul.f32 %v944, %v946
        %v948 = vadd.f32 %v944, %v947
        %vm949 = vweird.f32 %v943
        %vm950 = vweird.f32 %v944
        %vm951 = vmor %vm949, %vm950
        %v952 = vsel %vm951, %v944, %v948
        %v953 = vand.u32 2147483647, %v943
        %vm954 = vcmp.eq.f32.partialorder %v953, 8.507059e+37
        %v955 = vand.u32 %v943, 2147483648
        %v956 = vor.u32 1.1754944e-38, %v955
        %v957 = vsel %vm954, %v956, %v952
        %v958 = vmul.f32 1.0, %v957
        %v959 = vrot.slane %v917, 4
        %v961 = vtanh.pop %v959
        %v962 = vrot.slane %v917, 6
        %v964 = vxor.u32 %v962, 2147483648
        %v965 = vmul.f32 %v964, 1.442695
        %v966 = vpow.pop %v965
        %v967 = vadd.f32 %v966, 1.0
        %v968 = vrcp.pop %v967
        %v969 = vmul.f32 %v967, %v968
        %v970 = vsub.f32 1.0, %v969
        %v971 = vmul.f32 %v968, %v970
        %v972 = vadd.f32 %v968, %v971
        %vm973 = vweird.f32 %v967
        %vm974 = vweird.f32 %v968
        %vm975 = vmor %vm973, %vm974
        %v976 = vsel %vm975, %v968, %v972
        %v977 = vand.u32 2147483647, %v967
        %vm978 = vcmp.eq.f32.partialorder %v977, 8.507059e+37
        %v979 = vand.u32 %v967, 2147483648
        %v980 = vor.u32 1.1754944e-38, %v979
        %v981 = vsel %vm978, %v980, %v976
        %v982 = vmul.f32 1.0, %v981
        %v983 = vmul.f32 %v958, %v842
        %v984 = vmul.f32 %v936, %v961
        %v985 = vadd.f32 %v983, %v984
        %v986 = vtanh.pop %v985
        %v987 = vmul.f32 %v982, %v986
        %s988 = smul.u32 %s848, 2
        %s989 = scalar_lea.vmem %s216, %s988 [#allocation3]
        %990 = vst [vmem:[%s989] sm:$0x3] %v987
        %s991 = scalar_select %p256, 4, 3
        %s992 = smul.u32 %s991, 4
        %s993 = smul.addr %s992, 2
        %s994 = scalar_lea.vmem %s194, %s993 [#allocation2]
        %v995 = vld [vmem:[%s994] sm:$0xff]
        %v996 = vpack.c.bf16 %v987, %v987
        %997 = vmatpush.bf16.msra.mxu0 %v386
        %998 = vmatpush.bf16.msra.mxu0 %v382
        %999 = vmatpush.bf16.msra.mxu0 %v378
        %1000 = vmatpush.bf16.msra.mxu0 %v374
        %1001 = vmatpush.bf16.msra.mxu0 %v370
        %1002 = vmatpush.bf16.msra.mxu0 %v366
        %1003 = vmatpush.bf16.msra.mxu0 %v362
        %1004 = vmatpush.bf16.msra.mxu0 %v358
        %1005 = vmatmul.bf16.gmra.mxu0 %v996
        %v1006 = vpop.f32.mrf.mxu0
        %v1007 = vadd.f32 0.0, %v1006
        %v1008 = vpop.f32.mrf.mxu0
        %1009 = vdwg.mxu0
        %1010 = vmatpush.bf16.msra.mxu0 %v387
        %1011 = vmatpush.bf16.msra.mxu0 %v383
        %1012 = vmatpush.bf16.msra.mxu0 %v379
        %1013 = vmatpush.bf16.msra.mxu0 %v375
        %1014 = vmatpush.bf16.msra.mxu0 %v371
        %1015 = vmatpush.bf16.msra.mxu0 %v367
        %1016 = vmatpush.bf16.msra.mxu0 %v363
        %1017 = vmatpush.bf16.msra.mxu0 %v359
        %1018 = vmatmul.bf16.gmra.mxu0 %v996
        %v1019 = vpop.f32.mrf.mxu0
        %v1020 = vadd.f32 0.0, %v1019
        %v1021 = vpop.f32.mrf.mxu0
        %1022 = vdwg.mxu0
        %1023 = vmatpush.bf16.msra.mxu0 %v388
        %1024 = vmatpush.bf16.msra.mxu0 %v384
        %1025 = vmatpush.bf16.msra.mxu0 %v380
        %1026 = vmatpush.bf16.msra.mxu0 %v376
        %1027 = vmatpush.bf16.msra.mxu0 %v372
        %1028 = vmatpush.bf16.msra.mxu0 %v368
        %1029 = vmatpush.bf16.msra.mxu0 %v364
        %1030 = vmatpush.bf16.msra.mxu0 %v360
        %1031 = vmatmul.bf16.gmra.mxu0 %v996
        %v1032 = vpop.f32.mrf.mxu0
        %v1033 = vadd.f32 0.0, %v1032
        %v1034 = vpop.f32.mrf.mxu0
        %1035 = vdwg.mxu0
        %1036 = vmatpush.bf16.msra.mxu0 %v389
        %1037 = vmatpush.bf16.msra.mxu0 %v385
        %1038 = vmatpush.bf16.msra.mxu0 %v381
        %1039 = vmatpush.bf16.msra.mxu0 %v377
        %1040 = vmatpush.bf16.msra.mxu0 %v373
        %1041 = vmatpush.bf16.msra.mxu0 %v369
        %1042 = vmatpush.bf16.msra.mxu0 %v365
        %1043 = vmatpush.bf16.msra.mxu0 %v361
        %1044 = vmatmul.bf16.gmra.mxu0 %v996
        %v1045 = vpop.f32.mrf.mxu0
        %v1046 = vadd.f32 0.0, %v1045
        %v1047 = vpop.f32.mrf.mxu0
        %1048 = vdwg.mxu0
        %v1053 = vrot.slane %v1020, 6
        %v1054 = vrot.slane %v1033, 4
        %v1055 = vrot.slane %v1046, 2
        %v1056 = vsel %vm481, %v1007, %v1053
        %v1057 = vsel %vm483, %v1054, %v1055
        %v1058 = vsel %vm485, %v1056, %v1057
        %v1060 = vadd.f32 %v995, %v1058
        %v1061 = vxor.u32 %v1060, 2147483648
        %v1062 = vmul.f32 %v1061, 1.442695
        %v1063 = vpow.pop %v1062
        %v1064 = vadd.f32 %v1063, 1.0
        %v1065 = vrcp.pop %v1064
        %v1066 = vmul.f32 %v1064, %v1065
        %v1067 = vsub.f32 1.0, %v1066
        %v1068 = vmul.f32 %v1065, %v1067
        %v1069 = vadd.f32 %v1065, %v1068
        %vm1070 = vweird.f32 %v1064
        %vm1071 = vweird.f32 %v1065
        %vm1072 = vmor %vm1070, %vm1071
        %v1073 = vsel %vm1072, %v1065, %v1069
        %v1074 = vand.u32 2147483647, %v1064
        %vm1075 = vcmp.eq.f32.partialorder %v1074, 8.507059e+37
        %v1076 = vand.u32 %v1064, 2147483648
        %v1077 = vor.u32 1.1754944e-38, %v1076
        %v1078 = vsel %vm1075, %v1077, %v1073
        %v1079 = vmul.f32 1.0, %v1078
        %v1081 = vrot.slane %v1060, 2
        %v1083 = vxor.u32 %v1081, 2147483648
        %v1084 = vmul.f32 %v1083, 1.442695
        %v1085 = vpow.pop %v1084
        %v1086 = vadd.f32 %v1085, 1.0
        %v1087 = vrcp.pop %v1086
        %v1088 = vmul.f32 %v1086, %v1087
        %v1089 = vsub.f32 1.0, %v1088
        %v1090 = vmul.f32 %v1087, %v1089
        %v1091 = vadd.f32 %v1087, %v1090
        %vm1092 = vweird.f32 %v1086
        %vm1093 = vweird.f32 %v1087
        %vm1094 = vmor %vm1092, %vm1093
        %v1095 = vsel %vm1094, %v1087, %v1091
        %v1096 = vand.u32 2147483647, %v1086
        %vm1097 = vcmp.eq.f32.partialorder %v1096, 8.507059e+37
        %v1098 = vand.u32 %v1086, 2147483648
        %v1099 = vor.u32 1.1754944e-38, %v1098
        %v1100 = vsel %vm1097, %v1099, %v1095
        %v1101 = vmul.f32 1.0, %v1100
        %v1102 = vrot.slane %v1060, 4
        %v1104 = vtanh.pop %v1102
        %v1105 = vrot.slane %v1060, 6
        %v1107 = vxor.u32 %v1105, 2147483648
        %v1108 = vmul.f32 %v1107, 1.442695
        %v1109 = vpow.pop %v1108
        %v1110 = vadd.f32 %v1109, 1.0
        %v1111 = vrcp.pop %v1110
        %v1112 = vmul.f32 %v1110, %v1111
        %v1113 = vsub.f32 1.0, %v1112
        %v1114 = vmul.f32 %v1111, %v1113
        %v1115 = vadd.f32 %v1111, %v1114
        %vm1116 = vweird.f32 %v1110
        %vm1117 = vweird.f32 %v1111
        %vm1118 = vmor %vm1116, %vm1117
        %v1119 = vsel %vm1118, %v1111, %v1115
        %v1120 = vand.u32 2147483647, %v1110
        %vm1121 = vcmp.eq.f32.partialorder %v1120, 8.507059e+37
        %v1122 = vand.u32 %v1110, 2147483648
        %v1123 = vor.u32 1.1754944e-38, %v1122
        %v1124 = vsel %vm1121, %v1123, %v1119
        %v1125 = vmul.f32 1.0, %v1124
        %v1126 = vmul.f32 %v1101, %v985
        %v1127 = vmul.f32 %v1079, %v1104
        %v1128 = vadd.f32 %v1126, %v1127
        %v1129 = vtanh.pop %v1128
        %v1130 = vmul.f32 %v1125, %v1129
        %s1131 = smul.u32 %s991, 2
        %s1132 = scalar_lea.vmem %s216, %s1131 [#allocation3]
        %1133 = vst [vmem:[%s1132] sm:$0x3] %v1130
        %s1134 = scalar_select %p256, 5, 2
        %s1135 = smul.u32 %s1134, 4
        %s1136 = smul.addr %s1135, 2
        %s1137 = scalar_lea.vmem %s194, %s1136 [#allocation2]
        %v1138 = vld [vmem:[%s1137] sm:$0xff]
        %v1139 = vpack.c.bf16 %v1130, %v1130
        %1140 = vmatpush.bf16.msra.mxu0 %v386
        %1141 = vmatpush.bf16.msra.mxu0 %v382
        %1142 = vmatpush.bf16.msra.mxu0 %v378
        %1143 = vmatpush.bf16.msra.mxu0 %v374
        %1144 = vmatpush.bf16.msra.mxu0 %v370
        %1145 = vmatpush.bf16.msra.mxu0 %v366
        %1146 = vmatpush.bf16.msra.mxu0 %v362
        %1147 = vmatpush.bf16.msra.mxu0 %v358
        %1148 = vmatmul.bf16.gmra.mxu0 %v1139
        %v1149 = vpop.f32.mrf.mxu0
        %v1150 = vadd.f32 0.0, %v1149
        %v1151 = vpop.f32.mrf.mxu0
        %1152 = vdwg.mxu0
        %1153 = vmatpush.bf16.msra.mxu0 %v387
        %1154 = vmatpush.bf16.msra.mxu0 %v383
        %1155 = vmatpush.bf16.msra.mxu0 %v379
        %1156 = vmatpush.bf16.msra.mxu0 %v375
        %1157 = vmatpush.bf16.msra.mxu0 %v371
        %1158 = vmatpush.bf16.msra.mxu0 %v367
        %1159 = vmatpush.bf16.msra.mxu0 %v363
        %1160 = vmatpush.bf16.msra.mxu0 %v359
        %1161 = vmatmul.bf16.gmra.mxu0 %v1139
        %v1162 = vpop.f32.mrf.mxu0
        %v1163 = vadd.f32 0.0, %v1162
        %v1164 = vpop.f32.mrf.mxu0
        %1165 = vdwg.mxu0
        %1166 = vmatpush.bf16.msra.mxu0 %v388
        %1167 = vmatpush.bf16.msra.mxu0 %v384
        %1168 = vmatpush.bf16.msra.mxu0 %v380
        %1169 = vmatpush.bf16.msra.mxu0 %v376
        %1170 = vmatpush.bf16.msra.mxu0 %v372
        %1171 = vmatpush.bf16.msra.mxu0 %v368
        %1172 = vmatpush.bf16.msra.mxu0 %v364
        %1173 = vmatpush.bf16.msra.mxu0 %v360
        %1174 = vmatmul.bf16.gmra.mxu0 %v1139
        %v1175 = vpop.f32.mrf.mxu0
        %v1176 = vadd.f32 0.0, %v1175
        %v1177 = vpop.f32.mrf.mxu0
        %1178 = vdwg.mxu0
        %1179 = vmatpush.bf16.msra.mxu0 %v389
        %1180 = vmatpush.bf16.msra.mxu0 %v385
        %1181 = vmatpush.bf16.msra.mxu0 %v381
        %1182 = vmatpush.bf16.msra.mxu0 %v377
        %1183 = vmatpush.bf16.msra.mxu0 %v373
        %1184 = vmatpush.bf16.msra.mxu0 %v369
        %1185 = vmatpush.bf16.msra.mxu0 %v365
        %1186 = vmatpush.bf16.msra.mxu0 %v361
        %1187 = vmatmul.bf16.gmra.mxu0 %v1139
        %v1188 = vpop.f32.mrf.mxu0
        %v1189 = vadd.f32 0.0, %v1188
        %v1190 = vpop.f32.mrf.mxu0
        %1191 = vdwg.mxu0
        %v1196 = vrot.slane %v1163, 6
        %v1197 = vrot.slane %v1176, 4
        %v1198 = vrot.slane %v1189, 2
        %v1199 = vsel %vm481, %v1150, %v1196
        %v1200 = vsel %vm483, %v1197, %v1198
        %v1201 = vsel %vm485, %v1199, %v1200
        %v1203 = vadd.f32 %v1138, %v1201
        %v1204 = vxor.u32 %v1203, 2147483648
        %v1205 = vmul.f32 %v1204, 1.442695
        %v1206 = vpow.pop %v1205
        %v1207 = vadd.f32 %v1206, 1.0
        %v1208 = vrcp.pop %v1207
        %v1209 = vmul.f32 %v1207, %v1208
        %v1210 = vsub.f32 1.0, %v1209
        %v1211 = vmul.f32 %v1208, %v1210
        %v1212 = vadd.f32 %v1208, %v1211
        %vm1213 = vweird.f32 %v1207
        %vm1214 = vweird.f32 %v1208
        %vm1215 = vmor %vm1213, %vm1214
        %v1216 = vsel %vm1215, %v1208, %v1212
        %v1217 = vand.u32 2147483647, %v1207
        %vm1218 = vcmp.eq.f32.partialorder %v1217, 8.507059e+37
        %v1219 = vand.u32 %v1207, 2147483648
        %v1220 = vor.u32 1.1754944e-38, %v1219
        %v1221 = vsel %vm1218, %v1220, %v1216
        %v1222 = vmul.f32 1.0, %v1221
        %v1224 = vrot.slane %v1203, 2
        %v1226 = vxor.u32 %v1224, 2147483648
        %v1227 = vmul.f32 %v1226, 1.442695
        %v1228 = vpow.pop %v1227
        %v1229 = vadd.f32 %v1228, 1.0
        %v1230 = vrcp.pop %v1229
        %v1231 = vmul.f32 %v1229, %v1230
        %v1232 = vsub.f32 1.0, %v1231
        %v1233 = vmul.f32 %v1230, %v1232
        %v1234 = vadd.f32 %v1230, %v1233
        %vm1235 = vweird.f32 %v1229
        %vm1236 = vweird.f32 %v1230
        %vm1237 = vmor %vm1235, %vm1236
        %v1238 = vsel %vm1237, %v1230, %v1234
        %v1239 = vand.u32 2147483647, %v1229
        %vm1240 = vcmp.eq.f32.partialorder %v1239, 8.507059e+37
        %v1241 = vand.u32 %v1229, 2147483648
        %v1242 = vor.u32 1.1754944e-38, %v1241
        %v1243 = vsel %vm1240, %v1242, %v1238
        %v1244 = vmul.f32 1.0, %v1243
        %v1245 = vrot.slane %v1203, 4
        %v1247 = vtanh.pop %v1245
        %v1248 = vrot.slane %v1203, 6
        %v1250 = vxor.u32 %v1248, 2147483648
        %v1251 = vmul.f32 %v1250, 1.442695
        %v1252 = vpow.pop %v1251
        %v1253 = vadd.f32 %v1252, 1.0
        %v1254 = vrcp.pop %v1253
        %v1255 = vmul.f32 %v1253, %v1254
        %v1256 = vsub.f32 1.0, %v1255
        %v1257 = vmul.f32 %v1254, %v1256
        %v1258 = vadd.f32 %v1254, %v1257
        %vm1259 = vweird.f32 %v1253
        %vm1260 = vweird.f32 %v1254
        %vm1261 = vmor %vm1259, %vm1260
        %v1262 = vsel %vm1261, %v1254, %v1258
        %v1263 = vand.u32 2147483647, %v1253
        %vm1264 = vcmp.eq.f32.partialorder %v1263, 8.507059e+37
        %v1265 = vand.u32 %v1253, 2147483648
        %v1266 = vor.u32 1.1754944e-38, %v1265
        %v1267 = vsel %vm1264, %v1266, %v1262
        %v1268 = vmul.f32 1.0, %v1267
        %v1269 = vmul.f32 %v1244, %v1128
        %v1270 = vmul.f32 %v1222, %v1247
        %v1271 = vadd.f32 %v1269, %v1270
        %v1272 = vtanh.pop %v1271
        %v1273 = vmul.f32 %v1268, %v1272
        %s1274 = smul.u32 %s1134, 2
        %s1275 = scalar_lea.vmem %s216, %s1274 [#allocation3]
        %1276 = vst [vmem:[%s1275] sm:$0x3] %v1273
        %s1277 = scalar_select %p256, 6, 1
        %s1278 = smul.u32 %s1277, 4
        %s1279 = smul.addr %s1278, 2
        %s1280 = scalar_lea.vmem %s194, %s1279 [#allocation2]
        %v1281 = vld [vmem:[%s1280] sm:$0xff]
        %v1282 = vpack.c.bf16 %v1273, %v1273
        %1283 = vmatpush.bf16.msra.mxu0 %v386
        %1284 = vmatpush.bf16.msra.mxu0 %v382
        %1285 = vmatpush.bf16.msra.mxu0 %v378
        %1286 = vmatpush.bf16.msra.mxu0 %v374
        %1287 = vmatpush.bf16.msra.mxu0 %v370
        %1288 = vmatpush.bf16.msra.mxu0 %v366
        %1289 = vmatpush.bf16.msra.mxu0 %v362
        %1290 = vmatpush.bf16.msra.mxu0 %v358
        %1291 = vmatmul.bf16.gmra.mxu0 %v1282
        %v1292 = vpop.f32.mrf.mxu0
        %v1293 = vadd.f32 0.0, %v1292
        %v1294 = vpop.f32.mrf.mxu0
        %1295 = vdwg.mxu0
        %1296 = vmatpush.bf16.msra.mxu0 %v387
        %1297 = vmatpush.bf16.msra.mxu0 %v383
        %1298 = vmatpush.bf16.msra.mxu0 %v379
        %1299 = vmatpush.bf16.msra.mxu0 %v375
        %1300 = vmatpush.bf16.msra.mxu0 %v371
        %1301 = vmatpush.bf16.msra.mxu0 %v367
        %1302 = vmatpush.bf16.msra.mxu0 %v363
        %1303 = vmatpush.bf16.msra.mxu0 %v359
        %1304 = vmatmul.bf16.gmra.mxu0 %v1282
        %v1305 = vpop.f32.mrf.mxu0
        %v1306 = vadd.f32 0.0, %v1305
        %v1307 = vpop.f32.mrf.mxu0
        %1308 = vdwg.mxu0
        %1309 = vmatpush.bf16.msra.mxu0 %v388
        %1310 = vmatpush.bf16.msra.mxu0 %v384
        %1311 = vmatpush.bf16.msra.mxu0 %v380
        %1312 = vmatpush.bf16.msra.mxu0 %v376
        %1313 = vmatpush.bf16.msra.mxu0 %v372
        %1314 = vmatpush.bf16.msra.mxu0 %v368
        %1315 = vmatpush.bf16.msra.mxu0 %v364
        %1316 = vmatpush.bf16.msra.mxu0 %v360
        %1317 = vmatmul.bf16.gmra.mxu0 %v1282
        %v1318 = vpop.f32.mrf.mxu0
        %v1319 = vadd.f32 0.0, %v1318
        %v1320 = vpop.f32.mrf.mxu0
        %1321 = vdwg.mxu0
        %1322 = vmatpush.bf16.msra.mxu0 %v389
        %1323 = vmatpush.bf16.msra.mxu0 %v385
        %1324 = vmatpush.bf16.msra.mxu0 %v381
        %1325 = vmatpush.bf16.msra.mxu0 %v377
        %1326 = vmatpush.bf16.msra.mxu0 %v373
        %1327 = vmatpush.bf16.msra.mxu0 %v369
        %1328 = vmatpush.bf16.msra.mxu0 %v365
        %1329 = vmatpush.bf16.msra.mxu0 %v361
        %1330 = vmatmul.bf16.gmra.mxu0 %v1282
        %v1331 = vpop.f32.mrf.mxu0
        %v1332 = vadd.f32 0.0, %v1331
        %v1333 = vpop.f32.mrf.mxu0
        %1334 = vdwg.mxu0
        %v1339 = vrot.slane %v1306, 6
        %v1340 = vrot.slane %v1319, 4
        %v1341 = vrot.slane %v1332, 2
        %v1342 = vsel %vm481, %v1293, %v1339
        %v1343 = vsel %vm483, %v1340, %v1341
        %v1344 = vsel %vm485, %v1342, %v1343
        %v1346 = vadd.f32 %v1281, %v1344
        %v1347 = vxor.u32 %v1346, 2147483648
        %v1348 = vmul.f32 %v1347, 1.442695
        %v1349 = vpow.pop %v1348
        %v1350 = vadd.f32 %v1349, 1.0
        %v1351 = vrcp.pop %v1350
        %v1352 = vmul.f32 %v1350, %v1351
        %v1353 = vsub.f32 1.0, %v1352
        %v1354 = vmul.f32 %v1351, %v1353
        %v1355 = vadd.f32 %v1351, %v1354
        %vm1356 = vweird.f32 %v1350
        %vm1357 = vweird.f32 %v1351
        %vm1358 = vmor %vm1356, %vm1357
        %v1359 = vsel %vm1358, %v1351, %v1355
        %v1360 = vand.u32 2147483647, %v1350
        %vm1361 = vcmp.eq.f32.partialorder %v1360, 8.507059e+37
        %v1362 = vand.u32 %v1350, 2147483648
        %v1363 = vor.u32 1.1754944e-38, %v1362
        %v1364 = vsel %vm1361, %v1363, %v1359
        %v1365 = vmul.f32 1.0, %v1364
        %v1367 = vrot.slane %v1346, 2
        %v1369 = vxor.u32 %v1367, 2147483648
        %v1370 = vmul.f32 %v1369, 1.442695
        %v1371 = vpow.pop %v1370
        %v1372 = vadd.f32 %v1371, 1.0
        %v1373 = vrcp.pop %v1372
        %v1374 = vmul.f32 %v1372, %v1373
        %v1375 = vsub.f32 1.0, %v1374
        %v1376 = vmul.f32 %v1373, %v1375
        %v1377 = vadd.f32 %v1373, %v1376
        %vm1378 = vweird.f32 %v1372
        %vm1379 = vweird.f32 %v1373
        %vm1380 = vmor %vm1378, %vm1379
        %v1381 = vsel %vm1380, %v1373, %v1377
        %v1382 = vand.u32 2147483647, %v1372
        %vm1383 = vcmp.eq.f32.partialorder %v1382, 8.507059e+37
        %v1384 = vand.u32 %v1372, 2147483648
        %v1385 = vor.u32 1.1754944e-38, %v1384
        %v1386 = vsel %vm1383, %v1385, %v1381
        %v1387 = vmul.f32 1.0, %v1386
        %v1388 = vrot.slane %v1346, 4
        %v1390 = vtanh.pop %v1388
        %v1391 = vrot.slane %v1346, 6
        %v1393 = vxor.u32 %v1391, 2147483648
        %v1394 = vmul.f32 %v1393, 1.442695
        %v1395 = vpow.pop %v1394
        %v1396 = vadd.f32 %v1395, 1.0
        %v1397 = vrcp.pop %v1396
        %v1398 = vmul.f32 %v1396, %v1397
        %v1399 = vsub.f32 1.0, %v1398
        %v1400 = vmul.f32 %v1397, %v1399
        %v1401 = vadd.f32 %v1397, %v1400
        %vm1402 = vweird.f32 %v1396
        %vm1403 = vweird.f32 %v1397
        %vm1404 = vmor %vm1402, %vm1403
        %v1405 = vsel %vm1404, %v1397, %v1401
        %v1406 = vand.u32 2147483647, %v1396
        %vm1407 = vcmp.eq.f32.partialorder %v1406, 8.507059e+37
        %v1408 = vand.u32 %v1396, 2147483648
        %v1409 = vor.u32 1.1754944e-38, %v1408
        %v1410 = vsel %vm1407, %v1409, %v1405
        %v1411 = vmul.f32 1.0, %v1410
        %v1412 = vmul.f32 %v1387, %v1271
        %v1413 = vmul.f32 %v1365, %v1390
        %v1414 = vadd.f32 %v1412, %v1413
        %v1415 = vtanh.pop %v1414
        %v1416 = vmul.f32 %v1411, %v1415
        %s1417 = smul.u32 %s1277, 2
        %s1418 = scalar_lea.vmem %s216, %s1417 [#allocation3]
        %1419 = vst [vmem:[%s1418] sm:$0x3] %v1416
        %s1420 = scalar_select %p256, 7, 0
        %s1421 = smul.u32 %s1420, 4
        %s1422 = smul.addr %s1421, 2
        %s1423 = scalar_lea.vmem %s194, %s1422 [#allocation2]
        %v1424 = vld [vmem:[%s1423] sm:$0xff]
        %v1425 = vpack.c.bf16 %v1416, %v1416
        %1426 = vmatpush.bf16.msra.mxu0 %v386
        %1427 = vmatpush.bf16.msra.mxu0 %v382
        %1428 = vmatpush.bf16.msra.mxu0 %v378
        %1429 = vmatpush.bf16.msra.mxu0 %v374
        %1430 = vmatpush.bf16.msra.mxu0 %v370
        %1431 = vmatpush.bf16.msra.mxu0 %v366
        %1432 = vmatpush.bf16.msra.mxu0 %v362
        %1433 = vmatpush.bf16.msra.mxu0 %v358
        %1434 = vmatmul.bf16.gmra.mxu0 %v1425
        %v1435 = vpop.f32.mrf.mxu0
        %v1436 = vadd.f32 0.0, %v1435
        %v1437 = vpop.f32.mrf.mxu0
        %1438 = vdwg.mxu0
        %1439 = vmatpush.bf16.msra.mxu0 %v387
        %1440 = vmatpush.bf16.msra.mxu0 %v383
        %1441 = vmatpush.bf16.msra.mxu0 %v379
        %1442 = vmatpush.bf16.msra.mxu0 %v375
        %1443 = vmatpush.bf16.msra.mxu0 %v371
        %1444 = vmatpush.bf16.msra.mxu0 %v367
        %1445 = vmatpush.bf16.msra.mxu0 %v363
        %1446 = vmatpush.bf16.msra.mxu0 %v359
        %1447 = vmatmul.bf16.gmra.mxu0 %v1425
        %v1448 = vpop.f32.mrf.mxu0
        %v1449 = vadd.f32 0.0, %v1448
        %v1450 = vpop.f32.mrf.mxu0
        %1451 = vdwg.mxu0
        %1452 = vmatpush.bf16.msra.mxu0 %v388
        %1453 = vmatpush.bf16.msra.mxu0 %v384
        %1454 = vmatpush.bf16.msra.mxu0 %v380
        %1455 = vmatpush.bf16.msra.mxu0 %v376
        %1456 = vmatpush.bf16.msra.mxu0 %v372
        %1457 = vmatpush.bf16.msra.mxu0 %v368
        %1458 = vmatpush.bf16.msra.mxu0 %v364
        %1459 = vmatpush.bf16.msra.mxu0 %v360
        %1460 = vmatmul.bf16.gmra.mxu0 %v1425
        %v1461 = vpop.f32.mrf.mxu0
        %v1462 = vadd.f32 0.0, %v1461
        %v1463 = vpop.f32.mrf.mxu0
        %1464 = vdwg.mxu0
        %1465 = vmatpush.bf16.msra.mxu0 %v389
        %1466 = vmatpush.bf16.msra.mxu0 %v385
        %1467 = vmatpush.bf16.msra.mxu0 %v381
        %1468 = vmatpush.bf16.msra.mxu0 %v377
        %1469 = vmatpush.bf16.msra.mxu0 %v373
        %1470 = vmatpush.bf16.msra.mxu0 %v369
        %1471 = vmatpush.bf16.msra.mxu0 %v365
        %1472 = vmatpush.bf16.msra.mxu0 %v361
        %1473 = vmatmul.bf16.gmra.mxu0 %v1425
        %v1474 = vpop.f32.mrf.mxu0
        %v1475 = vadd.f32 0.0, %v1474
        %v1476 = vpop.f32.mrf.mxu0
        %1477 = vdwg.mxu0
        %v1482 = vrot.slane %v1449, 6
        %v1483 = vrot.slane %v1462, 4
        %v1484 = vrot.slane %v1475, 2
        %v1485 = vsel %vm481, %v1436, %v1482
        %v1486 = vsel %vm483, %v1483, %v1484
        %v1487 = vsel %vm485, %v1485, %v1486
        %v1489 = vadd.f32 %v1424, %v1487
        %v1490 = vxor.u32 %v1489, 2147483648
        %v1491 = vmul.f32 %v1490, 1.442695
        %v1492 = vpow.pop %v1491
        %v1493 = vadd.f32 %v1492, 1.0
        %v1494 = vrcp.pop %v1493
        %v1495 = vmul.f32 %v1493, %v1494
        %v1496 = vsub.f32 1.0, %v1495
        %v1497 = vmul.f32 %v1494, %v1496
        %v1498 = vadd.f32 %v1494, %v1497
        %vm1499 = vweird.f32 %v1493
        %vm1500 = vweird.f32 %v1494
        %vm1501 = vmor %vm1499, %vm1500
        %v1502 = vsel %vm1501, %v1494, %v1498
        %v1503 = vand.u32 2147483647, %v1493
        %vm1504 = vcmp.eq.f32.partialorder %v1503, 8.507059e+37
        %v1505 = vand.u32 %v1493, 2147483648
        %v1506 = vor.u32 1.1754944e-38, %v1505
        %v1507 = vsel %vm1504, %v1506, %v1502
        %v1508 = vmul.f32 1.0, %v1507
        %v1510 = vrot.slane %v1489, 2
        %v1512 = vxor.u32 %v1510, 2147483648
        %v1513 = vmul.f32 %v1512, 1.442695
        %v1514 = vpow.pop %v1513
        %v1515 = vadd.f32 %v1514, 1.0
        %v1516 = vrcp.pop %v1515
        %v1517 = vmul.f32 %v1515, %v1516
        %v1518 = vsub.f32 1.0, %v1517
        %v1519 = vmul.f32 %v1516, %v1518
        %v1520 = vadd.f32 %v1516, %v1519
        %vm1521 = vweird.f32 %v1515
        %vm1522 = vweird.f32 %v1516
        %vm1523 = vmor %vm1521, %vm1522
        %v1524 = vsel %vm1523, %v1516, %v1520
        %v1525 = vand.u32 2147483647, %v1515
        %vm1526 = vcmp.eq.f32.partialorder %v1525, 8.507059e+37
        %v1527 = vand.u32 %v1515, 2147483648
        %v1528 = vor.u32 1.1754944e-38, %v1527
        %v1529 = vsel %vm1526, %v1528, %v1524
        %v1530 = vmul.f32 1.0, %v1529
        %v1531 = vrot.slane %v1489, 4
        %v1533 = vtanh.pop %v1531
        %v1534 = vrot.slane %v1489, 6
        %v1536 = vxor.u32 %v1534, 2147483648
        %v1537 = vmul.f32 %v1536, 1.442695
        %v1538 = vpow.pop %v1537
        %v1539 = vadd.f32 %v1538, 1.0
        %v1540 = vrcp.pop %v1539
        %v1541 = vmul.f32 %v1539, %v1540
        %v1542 = vsub.f32 1.0, %v1541
        %v1543 = vmul.f32 %v1540, %v1542
        %v1544 = vadd.f32 %v1540, %v1543
        %vm1545 = vweird.f32 %v1539
        %vm1546 = vweird.f32 %v1540
        %vm1547 = vmor %vm1545, %vm1546
        %v1548 = vsel %vm1547, %v1540, %v1544
        %v1549 = vand.u32 2147483647, %v1539
        %vm1550 = vcmp.eq.f32.partialorder %v1549, 8.507059e+37
        %v1551 = vand.u32 %v1539, 2147483648
        %v1552 = vor.u32 1.1754944e-38, %v1551
        %v1553 = vsel %vm1550, %v1552, %v1548
        %v1554 = vmul.f32 1.0, %v1553
        %v1555 = vmul.f32 %v1530, %v1414
        %v1556 = vmul.f32 %v1508, %v1533
        %v1557 = vadd.f32 %v1555, %v1556
        %v1558 = vtanh.pop %v1557
        %v1559 = vmul.f32 %v1554, %v1558
        %s1560 = smul.u32 %s1420, 2
        %s1561 = scalar_lea.vmem %s216, %s1560 [#allocation3]
        %1562 = vst [vmem:[%s1561] sm:$0x3] %v1559
        %s1563 = sand.u32 %s73, 1
        %s1564 = sand.u32 %s73, 1
        %s1565 = smul.addr %s1564, 16
        %s1566 = scalar_lea.vmem [#allocation3], %s1565
        // Predicated region
        $region67: #{_lambda_.8} parent=61 // pred_check
          %p1567 = pneg %p83
        $region68: #{_lambda_.8} parent=61 // pred_check_branch
          %1569 = sbr.rel (%p1567) target = $region70
        $region69: #{_lambda_.8} parent=61 // pred_region
          %s1570 = smul.addr %s13, 2
          %s1571 = scalar_lea.vmem %s2, %s1570
          // Predicated region
          $region71: #{_lambda_.8} parent=69 // pred_check
            _
          $region72: #{_lambda_.8} parent=69 // pred_check_branch
            %1573 = sbr.rel (0) target = $region74
          $region73: #{_lambda_.8} parent=69 // pred_region
            // Predicated region
            $region75: #{_lambda_.8} parent=73 // pred_check
              _
            $region76: #{_lambda_.8} parent=73 // pred_check_branch
              %1575 = sbr.rel target = $region78
            $region77: #{_lambda_.8} parent=73 // pred_region
              // Predicated region
              $region90: #{_lambda_.8} parent=77 // pred_check
                _
              $region91: #{_lambda_.8} parent=77 // pred_check_branch
                %1605 = sbr.rel (0) target = $region93
              $region92: #{_lambda_.8} parent=77 // pred_region
                loop: start=0, step=1, limit=1
                $region94: #{_lambda_.8} parent=92 // loop_pre_header
                  _
                $region95: #{_lambda_.8} parent=92 // loop_header
                  %s1607 = sphi 0, %s1611
                  %p1608 = scmp.ge.s32.totalorder %s1607, 1
                  %s1612 = sphi %s1566, %s1566
                  %s1613 = sphi %s1571, %s1571
                $region96: #{_lambda_.8} parent=92 // loop_header_branch
                  %1610 = sbr.rel (%p1608) target = $region100
                $region97: #{_lambda_.8} parent=92 // loop_body
                  _
                $region98: #{_lambda_.8} parent=92 // loop_footer
                  %s1611 = sadd.s32 1, %s1607
                $region99: #{_lambda_.8} parent=92 // loop_footer_branch
                  %1606 = sbr.rel target = $region95
                $region100: #{_lambda_.8} parent=92 // loop_exit
                  _
                %s1615 = ssub.s32 4, 1
                loop: start=0, step=1, limit=1
                $region101: #{_lambda_.8} parent=92 // loop_pre_header
                  _
                $region102: #{_lambda_.8} parent=92 // loop_header
                  %s1617 = sphi 0, %s1621
                  %p1618 = scmp.ge.s32.totalorder %s1617, 1
                  %s1622 = sphi %s1566, %s1566
                  %s1623 = sphi %s1571, %s1571
                $region103: #{_lambda_.8} parent=92 // loop_header_branch
                  %1620 = sbr.rel (%p1618) target = $region107
                $region104: #{_lambda_.8} parent=92 // loop_body
                  %v1624 = vld [vmem:[%s1622] sm:%s1615]
                  %1625 = vst [vmem:[%s1623] sm:%s1615] %v1624
                  %v1626 = vld [vmem:[%s1622 + $0x2] sm:%s1615]
                  %1627 = vst [vmem:[%s1623 + $0x4] sm:%s1615] %v1626
                  %v1628 = vld [vmem:[%s1622 + $0x4] sm:%s1615]
                  %1629 = vst [vmem:[%s1623 + $0x8] sm:%s1615] %v1628
                  %v1630 = vld [vmem:[%s1622 + $0x6] sm:%s1615]
                  %1631 = vst [vmem:[%s1623 + $0xc] sm:%s1615] %v1630
                  %v1632 = vld [vmem:[%s1622 + $0x8] sm:%s1615]
                  %1633 = vst [vmem:[%s1623 + $0x10] sm:%s1615] %v1632
                  %v1634 = vld [vmem:[%s1622 + $0xa] sm:%s1615]
                  %1635 = vst [vmem:[%s1623 + $0x14] sm:%s1615] %v1634
                  %v1636 = vld [vmem:[%s1622 + $0xc] sm:%s1615]
                  %1637 = vst [vmem:[%s1623 + $0x18] sm:%s1615] %v1636
                  %v1638 = vld [vmem:[%s1622 + $0xe] sm:%s1615]
                  %1639 = vst [vmem:[%s1623 + $0x1c] sm:%s1615] %v1638
                $region105: #{_lambda_.8} parent=92 // loop_footer
                  %s1621 = sadd.s32 1, %s1617
                $region106: #{_lambda_.8} parent=92 // loop_footer_branch
                  %1616 = sbr.rel target = $region102
                $region107: #{_lambda_.8} parent=92 // loop_exit
                  _
              $region93: #{_lambda_.8} parent=77 // pred_fallthru
                _
            $region78: #{_lambda_.8} parent=73 // pred_fallthru
              _
            // Predicated region
            $region79: #{_lambda_.8} parent=73 // pred_check
              _
            $region80: #{_lambda_.8} parent=73 // pred_check_branch
              %1577 = sbr.rel (0) target = $region82
            $region81: #{_lambda_.8} parent=73 // pred_region
              %s1579 = ssub.s32 4, 1
              loop: start=0, step=1, limit=1
              $region83: #{_lambda_.8} parent=81 // loop_pre_header
                _
              $region84: #{_lambda_.8} parent=81 // loop_header
                %s1581 = sphi 0, %s1585
                %p1582 = scmp.ge.s32.totalorder %s1581, 1
                %s1586 = sphi %s1566, %s1566
                %s1587 = sphi %s1571, %s1571
              $region85: #{_lambda_.8} parent=81 // loop_header_branch
                %1584 = sbr.rel (%p1582) target = $region89
              $region86: #{_lambda_.8} parent=81 // loop_body
                %v1588 = vld [vmem:[%s1586] sm:%s1579]
                %1589 = vst [vmem:[%s1587] sm:%s1579] %v1588
                %v1590 = vld [vmem:[%s1586 + $0x2] sm:%s1579]
                %1591 = vst [vmem:[%s1587 + $0x4] sm:%s1579] %v1590
                %v1592 = vld [vmem:[%s1586 + $0x4] sm:%s1579]
                %1593 = vst [vmem:[%s1587 + $0x8] sm:%s1579] %v1592
                %v1594 = vld [vmem:[%s1586 + $0x6] sm:%s1579]
                %1595 = vst [vmem:[%s1587 + $0xc] sm:%s1579] %v1594
                %v1596 = vld [vmem:[%s1586 + $0x8] sm:%s1579]
                %1597 = vst [vmem:[%s1587 + $0x10] sm:%s1579] %v1596
                %v1598 = vld [vmem:[%s1586 + $0xa] sm:%s1579]
                %1599 = vst [vmem:[%s1587 + $0x14] sm:%s1579] %v1598
                %v1600 = vld [vmem:[%s1586 + $0xc] sm:%s1579]
                %1601 = vst [vmem:[%s1587 + $0x18] sm:%s1579] %v1600
                %v1602 = vld [vmem:[%s1586 + $0xe] sm:%s1579]
                %1603 = vst [vmem:[%s1587 + $0x1c] sm:%s1579] %v1602
              $region87: #{_lambda_.8} parent=81 // loop_footer
                %s1585 = sadd.s32 1, %s1581
              $region88: #{_lambda_.8} parent=81 // loop_footer_branch
                %1580 = sbr.rel target = $region84
              $region89: #{_lambda_.8} parent=81 // loop_exit
                _
            $region82: #{_lambda_.8} parent=73 // pred_fallthru
              _
          $region74: #{_lambda_.8} parent=69 // pred_fallthru
            _
          %1640 = vnop
        $region70: #{_lambda_.8} parent=61 // pred_fallthru
          _
      $region62: #{_lambda_.8} parent=5 // pred_fallthru
        _
      %p1641 = scmp.le.s32.totalorder 2, %s8
      // Predicated region
      $region108: #{_lambda_.8} parent=5 // pred_check
        %p1642 = pneg %p1641
      $region109: #{_lambda_.8} parent=5 // pred_check_branch
        %1644 = sbr.rel (%p1642) target = $region111
      $region110: #{_lambda_.8} parent=5 // pred_region
        %s1645 = ssub.s32 %s8, 2
        // Predicated region
        $region112: #{_lambda_.8} parent=110 // pred_check
          %p1646 = pneg %p89
        $region113: #{_lambda_.8} parent=110 // pred_check_branch
          %1648 = sbr.rel (%p1646) target = $region115
        $region114: #{_lambda_.8} parent=110 // pred_region
          %s1649 = sand.u32 %s74, 1
          %s1650 = sand.u32 %s74, 1
          %s1651 = smul.addr %s1650, 16
          %s1652 = scalar_lea.vmem [#allocation3], %s1651
        $region115: #{_lambda_.8} parent=110 // pred_fallthru
          _
      $region111: #{_lambda_.8} parent=5 // pred_fallthru
        _
    $region6: #{_lambda_.8} parent=1 // loop_footer
      %s12 = sadd.s32 1, %s8
    $region7: #{_lambda_.8} parent=1 // loop_footer_branch
      %7 = sbr.rel target = $region3
    $region8: #{_lambda_.8} parent=1 // loop_exit
      _

</llo_original>
